<compile_context>
chip_gen: v5e
topology: v5e:2x2
jax: 0.10.0
libtpu: 0.0.40
codegen_flags: <defaults>
</compile_context>

<pallas_src>
import math

import jax
import jax.numpy as jnp
from jax.experimental import pallas as pl
from jax.experimental.pallas import tpu as pltpu

# ----------------------------- config (small) -------------------------------
BATCH = 2
IN_CH = 3
IMG = 16
PATCH = 4
WIDTH = 32          # transformer width D
HEADS = 4
HEAD_DIM = WIDTH // HEADS
LAYERS = 2
OUT_DIM = 16        # CLIP embed dim
NUM_PATCHES = (IMG // PATCH) ** 2
TOKENS = NUM_PATCHES + 1
ROWS = BATCH * TOKENS          # batch folded into the row (sublane) axis
DTYPE = jnp.float32

_VMEM = pl.BlockSpec(memory_space=pltpu.MemorySpace.VMEM)


# ------------------------------ fused kernel --------------------------------
def _ln_f32(x, g, b, eps=1e-5):
    # LayerNorm over the last axis, f32 statistics (matches torch.nn.LayerNorm).
    mu = jnp.mean(x, axis=-1, keepdims=True)
    var = jnp.mean(jnp.square(x - mu), axis=-1, keepdims=True)
    return (x - mu) * jax.lax.rsqrt(var + eps) * g + b


def _clip_encoder_kernel(
    # inputs (all resident in VMEM, whole arrays)
    patches_ref, conv_w_ref, tok_bias_ref, attn_bias_ref,
    ln_pre_g_ref, ln_pre_b_ref,
    ln1_g_ref, ln1_b_ref, w_qkv_ref, b_qkv_ref, w_out_ref, b_out_ref,
    ln2_g_ref, ln2_b_ref, w_fc_ref, b_fc_ref, w_pr_ref, b_pr_ref,
    ln_post_g_ref, ln_post_b_ref, proj_ref,
    # output
    out_ref,
):
    scale = 1.0 / math.sqrt(HEAD_DIM)
    attn_bias = attn_bias_ref[...]           # (ROWS, ROWS) block-diagonal 0/-1e9

    # Patch embed for ALL images in one matmul (+ fused cls/pos bias) + ln_pre.
    # Activations stay a single (ROWS, WIDTH) VMEM-resident value throughout.
    emb = jnp.dot(patches_ref[...], conv_w_ref[...],
                  preferred_element_type=jnp.float32)          # (ROWS, W)
    x = _ln_f32(emb + tok_bias_ref[...], ln_pre_g_ref[...], ln_pre_b_ref[...])

    for l in range(LAYERS):                  # static unroll; weights indexed by l
        ln1_g, ln1_b = ln1_g_ref[l], ln1_b_ref[l]
        w_qkv, b_qkv = w_qkv_ref[l], b_qkv_ref[l]
        w_out, b_out = w_out_ref[l], b_out_ref[l]
        ln2_g, ln2_b = ln2_g_ref[l], ln2_b_ref[l]
        w_fc, b_fc = w_fc_ref[l], b_fc_ref[l]
        w_pr, b_pr = w_pr_ref[l], b_pr_ref[l]

        # ---- MHSA block: x = x + out_proj(attention(ln_1(x))) ----
        h = _ln_f32(x, ln1_g, ln1_b)
        qkv = jnp.dot(h, w_qkv, preferred_element_type=jnp.float32) + b_qkv

        # out-projection folded per head:
        #   concat_h(o_h) @ W_out == sum_h o_h @ W_out[h*Dh:(h+1)*Dh, :]
        attn = b_out                                           # (1, W) broadcast
        for hd in range(HEADS):
            c0 = hd * HEAD_DIM
            q_h = qkv[:, c0:c0 + HEAD_DIM] * scale             # free lane slices
            k_h = qkv[:, WIDTH + c0:WIDTH + c0 + HEAD_DIM]
            v_h = qkv[:, 2 * WIDTH + c0:2 * WIDTH + c0 + HEAD_DIM]

            # Batched attention via block-diagonal additive bias (no splits).
            s = jax.lax.dot_general(                           # q @ k^T  (ROWS,ROWS)
                q_h, k_h, (((1,), (1,)), ((), ())),
                preferred_element_type=jnp.float32) + attn_bias
            s = s - jnp.max(s, axis=-1, keepdims=True)
            p = jnp.exp(s)
            p = p * pl.reciprocal(jnp.sum(p, axis=-1, keepdims=True),
                                  approx=True)                 # EUP, off the VALU
            o_h = jnp.dot(p, v_h, preferred_element_type=jnp.float32)
            attn = attn + jnp.dot(o_h, w_out[c0:c0 + HEAD_DIM, :],
                                  preferred_element_type=jnp.float32)
        x = x + attn

        # ---- MLP block: x = x + W2 @ quick_gelu(W1 @ ln_2(x)) ----
        h = _ln_f32(x, ln2_g, ln2_b)
        hid = jnp.dot(h, w_fc, preferred_element_type=jnp.float32) + b_fc
        hid = hid * jax.nn.sigmoid(1.702 * hid)                # QuickGELU
        x = x + jnp.dot(hid, w_pr, preferred_element_type=jnp.float32) + b_pr

    # ---- ln_post on the class token of each image, then projection ----
    ln_post_g = ln_post_g_ref[...]
    ln_post_b = ln_post_b_ref[...]
    proj = proj_ref[...]
    for b in range(BATCH):
        r0 = b * TOKENS
        cls_tok = _ln_f32(x[r0:r0 + 1, :], ln_post_g, ln_post_b)   # (1, W)
        out_ref[b:b + 1, :] = jnp.dot(
            cls_tok, proj, preferred_element_type=jnp.float32).astype(out_ref.dtype)


# --------------------------- parameter construction -------------------------
def init_params(key):
    ks = jax.random.split(key, 8)
    it = iter(ks)
    s = 0.02

    def nrm(shape):
        return (s * jax.random.normal(next(it), shape)).astype(DTYPE)

    return {
        # conv1 weight stored pre-flattened as (C*P*P, WIDTH); no bias in CLIP.
        "conv_w": nrm((IN_CH * PATCH * PATCH, WIDTH)),
        "cls": nrm((1, WIDTH)),
        "pos": nrm((TOKENS, WIDTH)),
        "ln_pre_g": jnp.ones((1, WIDTH), DTYPE),
        "ln_pre_b": jnp.zeros((1, WIDTH), DTYPE),
        "ln_post_g": jnp.ones((1, WIDTH), DTYPE),
        "ln_post_b": jnp.zeros((1, WIDTH), DTYPE),
        "proj": nrm((WIDTH, OUT_DIM)),
        # per-layer weights stacked on a leading LAYERS axis (one VMEM-resident
        # array each, indexed statically inside the fused kernel).
        "ln1_g": jnp.ones((LAYERS, 1, WIDTH), DTYPE),
        "ln1_b": jnp.zeros((LAYERS, 1, WIDTH), DTYPE),
        "w_qkv": nrm((LAYERS, WIDTH, 3 * WIDTH)),
        "b_qkv": jnp.zeros((LAYERS, 1, 3 * WIDTH), DTYPE),
        "w_out": nrm((LAYERS, WIDTH, WIDTH)),
        "b_out": jnp.zeros((LAYERS, 1, WIDTH), DTYPE),
        "ln2_g": jnp.ones((LAYERS, 1, WIDTH), DTYPE),
        "ln2_b": jnp.zeros((LAYERS, 1, WIDTH), DTYPE),
        "w_fc": nrm((LAYERS, WIDTH, 4 * WIDTH)),
        "b_fc": jnp.zeros((LAYERS, 1, 4 * WIDTH), DTYPE),
        "w_pr": nrm((LAYERS, 4 * WIDTH, WIDTH)),
        "b_pr": jnp.zeros((LAYERS, 1, WIDTH), DTYPE),
    }


# ------------------------------- forward pass --------------------------------
def encode_image(params, image):
    """image: (B, C, H, W) NCHW float32 -> (B, OUT_DIM)."""
    B, C, H, W = image.shape
    P = PATCH
    # Patch extraction glue (conv with stride==kernel is a per-patch matmul);
    # this one-time reshape/transpose is the only XLA-side data movement.
    patches = image.reshape(B, C, H // P, P, W // P, P)
    patches = patches.transpose(0, 2, 4, 1, 3, 5).reshape(B, NUM_PATCHES, C * P * P)
    # Prepend a zero "patch" row per image so the in-kernel patch-embed matmul
    # also emits the class-token row, then fold batch into the row axis.
    patches = jnp.concatenate(
        [jnp.zeros((B, 1, C * P * P), patches.dtype), patches], axis=1)
    patches = patches.reshape(B * TOKENS, C * P * P)                 # (ROWS, CPP)

    # cls embedding + positional embedding folded into one per-token bias,
    # tiled across the batch rows (tiny, built once).
    tok_bias = jnp.concatenate(
        [params["cls"] + params["pos"][0:1], params["pos"][1:]], axis=0)  # (T, W)
    tok_bias = jnp.tile(tok_bias, (B, 1))                            # (ROWS, W)

    # Block-diagonal additive attention bias: 0 within an image, -1e9 across
    # images; lets attention run on the batch-folded rows without splitting.
    row_img = jnp.arange(B * TOKENS) // TOKENS
    attn_bias = jnp.where(row_img[:, None] == row_img[None, :],
                          0.0, -1e9).astype(DTYPE)                   # (ROWS, ROWS)

    return pl.pallas_call(
        _clip_encoder_kernel,
        out_shape=jax.ShapeDtypeStruct((B, OUT_DIM), DTYPE),
        in_specs=[_VMEM] * 21,
        out_specs=_VMEM,
    )(patches, params["conv_w"], tok_bias, attn_bias,
      params["ln_pre_g"], params["ln_pre_b"],
      params["ln1_g"], params["ln1_b"], params["w_qkv"], params["b_qkv"],
      params["w_out"], params["b_out"],
      params["ln2_g"], params["ln2_b"], params["w_fc"], params["b_fc"],
      params["w_pr"], params["b_pr"],
      params["ln_post_g"], params["ln_post_b"], params["proj"])


# ----------------------------------- main ------------------------------------
if __name__ == "__main__":
    key = jax.random.PRNGKey(0)
    k_img, k_par = jax.random.split(key)
    image = jax.random.normal(k_img, (BATCH, IN_CH, IMG, IMG), dtype=DTYPE)
    params = init_params(k_par)

    out = jax.jit(encode_image)(params, image)
    out = jax.block_until_ready(out)
    assert out.shape == (BATCH, OUT_DIM) and bool(jnp.all(jnp.isfinite(out)))
    print("KERNEL_OK")
</pallas_src>

<mosaic_0001>
module attributes {stable_mosaic.version = 11 : i64} {
  func.func @_clip_encoder_kernel(%arg0: memref<34x48xf32, #tpu.memory_space<vmem>>, %arg1: memref<48x32xf32, #tpu.memory_space<vmem>>, %arg2: memref<34x32xf32, #tpu.memory_space<vmem>>, %arg3: memref<34x34xf32, #tpu.memory_space<vmem>>, %arg4: memref<1x32xf32, #tpu.memory_space<vmem>>, %arg5: memref<1x32xf32, #tpu.memory_space<vmem>>, %arg6: memref<2x1x32xf32, #tpu.memory_space<vmem>>, %arg7: memref<2x1x32xf32, #tpu.memory_space<vmem>>, %arg8: memref<2x32x96xf32, #tpu.memory_space<vmem>>, %arg9: memref<2x1x96xf32, #tpu.memory_space<vmem>>, %arg10: memref<2x32x32xf32, #tpu.memory_space<vmem>>, %arg11: memref<2x1x32xf32, #tpu.memory_space<vmem>>, %arg12: memref<2x1x32xf32, #tpu.memory_space<vmem>>, %arg13: memref<2x1x32xf32, #tpu.memory_space<vmem>>, %arg14: memref<2x32x128xf32, #tpu.memory_space<vmem>>, %arg15: memref<2x1x128xf32, #tpu.memory_space<vmem>>, %arg16: memref<2x128x32xf32, #tpu.memory_space<vmem>>, %arg17: memref<2x1x32xf32, #tpu.memory_space<vmem>>, %arg18: memref<1x32xf32, #tpu.memory_space<vmem>>, %arg19: memref<1x32xf32, #tpu.memory_space<vmem>>, %arg20: memref<32x16xf32, #tpu.memory_space<vmem>>, %arg21: memref<2x16xf32, #tpu.memory_space<vmem>>) attributes {dimension_semantics = [], scalar_prefetch = 0 : i64, scratch_operands = 0 : i64, tpu.core_type = #tpu.core_type<tc>} {
    %c0 = arith.constant 0 : index
    %c0_0 = arith.constant 0 : index
    %0 = vector.load %arg3[%c0, %c0_0] : memref<34x34xf32, #tpu.memory_space<vmem>>, vector<34x34xf32>
    %c0_1 = arith.constant 0 : index
    %c0_2 = arith.constant 0 : index
    %1 = vector.load %arg0[%c0_1, %c0_2] : memref<34x48xf32, #tpu.memory_space<vmem>>, vector<34x48xf32>
    %c0_3 = arith.constant 0 : index
    %c0_4 = arith.constant 0 : index
    %2 = vector.load %arg1[%c0_3, %c0_4] : memref<48x32xf32, #tpu.memory_space<vmem>>, vector<48x32xf32>
    %cst = arith.constant dense<0.000000e+00> : vector<34x32xf32>
    %3 = tpu.matmul %1, %2, %cst {dimension_numbers = #tpu.dot_dimension_numbers<[1], [0], [0], [1], [0, 0, 1, 1], [], []>} : vector<34x48xf32>, vector<48x32xf32>, vector<34x32xf32> -> vector<34x32xf32>
    %c0_5 = arith.constant 0 : index
    %c0_6 = arith.constant 0 : index
    %4 = vector.load %arg2[%c0_5, %c0_6] : memref<34x32xf32, #tpu.memory_space<vmem>>, vector<34x32xf32>
    %5 = arith.addf %3, %4 : vector<34x32xf32>
    %c0_7 = arith.constant 0 : index
    %c0_8 = arith.constant 0 : index
    %6 = vector.load %arg4[%c0_7, %c0_8] : memref<1x32xf32, #tpu.memory_space<vmem>>, vector<1x32xf32>
    %c0_9 = arith.constant 0 : index
    %c0_10 = arith.constant 0 : index
    %7 = vector.load %arg5[%c0_9, %c0_10] : memref<1x32xf32, #tpu.memory_space<vmem>>, vector<1x32xf32>
    %cst_11 = arith.constant dense<0.000000e+00> : vector<34xf32>
    %8 = vector.multi_reduction <add>, %5, %cst_11 [1] : vector<34x32xf32> to vector<34xf32>
    %9 = vector.shape_cast %8 : vector<34xf32> to vector<34x1xf32>
    %cst_12 = arith.constant 3.200000e+01 : f32
    %10 = vector.broadcast %cst_12 : f32 to vector<34x1xf32>
    %11 = arith.divf %9, %10 : vector<34x1xf32>
    %12 = vector.broadcast %11 : vector<34x1xf32> to vector<34x32xf32>
    %13 = arith.subf %5, %12 : vector<34x32xf32>
    %14 = arith.mulf %13, %13 : vector<34x32xf32>
    %cst_13 = arith.constant dense<0.000000e+00> : vector<34xf32>
    %15 = vector.multi_reduction <add>, %14, %cst_13 [1] : vector<34x32xf32> to vector<34xf32>
    %16 = vector.shape_cast %15 : vector<34xf32> to vector<34x1xf32>
    %cst_14 = arith.constant 3.200000e+01 : f32
    %17 = vector.broadcast %cst_14 : f32 to vector<34x1xf32>
    %18 = arith.divf %16, %17 : vector<34x1xf32>
    %19 = vector.broadcast %11 : vector<34x1xf32> to vector<34x32xf32>
    %20 = arith.subf %5, %19 : vector<34x32xf32>
    %cst_15 = arith.constant 9.99999974E-6 : f32
    %21 = vector.broadcast %cst_15 : f32 to vector<34x1xf32>
    %22 = arith.addf %18, %21 : vector<34x1xf32>
    %23 = math.rsqrt %22 : vector<34x1xf32>
    %24 = vector.broadcast %23 : vector<34x1xf32> to vector<34x32xf32>
    %25 = arith.mulf %20, %24 : vector<34x32xf32>
    %26 = vector.broadcast %6 : vector<1x32xf32> to vector<34x32xf32>
    %27 = arith.mulf %25, %26 : vector<34x32xf32>
    %28 = vector.broadcast %7 : vector<1x32xf32> to vector<34x32xf32>
    %29 = arith.addf %27, %28 : vector<34x32xf32>
    %c0_16 = arith.constant 0 : index
    %c0_17 = arith.constant 0 : index
    %c0_18 = arith.constant 0 : index
    %30 = vector.load %arg6[%c0_16, %c0_17, %c0_18] : memref<2x1x32xf32, #tpu.memory_space<vmem>>, vector<1x1x32xf32>
    %31 = vector.shape_cast %30 : vector<1x1x32xf32> to vector<1x32xf32>
    %c0_19 = arith.constant 0 : index
    %c0_20 = arith.constant 0 : index
    %c0_21 = arith.constant 0 : index
    %32 = vector.load %arg7[%c0_19, %c0_20, %c0_21] : memref<2x1x32xf32, #tpu.memory_space<vmem>>, vector<1x1x32xf32>
    %33 = vector.shape_cast %32 : vector<1x1x32xf32> to vector<1x32xf32>
    %c0_22 = arith.constant 0 : index
    %c0_23 = arith.constant 0 : index
    %c0_24 = arith.constant 0 : index
    %34 = vector.load %arg8[%c0_22, %c0_23, %c0_24] : memref<2x32x96xf32, #tpu.memory_space<vmem>>, vector<1x32x96xf32>
    %35 = vector.shape_cast %34 : vector<1x32x96xf32> to vector<32x96xf32>
    %c0_25 = arith.constant 0 : index
    %c0_26 = arith.constant 0 : index
    %c0_27 = arith.constant 0 : index
    %36 = vector.load %arg9[%c0_25, %c0_26, %c0_27] : memref<2x1x96xf32, #tpu.memory_space<vmem>>, vector<1x1x96xf32>
    %37 = vector.shape_cast %36 : vector<1x1x96xf32> to vector<1x96xf32>
    %c0_28 = arith.constant 0 : index
    %c0_29 = arith.constant 0 : index
    %c0_30 = arith.constant 0 : index
    %38 = vector.load %arg10[%c0_28, %c0_29, %c0_30] : memref<2x32x32xf32, #tpu.memory_space<vmem>>, vector<1x32x32xf32>
    %39 = vector.shape_cast %38 : vector<1x32x32xf32> to vector<32x32xf32>
    %c0_31 = arith.constant 0 : index
    %c0_32 = arith.constant 0 : index
    %c0_33 = arith.constant 0 : index
    %40 = vector.load %arg11[%c0_31, %c0_32, %c0_33] : memref<2x1x32xf32, #tpu.memory_space<vmem>>, vector<1x1x32xf32>
    %41 = vector.shape_cast %40 : vector<1x1x32xf32> to vector<1x32xf32>
    %c0_34 = arith.constant 0 : index
    %c0_35 = arith.constant 0 : index
    %c0_36 = arith.constant 0 : index
    %42 = vector.load %arg12[%c0_34, %c0_35, %c0_36] : memref<2x1x32xf32, #tpu.memory_space<vmem>>, vector<1x1x32xf32>
    %43 = vector.shape_cast %42 : vector<1x1x32xf32> to vector<1x32xf32>
    %c0_37 = arith.constant 0 : index
    %c0_38 = arith.constant 0 : index
    %c0_39 = arith.constant 0 : index
    %44 = vector.load %arg13[%c0_37, %c0_38, %c0_39] : memref<2x1x32xf32, #tpu.memory_space<vmem>>, vector<1x1x32xf32>
    %45 = vector.shape_cast %44 : vector<1x1x32xf32> to vector<1x32xf32>
    %c0_40 = arith.constant 0 : index
    %c0_41 = arith.constant 0 : index
    %c0_42 = arith.constant 0 : index
    %46 = vector.load %arg14[%c0_40, %c0_41, %c0_42] : memref<2x32x128xf32, #tpu.memory_space<vmem>>, vector<1x32x128xf32>
    %47 = vector.shape_cast %46 : vector<1x32x128xf32> to vector<32x128xf32>
    %c0_43 = arith.constant 0 : index
    %c0_44 = arith.constant 0 : index
    %c0_45 = arith.constant 0 : index
    %48 = vector.load %arg15[%c0_43, %c0_44, %c0_45] : memref<2x1x128xf32, #tpu.memory_space<vmem>>, vector<1x1x128xf32>
    %49 = vector.shape_cast %48 : vector<1x1x128xf32> to vector<1x128xf32>
    %c0_46 = arith.constant 0 : index
    %c0_47 = arith.constant 0 : index
    %c0_48 = arith.constant 0 : index
    %50 = vector.load %arg16[%c0_46, %c0_47, %c0_48] : memref<2x128x32xf32, #tpu.memory_space<vmem>>, vector<1x128x32xf32>
    %51 = vector.shape_cast %50 : vector<1x128x32xf32> to vector<128x32xf32>
    %c0_49 = arith.constant 0 : index
    %c0_50 = arith.constant 0 : index
    %c0_51 = arith.constant 0 : index
    %52 = vector.load %arg17[%c0_49, %c0_50, %c0_51] : memref<2x1x32xf32, #tpu.memory_space<vmem>>, vector<1x1x32xf32>
    %53 = vector.shape_cast %52 : vector<1x1x32xf32> to vector<1x32xf32>
    %cst_52 = arith.constant dense<0.000000e+00> : vector<34xf32>
    %54 = vector.multi_reduction <add>, %29, %cst_52 [1] : vector<34x32xf32> to vector<34xf32>
    %55 = vector.shape_cast %54 : vector<34xf32> to vector<34x1xf32>
    %cst_53 = arith.constant 3.200000e+01 : f32
    %56 = vector.broadcast %cst_53 : f32 to vector<34x1xf32>
    %57 = arith.divf %55, %56 : vector<34x1xf32>
    %58 = vector.broadcast %57 : vector<34x1xf32> to vector<34x32xf32>
    %59 = arith.subf %29, %58 : vector<34x32xf32>
    %60 = arith.mulf %59, %59 : vector<34x32xf32>
    %cst_54 = arith.constant dense<0.000000e+00> : vector<34xf32>
    %61 = vector.multi_reduction <add>, %60, %cst_54 [1] : vector<34x32xf32> to vector<34xf32>
    %62 = vector.shape_cast %61 : vector<34xf32> to vector<34x1xf32>
    %cst_55 = arith.constant 3.200000e+01 : f32
    %63 = vector.broadcast %cst_55 : f32 to vector<34x1xf32>
    %64 = arith.divf %62, %63 : vector<34x1xf32>
    %65 = vector.broadcast %57 : vector<34x1xf32> to vector<34x32xf32>
    %66 = arith.subf %29, %65 : vector<34x32xf32>
    %cst_56 = arith.constant 9.99999974E-6 : f32
    %67 = vector.broadcast %cst_56 : f32 to vector<34x1xf32>
    %68 = arith.addf %64, %67 : vector<34x1xf32>
    %69 = math.rsqrt %68 : vector<34x1xf32>
    %70 = vector.broadcast %69 : vector<34x1xf32> to vector<34x32xf32>
    %71 = arith.mulf %66, %70 : vector<34x32xf32>
    %72 = vector.broadcast %31 : vector<1x32xf32> to vector<34x32xf32>
    %73 = arith.mulf %71, %72 : vector<34x32xf32>
    %74 = vector.broadcast %33 : vector<1x32xf32> to vector<34x32xf32>
    %75 = arith.addf %73, %74 : vector<34x32xf32>
    %cst_57 = arith.constant dense<0.000000e+00> : vector<34x96xf32>
    %76 = tpu.matmul %75, %35, %cst_57 {dimension_numbers = #tpu.dot_dimension_numbers<[1], [0], [0], [1], [0, 0, 1, 1], [], []>} : vector<34x32xf32>, vector<32x96xf32>, vector<34x96xf32> -> vector<34x96xf32>
    %77 = vector.broadcast %37 : vector<1x96xf32> to vector<34x96xf32>
    %78 = arith.addf %76, %77 : vector<34x96xf32>
    %79 = vector.extract_strided_slice %78 {offsets = [0, 0], sizes = [34, 8], strides = [1, 1]} : vector<34x96xf32> to vector<34x8xf32>
    %cst_58 = arith.constant 0.353553385 : f32
    %80 = vector.broadcast %cst_58 : f32 to vector<34x8xf32>
    %81 = arith.mulf %79, %80 : vector<34x8xf32>
    %82 = vector.extract_strided_slice %78 {offsets = [0, 32], sizes = [34, 8], strides = [1, 1]} : vector<34x96xf32> to vector<34x8xf32>
    %83 = vector.extract_strided_slice %78 {offsets = [0, 64], sizes = [34, 8], strides = [1, 1]} : vector<34x96xf32> to vector<34x8xf32>
    %cst_59 = arith.constant dense<0.000000e+00> : vector<34x34xf32>
    %84 = tpu.matmul %81, %82, %cst_59 {dimension_numbers = #tpu.dot_dimension_numbers<[1], [1], [0], [0], [0, 0, 1, 0], [], []>} : vector<34x8xf32>, vector<34x8xf32>, vector<34x34xf32> -> vector<34x34xf32>
    %85 = arith.addf %84, %0 : vector<34x34xf32>
    %cst_60 = arith.constant dense<0xFF800000> : vector<34xf32>
    %86 = vector.multi_reduction <maximumf>, %85, %cst_60 [1] : vector<34x34xf32> to vector<34xf32>
    %87 = vector.shape_cast %86 : vector<34xf32> to vector<34x1xf32>
    %88 = vector.broadcast %87 : vector<34x1xf32> to vector<34x34xf32>
    %89 = arith.subf %85, %88 : vector<34x34xf32>
    %90 = math.exp %89 : vector<34x34xf32>
    %cst_61 = arith.constant dense<0.000000e+00> : vector<34xf32>
    %91 = vector.multi_reduction <add>, %90, %cst_61 [1] : vector<34x34xf32> to vector<34xf32>
    %92 = vector.shape_cast %91 : vector<34xf32> to vector<34x1xf32>
    %93 = tpu.reciprocal %92 {approx = true} : vector<34x1xf32> -> vector<34x1xf32>
    %94 = vector.broadcast %93 : vector<34x1xf32> to vector<34x34xf32>
    %95 = arith.mulf %90, %94 : vector<34x34xf32>
    %cst_62 = arith.constant dense<0.000000e+00> : vector<34x8xf32>
    %96 = tpu.matmul %95, %83, %cst_62 {dimension_numbers = #tpu.dot_dimension_numbers<[1], [0], [0], [1], [0, 0, 1, 1], [], []>} : vector<34x34xf32>, vector<34x8xf32>, vector<34x8xf32> -> vector<34x8xf32>
    %97 = vector.extract_strided_slice %39 {offsets = [0, 0], sizes = [8, 32], strides = [1, 1]} : vector<32x32xf32> to vector<8x32xf32>
    %cst_63 = arith.constant dense<0.000000e+00> : vector<34x32xf32>
    %98 = tpu.matmul %96, %97, %cst_63 {dimension_numbers = #tpu.dot_dimension_numbers<[1], [0], [0], [1], [0, 0, 1, 1], [], []>} : vector<34x8xf32>, vector<8x32xf32>, vector<34x32xf32> -> vector<34x32xf32>
    %99 = vector.broadcast %41 : vector<1x32xf32> to vector<34x32xf32>
    %100 = arith.addf %99, %98 : vector<34x32xf32>
    %101 = vector.extract_strided_slice %78 {offsets = [0, 8], sizes = [34, 8], strides = [1, 1]} : vector<34x96xf32> to vector<34x8xf32>
    %cst_64 = arith.constant 0.353553385 : f32
    %102 = vector.broadcast %cst_64 : f32 to vector<34x8xf32>
    %103 = arith.mulf %101, %102 : vector<34x8xf32>
    %104 = vector.extract_strided_slice %78 {offsets = [0, 40], sizes = [34, 8], strides = [1, 1]} : vector<34x96xf32> to vector<34x8xf32>
    %105 = vector.extract_strided_slice %78 {offsets = [0, 72], sizes = [34, 8], strides = [1, 1]} : vector<34x96xf32> to vector<34x8xf32>
    %cst_65 = arith.constant dense<0.000000e+00> : vector<34x34xf32>
    %106 = tpu.matmul %103, %104, %cst_65 {dimension_numbers = #tpu.dot_dimension_numbers<[1], [1], [0], [0], [0, 0, 1, 0], [], []>} : vector<34x8xf32>, vector<34x8xf32>, vector<34x34xf32> -> vector<34x34xf32>
    %107 = arith.addf %106, %0 : vector<34x34xf32>
    %cst_66 = arith.constant dense<0xFF800000> : vector<34xf32>
    %108 = vector.multi_reduction <maximumf>, %107, %cst_66 [1] : vector<34x34xf32> to vector<34xf32>
    %109 = vector.shape_cast %108 : vector<34xf32> to vector<34x1xf32>
    %110 = vector.broadcast %109 : vector<34x1xf32> to vector<34x34xf32>
    %111 = arith.subf %107, %110 : vector<34x34xf32>
    %112 = math.exp %111 : vector<34x34xf32>
    %cst_67 = arith.constant dense<0.000000e+00> : vector<34xf32>
    %113 = vector.multi_reduction <add>, %112, %cst_67 [1] : vector<34x34xf32> to vector<34xf32>
    %114 = vector.shape_cast %113 : vector<34xf32> to vector<34x1xf32>
    %115 = tpu.reciprocal %114 {approx = true} : vector<34x1xf32> -> vector<34x1xf32>
    %116 = vector.broadcast %115 : vector<34x1xf32> to vector<34x34xf32>
    %117 = arith.mulf %112, %116 : vector<34x34xf32>
    %cst_68 = arith.constant dense<0.000000e+00> : vector<34x8xf32>
    %118 = tpu.matmul %117, %105, %cst_68 {dimension_numbers = #tpu.dot_dimension_numbers<[1], [0], [0], [1], [0, 0, 1, 1], [], []>} : vector<34x34xf32>, vector<34x8xf32>, vector<34x8xf32> -> vector<34x8xf32>
    %119 = vector.extract_strided_slice %39 {offsets = [8, 0], sizes = [8, 32], strides = [1, 1]} : vector<32x32xf32> to vector<8x32xf32>
    %cst_69 = arith.constant dense<0.000000e+00> : vector<34x32xf32>
    %120 = tpu.matmul %118, %119, %cst_69 {dimension_numbers = #tpu.dot_dimension_numbers<[1], [0], [0], [1], [0, 0, 1, 1], [], []>} : vector<34x8xf32>, vector<8x32xf32>, vector<34x32xf32> -> vector<34x32xf32>
    %121 = arith.addf %100, %120 : vector<34x32xf32>
    %122 = vector.extract_strided_slice %78 {offsets = [0, 16], sizes = [34, 8], strides = [1, 1]} : vector<34x96xf32> to vector<34x8xf32>
    %cst_70 = arith.constant 0.353553385 : f32
    %123 = vector.broadcast %cst_70 : f32 to vector<34x8xf32>
    %124 = arith.mulf %122, %123 : vector<34x8xf32>
    %125 = vector.extract_strided_slice %78 {offsets = [0, 48], sizes = [34, 8], strides = [1, 1]} : vector<34x96xf32> to vector<34x8xf32>
    %126 = vector.extract_strided_slice %78 {offsets = [0, 80], sizes = [34, 8], strides = [1, 1]} : vector<34x96xf32> to vector<34x8xf32>
    %cst_71 = arith.constant dense<0.000000e+00> : vector<34x34xf32>
    %127 = tpu.matmul %124, %125, %cst_71 {dimension_numbers = #tpu.dot_dimension_numbers<[1], [1], [0], [0], [0, 0, 1, 0], [], []>} : vector<34x8xf32>, vector<34x8xf32>, vector<34x34xf32> -> vector<34x34xf32>
    %128 = arith.addf %127, %0 : vector<34x34xf32>
    %cst_72 = arith.constant dense<0xFF800000> : vector<34xf32>
    %129 = vector.multi_reduction <maximumf>, %128, %cst_72 [1] : vector<34x34xf32> to vector<34xf32>
    %130 = vector.shape_cast %129 : vector<34xf32> to vector<34x1xf32>
    %131 = vector.broadcast %130 : vector<34x1xf32> to vector<34x34xf32>
    %132 = arith.subf %128, %131 : vector<34x34xf32>
    %133 = math.exp %132 : vector<34x34xf32>
    %cst_73 = arith.constant dense<0.000000e+00> : vector<34xf32>
    %134 = vector.multi_reduction <add>, %133, %cst_73 [1] : vector<34x34xf32> to vector<34xf32>
    %135 = vector.shape_cast %134 : vector<34xf32> to vector<34x1xf32>
    %136 = tpu.reciprocal %135 {approx = true} : vector<34x1xf32> -> vector<34x1xf32>
    %137 = vector.broadcast %136 : vector<34x1xf32> to vector<34x34xf32>
    %138 = arith.mulf %133, %137 : vector<34x34xf32>
    %cst_74 = arith.constant dense<0.000000e+00> : vector<34x8xf32>
    %139 = tpu.matmul %138, %126, %cst_74 {dimension_numbers = #tpu.dot_dimension_numbers<[1], [0], [0], [1], [0, 0, 1, 1], [], []>} : vector<34x34xf32>, vector<34x8xf32>, vector<34x8xf32> -> vector<34x8xf32>
    %140 = vector.extract_strided_slice %39 {offsets = [16, 0], sizes = [8, 32], strides = [1, 1]} : vector<32x32xf32> to vector<8x32xf32>
    %cst_75 = arith.constant dense<0.000000e+00> : vector<34x32xf32>
    %141 = tpu.matmul %139, %140, %cst_75 {dimension_numbers = #tpu.dot_dimension_numbers<[1], [0], [0], [1], [0, 0, 1, 1], [], []>} : vector<34x8xf32>, vector<8x32xf32>, vector<34x32xf32> -> vector<34x32xf32>
    %142 = arith.addf %121, %141 : vector<34x32xf32>
    %143 = vector.extract_strided_slice %78 {offsets = [0, 24], sizes = [34, 8], strides = [1, 1]} : vector<34x96xf32> to vector<34x8xf32>
    %cst_76 = arith.constant 0.353553385 : f32
    %144 = vector.broadcast %cst_76 : f32 to vector<34x8xf32>
    %145 = arith.mulf %143, %144 : vector<34x8xf32>
    %146 = vector.extract_strided_slice %78 {offsets = [0, 56], sizes = [34, 8], strides = [1, 1]} : vector<34x96xf32> to vector<34x8xf32>
    %147 = vector.extract_strided_slice %78 {offsets = [0, 88], sizes = [34, 8], strides = [1, 1]} : vector<34x96xf32> to vector<34x8xf32>
    %cst_77 = arith.constant dense<0.000000e+00> : vector<34x34xf32>
    %148 = tpu.matmul %145, %146, %cst_77 {dimension_numbers = #tpu.dot_dimension_numbers<[1], [1], [0], [0], [0, 0, 1, 0], [], []>} : vector<34x8xf32>, vector<34x8xf32>, vector<34x34xf32> -> vector<34x34xf32>
    %149 = arith.addf %148, %0 : vector<34x34xf32>
    %cst_78 = arith.constant dense<0xFF800000> : vector<34xf32>
    %150 = vector.multi_reduction <maximumf>, %149, %cst_78 [1] : vector<34x34xf32> to vector<34xf32>
    %151 = vector.shape_cast %150 : vector<34xf32> to vector<34x1xf32>
    %152 = vector.broadcast %151 : vector<34x1xf32> to vector<34x34xf32>
    %153 = arith.subf %149, %152 : vector<34x34xf32>
    %154 = math.exp %153 : vector<34x34xf32>
    %cst_79 = arith.constant dense<0.000000e+00> : vector<34xf32>
    %155 = vector.multi_reduction <add>, %154, %cst_79 [1] : vector<34x34xf32> to vector<34xf32>
    %156 = vector.shape_cast %155 : vector<34xf32> to vector<34x1xf32>
    %157 = tpu.reciprocal %156 {approx = true} : vector<34x1xf32> -> vector<34x1xf32>
    %158 = vector.broadcast %157 : vector<34x1xf32> to vector<34x34xf32>
    %159 = arith.mulf %154, %158 : vector<34x34xf32>
    %cst_80 = arith.constant dense<0.000000e+00> : vector<34x8xf32>
    %160 = tpu.matmul %159, %147, %cst_80 {dimension_numbers = #tpu.dot_dimension_numbers<[1], [0], [0], [1], [0, 0, 1, 1], [], []>} : vector<34x34xf32>, vector<34x8xf32>, vector<34x8xf32> -> vector<34x8xf32>
    %161 = vector.extract_strided_slice %39 {offsets = [24, 0], sizes = [8, 32], strides = [1, 1]} : vector<32x32xf32> to vector<8x32xf32>
    %cst_81 = arith.constant dense<0.000000e+00> : vector<34x32xf32>
    %162 = tpu.matmul %160, %161, %cst_81 {dimension_numbers = #tpu.dot_dimension_numbers<[1], [0], [0], [1], [0, 0, 1, 1], [], []>} : vector<34x8xf32>, vector<8x32xf32>, vector<34x32xf32> -> vector<34x32xf32>
    %163 = arith.addf %142, %162 : vector<34x32xf32>
    %164 = arith.addf %29, %163 : vector<34x32xf32>
    %cst_82 = arith.constant dense<0.000000e+00> : vector<34xf32>
    %165 = vector.multi_reduction <add>, %164, %cst_82 [1] : vector<34x32xf32> to vector<34xf32>
    %166 = vector.shape_cast %165 : vector<34xf32> to vector<34x1xf32>
    %cst_83 = arith.constant 3.200000e+01 : f32
    %167 = vector.broadcast %cst_83 : f32 to vector<34x1xf32>
    %168 = arith.divf %166, %167 : vector<34x1xf32>
    %169 = vector.broadcast %168 : vector<34x1xf32> to vector<34x32xf32>
    %170 = arith.subf %164, %169 : vector<34x32xf32>
    %171 = arith.mulf %170, %170 : vector<34x32xf32>
    %cst_84 = arith.constant dense<0.000000e+00> : vector<34xf32>
    %172 = vector.multi_reduction <add>, %171, %cst_84 [1] : vector<34x32xf32> to vector<34xf32>
    %173 = vector.shape_cast %172 : vector<34xf32> to vector<34x1xf32>
    %cst_85 = arith.constant 3.200000e+01 : f32
    %174 = vector.broadcast %cst_85 : f32 to vector<34x1xf32>
    %175 = arith.divf %173, %174 : vector<34x1xf32>
    %176 = vector.broadcast %168 : vector<34x1xf32> to vector<34x32xf32>
    %177 = arith.subf %164, %176 : vector<34x32xf32>
    %cst_86 = arith.constant 9.99999974E-6 : f32
    %178 = vector.broadcast %cst_86 : f32 to vector<34x1xf32>
    %179 = arith.addf %175, %178 : vector<34x1xf32>
    %180 = math.rsqrt %179 : vector<34x1xf32>
    %181 = vector.broadcast %180 : vector<34x1xf32> to vector<34x32xf32>
    %182 = arith.mulf %177, %181 : vector<34x32xf32>
    %183 = vector.broadcast %43 : vector<1x32xf32> to vector<34x32xf32>
    %184 = arith.mulf %182, %183 : vector<34x32xf32>
    %185 = vector.broadcast %45 : vector<1x32xf32> to vector<34x32xf32>
    %186 = arith.addf %184, %185 : vector<34x32xf32>
    %cst_87 = arith.constant dense<0.000000e+00> : vector<34x128xf32>
    %187 = tpu.matmul %186, %47, %cst_87 {dimension_numbers = #tpu.dot_dimension_numbers<[1], [0], [0], [1], [0, 0, 1, 1], [], []>} : vector<34x32xf32>, vector<32x128xf32>, vector<34x128xf32> -> vector<34x128xf32>
    %188 = vector.broadcast %49 : vector<1x128xf32> to vector<34x128xf32>
    %189 = arith.addf %187, %188 : vector<34x128xf32>
    %cst_88 = arith.constant 1.702000e+00 : f32
    %190 = vector.broadcast %cst_88 : f32 to vector<34x128xf32>
    %191 = arith.mulf %190, %189 : vector<34x128xf32>
    %192 = arith.negf %191 : vector<34x128xf32>
    %193 = math.exp %192 : vector<34x128xf32>
    %cst_89 = arith.constant 1.000000e+00 : f32
    %194 = vector.broadcast %cst_89 : f32 to vector<34x128xf32>
    %195 = arith.addf %194, %193 : vector<34x128xf32>
    %196 = arith.divf %194, %195 : vector<34x128xf32>
    %197 = arith.mulf %189, %196 : vector<34x128xf32>
    %cst_90 = arith.constant dense<0.000000e+00> : vector<34x32xf32>
    %198 = tpu.matmul %197, %51, %cst_90 {dimension_numbers = #tpu.dot_dimension_numbers<[1], [0], [0], [1], [0, 0, 1, 1], [], []>} : vector<34x128xf32>, vector<128x32xf32>, vector<34x32xf32> -> vector<34x32xf32>
    %199 = arith.addf %164, %198 : vector<34x32xf32>
    %200 = vector.broadcast %53 : vector<1x32xf32> to vector<34x32xf32>
    %201 = arith.addf %199, %200 : vector<34x32xf32>
    %c1 = arith.constant 1 : index
    %c0_91 = arith.constant 0 : index
    %c0_92 = arith.constant 0 : index
    %202 = vector.load %arg6[%c1, %c0_91, %c0_92] : memref<2x1x32xf32, #tpu.memory_space<vmem>>, vector<1x1x32xf32>
    %203 = vector.shape_cast %202 : vector<1x1x32xf32> to vector<1x32xf32>
    %c1_93 = arith.constant 1 : index
    %c0_94 = arith.constant 0 : index
    %c0_95 = arith.constant 0 : index
    %204 = vector.load %arg7[%c1_93, %c0_94, %c0_95] : memref<2x1x32xf32, #tpu.memory_space<vmem>>, vector<1x1x32xf32>
    %205 = vector.shape_cast %204 : vector<1x1x32xf32> to vector<1x32xf32>
    %c1_96 = arith.constant 1 : index
    %c0_97 = arith.constant 0 : index
    %c0_98 = arith.constant 0 : index
    %206 = vector.load %arg8[%c1_96, %c0_97, %c0_98] : memref<2x32x96xf32, #tpu.memory_space<vmem>>, vector<1x32x96xf32>
    %207 = vector.shape_cast %206 : vector<1x32x96xf32> to vector<32x96xf32>
    %c1_99 = arith.constant 1 : index
    %c0_100 = arith.constant 0 : index
    %c0_101 = arith.constant 0 : index
    %208 = vector.load %arg9[%c1_99, %c0_100, %c0_101] : memref<2x1x96xf32, #tpu.memory_space<vmem>>, vector<1x1x96xf32>
    %209 = vector.shape_cast %208 : vector<1x1x96xf32> to vector<1x96xf32>
    %c1_102 = arith.constant 1 : index
    %c0_103 = arith.constant 0 : index
    %c0_104 = arith.constant 0 : index
    %210 = vector.load %arg10[%c1_102, %c0_103, %c0_104] : memref<2x32x32xf32, #tpu.memory_space<vmem>>, vector<1x32x32xf32>
    %211 = vector.shape_cast %210 : vector<1x32x32xf32> to vector<32x32xf32>
    %c1_105 = arith.constant 1 : index
    %c0_106 = arith.constant 0 : index
    %c0_107 = arith.constant 0 : index
    %212 = vector.load %arg11[%c1_105, %c0_106, %c0_107] : memref<2x1x32xf32, #tpu.memory_space<vmem>>, vector<1x1x32xf32>
    %213 = vector.shape_cast %212 : vector<1x1x32xf32> to vector<1x32xf32>
    %c1_108 = arith.constant 1 : index
    %c0_109 = arith.constant 0 : index
    %c0_110 = arith.constant 0 : index
    %214 = vector.load %arg12[%c1_108, %c0_109, %c0_110] : memref<2x1x32xf32, #tpu.memory_space<vmem>>, vector<1x1x32xf32>
    %215 = vector.shape_cast %214 : vector<1x1x32xf32> to vector<1x32xf32>
    %c1_111 = arith.constant 1 : index
    %c0_112 = arith.constant 0 : index
    %c0_113 = arith.constant 0 : index
    %216 = vector.load %arg13[%c1_111, %c0_112, %c0_113] : memref<2x1x32xf32, #tpu.memory_space<vmem>>, vector<1x1x32xf32>
    %217 = vector.shape_cast %216 : vector<1x1x32xf32> to vector<1x32xf32>
    %c1_114 = arith.constant 1 : index
    %c0_115 = arith.constant 0 : index
    %c0_116 = arith.constant 0 : index
    %218 = vector.load %arg14[%c1_114, %c0_115, %c0_116] : memref<2x32x128xf32, #tpu.memory_space<vmem>>, vector<1x32x128xf32>
    %219 = vector.shape_cast %218 : vector<1x32x128xf32> to vector<32x128xf32>
    %c1_117 = arith.constant 1 : index
    %c0_118 = arith.constant 0 : index
    %c0_119 = arith.constant 0 : index
    %220 = vector.load %arg15[%c1_117, %c0_118, %c0_119] : memref<2x1x128xf32, #tpu.memory_space<vmem>>, vector<1x1x128xf32>
    %221 = vector.shape_cast %220 : vector<1x1x128xf32> to vector<1x128xf32>
    %c1_120 = arith.constant 1 : index
    %c0_121 = arith.constant 0 : index
    %c0_122 = arith.constant 0 : index
    %222 = vector.load %arg16[%c1_120, %c0_121, %c0_122] : memref<2x128x32xf32, #tpu.memory_space<vmem>>, vector<1x128x32xf32>
    %223 = vector.shape_cast %222 : vector<1x128x32xf32> to vector<128x32xf32>
    %c1_123 = arith.constant 1 : index
    %c0_124 = arith.constant 0 : index
    %c0_125 = arith.constant 0 : index
    %224 = vector.load %arg17[%c1_123, %c0_124, %c0_125] : memref<2x1x32xf32, #tpu.memory_space<vmem>>, vector<1x1x32xf32>
    %225 = vector.shape_cast %224 : vector<1x1x32xf32> to vector<1x32xf32>
    %cst_126 = arith.constant dense<0.000000e+00> : vector<34xf32>
    %226 = vector.multi_reduction <add>, %201, %cst_126 [1] : vector<34x32xf32> to vector<34xf32>
    %227 = vector.shape_cast %226 : vector<34xf32> to vector<34x1xf32>
    %cst_127 = arith.constant 3.200000e+01 : f32
    %228 = vector.broadcast %cst_127 : f32 to vector<34x1xf32>
    %229 = arith.divf %227, %228 : vector<34x1xf32>
    %230 = vector.broadcast %229 : vector<34x1xf32> to vector<34x32xf32>
    %231 = arith.subf %201, %230 : vector<34x32xf32>
    %232 = arith.mulf %231, %231 : vector<34x32xf32>
    %cst_128 = arith.constant dense<0.000000e+00> : vector<34xf32>
    %233 = vector.multi_reduction <add>, %232, %cst_128 [1] : vector<34x32xf32> to vector<34xf32>
    %234 = vector.shape_cast %233 : vector<34xf32> to vector<34x1xf32>
    %cst_129 = arith.constant 3.200000e+01 : f32
    %235 = vector.broadcast %cst_129 : f32 to vector<34x1xf32>
    %236 = arith.divf %234, %235 : vector<34x1xf32>
    %237 = vector.broadcast %229 : vector<34x1xf32> to vector<34x32xf32>
    %238 = arith.subf %201, %237 : vector<34x32xf32>
    %cst_130 = arith.constant 9.99999974E-6 : f32
    %239 = vector.broadcast %cst_130 : f32 to vector<34x1xf32>
    %240 = arith.addf %236, %239 : vector<34x1xf32>
    %241 = math.rsqrt %240 : vector<34x1xf32>
    %242 = vector.broadcast %241 : vector<34x1xf32> to vector<34x32xf32>
    %243 = arith.mulf %238, %242 : vector<34x32xf32>
    %244 = vector.broadcast %203 : vector<1x32xf32> to vector<34x32xf32>
    %245 = arith.mulf %243, %244 : vector<34x32xf32>
    %246 = vector.broadcast %205 : vector<1x32xf32> to vector<34x32xf32>
    %247 = arith.addf %245, %246 : vector<34x32xf32>
    %cst_131 = arith.constant dense<0.000000e+00> : vector<34x96xf32>
    %248 = tpu.matmul %247, %207, %cst_131 {dimension_numbers = #tpu.dot_dimension_numbers<[1], [0], [0], [1], [0, 0, 1, 1], [], []>} : vector<34x32xf32>, vector<32x96xf32>, vector<34x96xf32> -> vector<34x96xf32>
    %249 = vector.broadcast %209 : vector<1x96xf32> to vector<34x96xf32>
    %250 = arith.addf %248, %249 : vector<34x96xf32>
    %251 = vector.extract_strided_slice %250 {offsets = [0, 0], sizes = [34, 8], strides = [1, 1]} : vector<34x96xf32> to vector<34x8xf32>
    %cst_132 = arith.constant 0.353553385 : f32
    %252 = vector.broadcast %cst_132 : f32 to vector<34x8xf32>
    %253 = arith.mulf %251, %252 : vector<34x8xf32>
    %254 = vector.extract_strided_slice %250 {offsets = [0, 32], sizes = [34, 8], strides = [1, 1]} : vector<34x96xf32> to vector<34x8xf32>
    %255 = vector.extract_strided_slice %250 {offsets = [0, 64], sizes = [34, 8], strides = [1, 1]} : vector<34x96xf32> to vector<34x8xf32>
    %cst_133 = arith.constant dense<0.000000e+00> : vector<34x34xf32>
    %256 = tpu.matmul %253, %254, %cst_133 {dimension_numbers = #tpu.dot_dimension_numbers<[1], [1], [0], [0], [0, 0, 1, 0], [], []>} : vector<34x8xf32>, vector<34x8xf32>, vector<34x34xf32> -> vector<34x34xf32>
    %257 = arith.addf %256, %0 : vector<34x34xf32>
    %cst_134 = arith.constant dense<0xFF800000> : vector<34xf32>
    %258 = vector.multi_reduction <maximumf>, %257, %cst_134 [1] : vector<34x34xf32> to vector<34xf32>
    %259 = vector.shape_cast %258 : vector<34xf32> to vector<34x1xf32>
    %260 = vector.broadcast %259 : vector<34x1xf32> to vector<34x34xf32>
    %261 = arith.subf %257, %260 : vector<34x34xf32>
    %262 = math.exp %261 : vector<34x34xf32>
    %cst_135 = arith.constant dense<0.000000e+00> : vector<34xf32>
    %263 = vector.multi_reduction <add>, %262, %cst_135 [1] : vector<34x34xf32> to vector<34xf32>
    %264 = vector.shape_cast %263 : vector<34xf32> to vector<34x1xf32>
    %265 = tpu.reciprocal %264 {approx = true} : vector<34x1xf32> -> vector<34x1xf32>
    %266 = vector.broadcast %265 : vector<34x1xf32> to vector<34x34xf32>
    %267 = arith.mulf %262, %266 : vector<34x34xf32>
    %cst_136 = arith.constant dense<0.000000e+00> : vector<34x8xf32>
    %268 = tpu.matmul %267, %255, %cst_136 {dimension_numbers = #tpu.dot_dimension_numbers<[1], [0], [0], [1], [0, 0, 1, 1], [], []>} : vector<34x34xf32>, vector<34x8xf32>, vector<34x8xf32> -> vector<34x8xf32>
    %269 = vector.extract_strided_slice %211 {offsets = [0, 0], sizes = [8, 32], strides = [1, 1]} : vector<32x32xf32> to vector<8x32xf32>
    %cst_137 = arith.constant dense<0.000000e+00> : vector<34x32xf32>
    %270 = tpu.matmul %268, %269, %cst_137 {dimension_numbers = #tpu.dot_dimension_numbers<[1], [0], [0], [1], [0, 0, 1, 1], [], []>} : vector<34x8xf32>, vector<8x32xf32>, vector<34x32xf32> -> vector<34x32xf32>
    %271 = vector.broadcast %213 : vector<1x32xf32> to vector<34x32xf32>
    %272 = arith.addf %271, %270 : vector<34x32xf32>
    %273 = vector.extract_strided_slice %250 {offsets = [0, 8], sizes = [34, 8], strides = [1, 1]} : vector<34x96xf32> to vector<34x8xf32>
    %cst_138 = arith.constant 0.353553385 : f32
    %274 = vector.broadcast %cst_138 : f32 to vector<34x8xf32>
    %275 = arith.mulf %273, %274 : vector<34x8xf32>
    %276 = vector.extract_strided_slice %250 {offsets = [0, 40], sizes = [34, 8], strides = [1, 1]} : vector<34x96xf32> to vector<34x8xf32>
    %277 = vector.extract_strided_slice %250 {offsets = [0, 72], sizes = [34, 8], strides = [1, 1]} : vector<34x96xf32> to vector<34x8xf32>
    %cst_139 = arith.constant dense<0.000000e+00> : vector<34x34xf32>
    %278 = tpu.matmul %275, %276, %cst_139 {dimension_numbers = #tpu.dot_dimension_numbers<[1], [1], [0], [0], [0, 0, 1, 0], [], []>} : vector<34x8xf32>, vector<34x8xf32>, vector<34x34xf32> -> vector<34x34xf32>
    %279 = arith.addf %278, %0 : vector<34x34xf32>
    %cst_140 = arith.constant dense<0xFF800000> : vector<34xf32>
    %280 = vector.multi_reduction <maximumf>, %279, %cst_140 [1] : vector<34x34xf32> to vector<34xf32>
    %281 = vector.shape_cast %280 : vector<34xf32> to vector<34x1xf32>
    %282 = vector.broadcast %281 : vector<34x1xf32> to vector<34x34xf32>
    %283 = arith.subf %279, %282 : vector<34x34xf32>
    %284 = math.exp %283 : vector<34x34xf32>
    %cst_141 = arith.constant dense<0.000000e+00> : vector<34xf32>
    %285 = vector.multi_reduction <add>, %284, %cst_141 [1] : vector<34x34xf32> to vector<34xf32>
    %286 = vector.shape_cast %285 : vector<34xf32> to vector<34x1xf32>
    %287 = tpu.reciprocal %286 {approx = true} : vector<34x1xf32> -> vector<34x1xf32>
    %288 = vector.broadcast %287 : vector<34x1xf32> to vector<34x34xf32>
    %289 = arith.mulf %284, %288 : vector<34x34xf32>
    %cst_142 = arith.constant dense<0.000000e+00> : vector<34x8xf32>
    %290 = tpu.matmul %289, %277, %cst_142 {dimension_numbers = #tpu.dot_dimension_numbers<[1], [0], [0], [1], [0, 0, 1, 1], [], []>} : vector<34x34xf32>, vector<34x8xf32>, vector<34x8xf32> -> vector<34x8xf32>
    %291 = vector.extract_strided_slice %211 {offsets = [8, 0], sizes = [8, 32], strides = [1, 1]} : vector<32x32xf32> to vector<8x32xf32>
    %cst_143 = arith.constant dense<0.000000e+00> : vector<34x32xf32>
    %292 = tpu.matmul %290, %291, %cst_143 {dimension_numbers = #tpu.dot_dimension_numbers<[1], [0], [0], [1], [0, 0, 1, 1], [], []>} : vector<34x8xf32>, vector<8x32xf32>, vector<34x32xf32> -> vector<34x32xf32>
    %293 = arith.addf %272, %292 : vector<34x32xf32>
    %294 = vector.extract_strided_slice %250 {offsets = [0, 16], sizes = [34, 8], strides = [1, 1]} : vector<34x96xf32> to vector<34x8xf32>
    %cst_144 = arith.constant 0.353553385 : f32
    %295 = vector.broadcast %cst_144 : f32 to vector<34x8xf32>
    %296 = arith.mulf %294, %295 : vector<34x8xf32>
    %297 = vector.extract_strided_slice %250 {offsets = [0, 48], sizes = [34, 8], strides = [1, 1]} : vector<34x96xf32> to vector<34x8xf32>
    %298 = vector.extract_strided_slice %250 {offsets = [0, 80], sizes = [34, 8], strides = [1, 1]} : vector<34x96xf32> to vector<34x8xf32>
    %cst_145 = arith.constant dense<0.000000e+00> : vector<34x34xf32>
    %299 = tpu.matmul %296, %297, %cst_145 {dimension_numbers = #tpu.dot_dimension_numbers<[1], [1], [0], [0], [0, 0, 1, 0], [], []>} : vector<34x8xf32>, vector<34x8xf32>, vector<34x34xf32> -> vector<34x34xf32>
    %300 = arith.addf %299, %0 : vector<34x34xf32>
    %cst_146 = arith.constant dense<0xFF800000> : vector<34xf32>
    %301 = vector.multi_reduction <maximumf>, %300, %cst_146 [1] : vector<34x34xf32> to vector<34xf32>
    %302 = vector.shape_cast %301 : vector<34xf32> to vector<34x1xf32>
    %303 = vector.broadcast %302 : vector<34x1xf32> to vector<34x34xf32>
    %304 = arith.subf %300, %303 : vector<34x34xf32>
    %305 = math.exp %304 : vector<34x34xf32>
    %cst_147 = arith.constant dense<0.000000e+00> : vector<34xf32>
    %306 = vector.multi_reduction <add>, %305, %cst_147 [1] : vector<34x34xf32> to vector<34xf32>
    %307 = vector.shape_cast %306 : vector<34xf32> to vector<34x1xf32>
    %308 = tpu.reciprocal %307 {approx = true} : vector<34x1xf32> -> vector<34x1xf32>
    %309 = vector.broadcast %308 : vector<34x1xf32> to vector<34x34xf32>
    %310 = arith.mulf %305, %309 : vector<34x34xf32>
    %cst_148 = arith.constant dense<0.000000e+00> : vector<34x8xf32>
    %311 = tpu.matmul %310, %298, %cst_148 {dimension_numbers = #tpu.dot_dimension_numbers<[1], [0], [0], [1], [0, 0, 1, 1], [], []>} : vector<34x34xf32>, vector<34x8xf32>, vector<34x8xf32> -> vector<34x8xf32>
    %312 = vector.extract_strided_slice %211 {offsets = [16, 0], sizes = [8, 32], strides = [1, 1]} : vector<32x32xf32> to vector<8x32xf32>
    %cst_149 = arith.constant dense<0.000000e+00> : vector<34x32xf32>
    %313 = tpu.matmul %311, %312, %cst_149 {dimension_numbers = #tpu.dot_dimension_numbers<[1], [0], [0], [1], [0, 0, 1, 1], [], []>} : vector<34x8xf32>, vector<8x32xf32>, vector<34x32xf32> -> vector<34x32xf32>
    %314 = arith.addf %293, %313 : vector<34x32xf32>
    %315 = vector.extract_strided_slice %250 {offsets = [0, 24], sizes = [34, 8], strides = [1, 1]} : vector<34x96xf32> to vector<34x8xf32>
    %cst_150 = arith.constant 0.353553385 : f32
    %316 = vector.broadcast %cst_150 : f32 to vector<34x8xf32>
    %317 = arith.mulf %315, %316 : vector<34x8xf32>
    %318 = vector.extract_strided_slice %250 {offsets = [0, 56], sizes = [34, 8], strides = [1, 1]} : vector<34x96xf32> to vector<34x8xf32>
    %319 = vector.extract_strided_slice %250 {offsets = [0, 88], sizes = [34, 8], strides = [1, 1]} : vector<34x96xf32> to vector<34x8xf32>
    %cst_151 = arith.constant dense<0.000000e+00> : vector<34x34xf32>
    %320 = tpu.matmul %317, %318, %cst_151 {dimension_numbers = #tpu.dot_dimension_numbers<[1], [1], [0], [0], [0, 0, 1, 0], [], []>} : vector<34x8xf32>, vector<34x8xf32>, vector<34x34xf32> -> vector<34x34xf32>
    %321 = arith.addf %320, %0 : vector<34x34xf32>
    %cst_152 = arith.constant dense<0xFF800000> : vector<34xf32>
    %322 = vector.multi_reduction <maximumf>, %321, %cst_152 [1] : vector<34x34xf32> to vector<34xf32>
    %323 = vector.shape_cast %322 : vector<34xf32> to vector<34x1xf32>
    %324 = vector.broadcast %323 : vector<34x1xf32> to vector<34x34xf32>
    %325 = arith.subf %321, %324 : vector<34x34xf32>
    %326 = math.exp %325 : vector<34x34xf32>
    %cst_153 = arith.constant dense<0.000000e+00> : vector<34xf32>
    %327 = vector.multi_reduction <add>, %326, %cst_153 [1] : vector<34x34xf32> to vector<34xf32>
    %328 = vector.shape_cast %327 : vector<34xf32> to vector<34x1xf32>
    %329 = tpu.reciprocal %328 {approx = true} : vector<34x1xf32> -> vector<34x1xf32>
    %330 = vector.broadcast %329 : vector<34x1xf32> to vector<34x34xf32>
    %331 = arith.mulf %326, %330 : vector<34x34xf32>
    %cst_154 = arith.constant dense<0.000000e+00> : vector<34x8xf32>
    %332 = tpu.matmul %331, %319, %cst_154 {dimension_numbers = #tpu.dot_dimension_numbers<[1], [0], [0], [1], [0, 0, 1, 1], [], []>} : vector<34x34xf32>, vector<34x8xf32>, vector<34x8xf32> -> vector<34x8xf32>
    %333 = vector.extract_strided_slice %211 {offsets = [24, 0], sizes = [8, 32], strides = [1, 1]} : vector<32x32xf32> to vector<8x32xf32>
    %cst_155 = arith.constant dense<0.000000e+00> : vector<34x32xf32>
    %334 = tpu.matmul %332, %333, %cst_155 {dimension_numbers = #tpu.dot_dimension_numbers<[1], [0], [0], [1], [0, 0, 1, 1], [], []>} : vector<34x8xf32>, vector<8x32xf32>, vector<34x32xf32> -> vector<34x32xf32>
    %335 = arith.addf %314, %334 : vector<34x32xf32>
    %336 = arith.addf %201, %335 : vector<34x32xf32>
    %cst_156 = arith.constant dense<0.000000e+00> : vector<34xf32>
    %337 = vector.multi_reduction <add>, %336, %cst_156 [1] : vector<34x32xf32> to vector<34xf32>
    %338 = vector.shape_cast %337 : vector<34xf32> to vector<34x1xf32>
    %cst_157 = arith.constant 3.200000e+01 : f32
    %339 = vector.broadcast %cst_157 : f32 to vector<34x1xf32>
    %340 = arith.divf %338, %339 : vector<34x1xf32>
    %341 = vector.broadcast %340 : vector<34x1xf32> to vector<34x32xf32>
    %342 = arith.subf %336, %341 : vector<34x32xf32>
    %343 = arith.mulf %342, %342 : vector<34x32xf32>
    %cst_158 = arith.constant dense<0.000000e+00> : vector<34xf32>
    %344 = vector.multi_reduction <add>, %343, %cst_158 [1] : vector<34x32xf32> to vector<34xf32>
    %345 = vector.shape_cast %344 : vector<34xf32> to vector<34x1xf32>
    %cst_159 = arith.constant 3.200000e+01 : f32
    %346 = vector.broadcast %cst_159 : f32 to vector<34x1xf32>
    %347 = arith.divf %345, %346 : vector<34x1xf32>
    %348 = vector.broadcast %340 : vector<34x1xf32> to vector<34x32xf32>
    %349 = arith.subf %336, %348 : vector<34x32xf32>
    %cst_160 = arith.constant 9.99999974E-6 : f32
    %350 = vector.broadcast %cst_160 : f32 to vector<34x1xf32>
    %351 = arith.addf %347, %350 : vector<34x1xf32>
    %352 = math.rsqrt %351 : vector<34x1xf32>
    %353 = vector.broadcast %352 : vector<34x1xf32> to vector<34x32xf32>
    %354 = arith.mulf %349, %353 : vector<34x32xf32>
    %355 = vector.broadcast %215 : vector<1x32xf32> to vector<34x32xf32>
    %356 = arith.mulf %354, %355 : vector<34x32xf32>
    %357 = vector.broadcast %217 : vector<1x32xf32> to vector<34x32xf32>
    %358 = arith.addf %356, %357 : vector<34x32xf32>
    %cst_161 = arith.constant dense<0.000000e+00> : vector<34x128xf32>
    %359 = tpu.matmul %358, %219, %cst_161 {dimension_numbers = #tpu.dot_dimension_numbers<[1], [0], [0], [1], [0, 0, 1, 1], [], []>} : vector<34x32xf32>, vector<32x128xf32>, vector<34x128xf32> -> vector<34x128xf32>
    %360 = vector.broadcast %221 : vector<1x128xf32> to vector<34x128xf32>
    %361 = arith.addf %359, %360 : vector<34x128xf32>
    %cst_162 = arith.constant 1.702000e+00 : f32
    %362 = vector.broadcast %cst_162 : f32 to vector<34x128xf32>
    %363 = arith.mulf %362, %361 : vector<34x128xf32>
    %364 = arith.negf %363 : vector<34x128xf32>
    %365 = math.exp %364 : vector<34x128xf32>
    %cst_163 = arith.constant 1.000000e+00 : f32
    %366 = vector.broadcast %cst_163 : f32 to vector<34x128xf32>
    %367 = arith.addf %366, %365 : vector<34x128xf32>
    %368 = arith.divf %366, %367 : vector<34x128xf32>
    %369 = arith.mulf %361, %368 : vector<34x128xf32>
    %cst_164 = arith.constant dense<0.000000e+00> : vector<34x32xf32>
    %370 = tpu.matmul %369, %223, %cst_164 {dimension_numbers = #tpu.dot_dimension_numbers<[1], [0], [0], [1], [0, 0, 1, 1], [], []>} : vector<34x128xf32>, vector<128x32xf32>, vector<34x32xf32> -> vector<34x32xf32>
    %371 = arith.addf %336, %370 : vector<34x32xf32>
    %372 = vector.broadcast %225 : vector<1x32xf32> to vector<34x32xf32>
    %373 = arith.addf %371, %372 : vector<34x32xf32>
    %c0_165 = arith.constant 0 : index
    %c0_166 = arith.constant 0 : index
    %374 = vector.load %arg18[%c0_165, %c0_166] : memref<1x32xf32, #tpu.memory_space<vmem>>, vector<1x32xf32>
    %c0_167 = arith.constant 0 : index
    %c0_168 = arith.constant 0 : index
    %375 = vector.load %arg19[%c0_167, %c0_168] : memref<1x32xf32, #tpu.memory_space<vmem>>, vector<1x32xf32>
    %c0_169 = arith.constant 0 : index
    %c0_170 = arith.constant 0 : index
    %376 = vector.load %arg20[%c0_169, %c0_170] : memref<32x16xf32, #tpu.memory_space<vmem>>, vector<32x16xf32>
    %377 = vector.extract_strided_slice %373 {offsets = [0, 0], sizes = [1, 32], strides = [1, 1]} : vector<34x32xf32> to vector<1x32xf32>
    %cst_171 = arith.constant dense<0.000000e+00> : vector<1xf32>
    %378 = vector.multi_reduction <add>, %377, %cst_171 [1] : vector<1x32xf32> to vector<1xf32>
    %379 = vector.shape_cast %378 : vector<1xf32> to vector<1x1xf32>
    %cst_172 = arith.constant 3.200000e+01 : f32
    %380 = vector.broadcast %cst_172 : f32 to vector<1x1xf32>
    %381 = arith.divf %379, %380 : vector<1x1xf32>
    %382 = vector.broadcast %381 : vector<1x1xf32> to vector<1x32xf32>
    %383 = arith.subf %377, %382 : vector<1x32xf32>
    %384 = arith.mulf %383, %383 : vector<1x32xf32>
    %cst_173 = arith.constant dense<0.000000e+00> : vector<1xf32>
    %385 = vector.multi_reduction <add>, %384, %cst_173 [1] : vector<1x32xf32> to vector<1xf32>
    %386 = vector.shape_cast %385 : vector<1xf32> to vector<1x1xf32>
    %cst_174 = arith.constant 3.200000e+01 : f32
    %387 = vector.broadcast %cst_174 : f32 to vector<1x1xf32>
    %388 = arith.divf %386, %387 : vector<1x1xf32>
    %389 = vector.broadcast %381 : vector<1x1xf32> to vector<1x32xf32>
    %390 = arith.subf %377, %389 : vector<1x32xf32>
    %cst_175 = arith.constant 9.99999974E-6 : f32
    %391 = vector.broadcast %cst_175 : f32 to vector<1x1xf32>
    %392 = arith.addf %388, %391 : vector<1x1xf32>
    %393 = math.rsqrt %392 : vector<1x1xf32>
    %394 = vector.broadcast %393 : vector<1x1xf32> to vector<1x32xf32>
    %395 = arith.mulf %390, %394 : vector<1x32xf32>
    %396 = arith.mulf %395, %374 : vector<1x32xf32>
    %397 = arith.addf %396, %375 : vector<1x32xf32>
    %cst_176 = arith.constant dense<0.000000e+00> : vector<1x16xf32>
    %398 = tpu.matmul %397, %376, %cst_176 {dimension_numbers = #tpu.dot_dimension_numbers<[1], [0], [0], [1], [0, 0, 1, 1], [], []>} : vector<1x32xf32>, vector<32x16xf32>, vector<1x16xf32> -> vector<1x16xf32>
    %c0_177 = arith.constant 0 : index
    %c0_178 = arith.constant 0 : index
    %399 = vector.load %arg21[%c0_177, %c0_178] : memref<2x16xf32, #tpu.memory_space<vmem>>, vector<1x16xf32>
    tpu.vector_store %arg21[%c0_177, %c0_178], %398 {strides = array<i32>} : memref<2x16xf32, #tpu.memory_space<vmem>>, vector<1x16xf32>,
    %400 = vector.extract_strided_slice %373 {offsets = [17, 0], sizes = [1, 32], strides = [1, 1]} : vector<34x32xf32> to vector<1x32xf32>
    %cst_179 = arith.constant dense<0.000000e+00> : vector<1xf32>
    %401 = vector.multi_reduction <add>, %400, %cst_179 [1] : vector<1x32xf32> to vector<1xf32>
    %402 = vector.shape_cast %401 : vector<1xf32> to vector<1x1xf32>
    %cst_180 = arith.constant 3.200000e+01 : f32
    %403 = vector.broadcast %cst_180 : f32 to vector<1x1xf32>
    %404 = arith.divf %402, %403 : vector<1x1xf32>
    %405 = vector.broadcast %404 : vector<1x1xf32> to vector<1x32xf32>
    %406 = arith.subf %400, %405 : vector<1x32xf32>
    %407 = arith.mulf %406, %406 : vector<1x32xf32>
    %cst_181 = arith.constant dense<0.000000e+00> : vector<1xf32>
    %408 = vector.multi_reduction <add>, %407, %cst_181 [1] : vector<1x32xf32> to vector<1xf32>
    %409 = vector.shape_cast %408 : vector<1xf32> to vector<1x1xf32>
    %cst_182 = arith.constant 3.200000e+01 : f32
    %410 = vector.broadcast %cst_182 : f32 to vector<1x1xf32>
    %411 = arith.divf %409, %410 : vector<1x1xf32>
    %412 = vector.broadcast %404 : vector<1x1xf32> to vector<1x32xf32>
    %413 = arith.subf %400, %412 : vector<1x32xf32>
    %cst_183 = arith.constant 9.99999974E-6 : f32
    %414 = vector.broadcast %cst_183 : f32 to vector<1x1xf32>
    %415 = arith.addf %411, %414 : vector<1x1xf32>
    %416 = math.rsqrt %415 : vector<1x1xf32>
    %417 = vector.broadcast %416 : vector<1x1xf32> to vector<1x32xf32>
    %418 = arith.mulf %413, %417 : vector<1x32xf32>
    %419 = arith.mulf %418, %374 : vector<1x32xf32>
    %420 = arith.addf %419, %375 : vector<1x32xf32>
    %cst_184 = arith.constant dense<0.000000e+00> : vector<1x16xf32>
    %421 = tpu.matmul %420, %376, %cst_184 {dimension_numbers = #tpu.dot_dimension_numbers<[1], [0], [0], [1], [0, 0, 1, 1], [], []>} : vector<1x32xf32>, vector<32x16xf32>, vector<1x16xf32> -> vector<1x16xf32>
    %c1_185 = arith.constant 1 : index
    %c0_186 = arith.constant 0 : index
    %422 = vector.load %arg21[%c1_185, %c0_186] : memref<2x16xf32, #tpu.memory_space<vmem>>, vector<1x16xf32>
    tpu.vector_store %arg21[%c1_185, %c0_186], %421 {strides = array<i32>} : memref<2x16xf32, #tpu.memory_space<vmem>>, vector<1x16xf32>,
    return
  }
}

</mosaic_0001>

<llo_original>
// kernel: tile.9
$region0: #{tile.9}
  %s0 = inlined_call_operand.vmem [shape: f32[2,17,32], index: 0, kind: input, shape index: {}]
  %s1 = inlined_call_operand.vmem [shape: f32[34,32], index: 1, kind: output, shape index: {}]
  %v2 = vld [vmem:[%s0] sm:$0xff]
  %vm3 = vcmask 261120
  %4 = vst.msk [vmem:[%s1] sm:$0xff] %vm3, %v2
  %s5 = scalar_lea.vmem %s0, 8
  %v6 = vld [vmem:[%s5] sm:$0xff]
  %vm7 = vcmask 261120
  %s8 = scalar_lea.vmem %s1, 8
  %9 = vst.msk [vmem:[%s8] sm:$0xff] %vm7, %v6
  %s10 = scalar_lea.vmem %s0, 16
  %s11 = smov 3
  %v12 = vld [vmem:[%s10] ss:$8 sm:%s11]
  %vm13 = vcmask 261120
  %s14 = scalar_lea.vmem %s1, 16
  %15 = vst.msk [vmem:[%s14] sm:$0x3] %vm13, %v12
  %s16 = scalar_lea.vmem %s0, 25
  %v17 = vld [vmem:[%s16] sm:$0xff]
  %vm18 = vcmask 261120
  %s19 = scalar_lea.vmem %s1, 18
  %20 = vst.msk [vmem:[%s19] sm:$0xff] %vm18, %v17
  %s21 = scalar_lea.vmem %s0, 33
  %v22 = vld [vmem:[%s21] sm:$0xff]
  %vm23 = vcmask 261120
  %s24 = scalar_lea.vmem %s1, 26
  %25 = vst.msk [vmem:[%s24] sm:$0xff] %vm23, %v22

// kernel: encode_image.1
$region0: #{encode_image.1}
  #allocation0 [shape = 'u32[]', space=smem, size = 0x4, offset = 0x4, fixed_abs, tag = 'smem constant byte address 0x4 - core index']
  #allocation1 [shape = 'u32[72,128]{1,0:T(1,128)}', space=vmem, size = 0x9000, scoped, tag = 'internal scratch']
  %s0 = inlined_call_operand.vmem [shape: f32[34,48], index: 0, kind: input, shape index: {}]
  %s1 = inlined_call_operand.vmem [shape: f32[48,32], index: 1, kind: input, shape index: {}]
  %s2 = inlined_call_operand.vmem [shape: f32[34,32], index: 2, kind: input, shape index: {}]
  %s3 = inlined_call_operand.vmem [shape: f32[34,34], index: 3, kind: input, shape index: {}]
  %s4 = inlined_call_operand.vmem [shape: f32[1,32], index: 4, kind: input, shape index: {}]
  %s5 = inlined_call_operand.vmem [shape: f32[1,32], index: 5, kind: input, shape index: {}]
  %s6 = inlined_call_operand.vmem [shape: f32[2,1,32], index: 6, kind: input, shape index: {}]
  %s7 = inlined_call_operand.vmem [shape: f32[2,1,32], index: 7, kind: input, shape index: {}]
  %s8 = inlined_call_operand.vmem [shape: f32[2,32,96], index: 8, kind: input, shape index: {}]
  %s9 = inlined_call_operand.vmem [shape: f32[2,1,96], index: 9, kind: input, shape index: {}]
  %s10 = inlined_call_operand.vmem [shape: f32[2,32,32], index: 10, kind: input, shape index: {}]
  %s11 = inlined_call_operand.vmem [shape: f32[2,1,32], index: 11, kind: input, shape index: {}]
  %s12 = inlined_call_operand.vmem [shape: f32[2,1,32], index: 12, kind: input, shape index: {}]
  %s13 = inlined_call_operand.vmem [shape: f32[2,1,32], index: 13, kind: input, shape index: {}]
  %s14 = inlined_call_operand.vmem [shape: f32[2,32,128], index: 14, kind: input, shape index: {}]
  %s15 = inlined_call_operand.vmem [shape: f32[2,1,128], index: 15, kind: input, shape index: {}]
  %s16 = inlined_call_operand.vmem [shape: f32[2,128,32], index: 16, kind: input, shape index: {}]
  %s17 = inlined_call_operand.vmem [shape: f32[2,1,32], index: 17, kind: input, shape index: {}]
  %s18 = inlined_call_operand.vmem [shape: f32[1,32], index: 18, kind: input, shape index: {}]
  %s19 = inlined_call_operand.vmem [shape: f32[1,32], index: 19, kind: input, shape index: {}]
  %s20 = inlined_call_operand.vmem [shape: f32[32,16], index: 20, kind: input, shape index: {}]
  %s21 = inlined_call_operand.hbm [shape: f32[2,16], index: 21, kind: output, shape index: {}]
  %s22 = sld [smem:[#allocation0]]
  $region94: #{encode_image.1} parent=0
    _
  %s24 = ssub.s32 1, %s22
  %s25 = scalar_select 0, %s24, %s22
  $region1: #{encode_image.1} parent=0
    #allocation2 [shape = 'u8[1024]{0}', space=vmem, size = 0x400, scoped, tag = 'output window, operand 0, single buffered']
    #allocation3 [shape = 's32[1]{0}', space=sflag, size = 0x4, scoped, tag = 'scoped memory for encode_image.1']
    %26 = vsyncpa [#allocation3], 0
    // Predicated region
    $region2: #{encode_image.1} parent=1 // pred_check
      _
    $region3: #{encode_image.1} parent=1 // pred_check_branch
      %28 = sbr.rel (0) target = $region5
    $region4: #{encode_image.1} parent=1 // pred_region
      _
    $region5: #{encode_image.1} parent=1 // pred_fallthru
      _
    // Predicated region
    $region6: #{encode_image.1} parent=1 // pred_check
      _
    $region7: #{encode_image.1} parent=1 // pred_check_branch
      %30 = sbr.rel (0) target = $region9
    $region8: #{encode_image.1} parent=1 // pred_region
      _
    $region9: #{encode_image.1} parent=1 // pred_fallthru
      _
    // Predicated region
    $region10: #{encode_image.1} parent=1 // pred_check
      _
    $region11: #{encode_image.1} parent=1 // pred_check_branch
      %32 = sbr.rel (0) target = $region13
    $region12: #{encode_image.1} parent=1 // pred_region
      _
    $region13: #{encode_image.1} parent=1 // pred_fallthru
      _
    // Predicated region
    $region14: #{encode_image.1} parent=1 // pred_check
      _
    $region15: #{encode_image.1} parent=1 // pred_check_branch
      %34 = sbr.rel (0) target = $region17
    $region16: #{encode_image.1} parent=1 // pred_region
      _
    $region17: #{encode_image.1} parent=1 // pred_fallthru
      _
    // Predicated region
    $region18: #{encode_image.1} parent=1 // pred_check
      _
    $region19: #{encode_image.1} parent=1 // pred_check_branch
      %36 = sbr.rel (0) target = $region21
    $region20: #{encode_image.1} parent=1 // pred_region
      _
    $region21: #{encode_image.1} parent=1 // pred_fallthru
      _
    // Predicated region
    $region22: #{encode_image.1} parent=1 // pred_check
      _
    $region23: #{encode_image.1} parent=1 // pred_check_branch
      %38 = sbr.rel (0) target = $region25
    $region24: #{encode_image.1} parent=1 // pred_region
      _
    $region25: #{encode_image.1} parent=1 // pred_fallthru
      _
    // Predicated region
    $region26: #{encode_image.1} parent=1 // pred_check
      _
    $region27: #{encode_image.1} parent=1 // pred_check_branch
      %40 = sbr.rel (0) target = $region29
    $region28: #{encode_image.1} parent=1 // pred_region
      _
    $region29: #{encode_image.1} parent=1 // pred_fallthru
      _
    // Predicated region
    $region30: #{encode_image.1} parent=1 // pred_check
      _
    $region31: #{encode_image.1} parent=1 // pred_check_branch
      %42 = sbr.rel (0) target = $region33
    $region32: #{encode_image.1} parent=1 // pred_region
      _
    $region33: #{encode_image.1} parent=1 // pred_fallthru
      _
    // Predicated region
    $region34: #{encode_image.1} parent=1 // pred_check
      _
    $region35: #{encode_image.1} parent=1 // pred_check_branch
      %44 = sbr.rel (0) target = $region37
    $region36: #{encode_image.1} parent=1 // pred_region
      _
    $region37: #{encode_image.1} parent=1 // pred_fallthru
      _
    // Predicated region
    $region38: #{encode_image.1} parent=1 // pred_check
      _
    $region39: #{encode_image.1} parent=1 // pred_check_branch
      %46 = sbr.rel (0) target = $region41
    $region40: #{encode_image.1} parent=1 // pred_region
      _
    $region41: #{encode_image.1} parent=1 // pred_fallthru
      _
    // Predicated region
    $region42: #{encode_image.1} parent=1 // pred_check
      _
    $region43: #{encode_image.1} parent=1 // pred_check_branch
      %48 = sbr.rel (0) target = $region45
    $region44: #{encode_image.1} parent=1 // pred_region
      _
    $region45: #{encode_image.1} parent=1 // pred_fallthru
      _
    // Predicated region
    $region46: #{encode_image.1} parent=1 // pred_check
      _
    $region47: #{encode_image.1} parent=1 // pred_check_branch
      %50 = sbr.rel (0) target = $region49
    $region48: #{encode_image.1} parent=1 // pred_region
      _
    $region49: #{encode_image.1} parent=1 // pred_fallthru
      _
    // Predicated region
    $region50: #{encode_image.1} parent=1 // pred_check
      _
    $region51: #{encode_image.1} parent=1 // pred_check_branch
      %52 = sbr.rel (0) target = $region53
    $region52: #{encode_image.1} parent=1 // pred_region
      _
    $region53: #{encode_image.1} parent=1 // pred_fallthru
      _
    // Predicated region
    $region54: #{encode_image.1} parent=1 // pred_check
      _
    $region55: #{encode_image.1} parent=1 // pred_check_branch
      %54 = sbr.rel (0) target = $region57
    $region56: #{encode_image.1} parent=1 // pred_region
      _
    $region57: #{encode_image.1} parent=1 // pred_fallthru
      _
    // Predicated region
    $region58: #{encode_image.1} parent=1 // pred_check
      _
    $region59: #{encode_image.1} parent=1 // pred_check_branch
      %56 = sbr.rel (0) target = $region61
    $region60: #{encode_image.1} parent=1 // pred_region
      _
    $region61: #{encode_image.1} parent=1 // pred_fallthru
      _
    // Predicated region
    $region62: #{encode_image.1} parent=1 // pred_check
      _
    $region63: #{encode_image.1} parent=1 // pred_check_branch
      %58 = sbr.rel (0) target = $region65
    $region64: #{encode_image.1} parent=1 // pred_region
      _
    $region65: #{encode_image.1} parent=1 // pred_fallthru
      _
    // Predicated region
    $region66: #{encode_image.1} parent=1 // pred_check
      _
    $region67: #{encode_image.1} parent=1 // pred_check_branch
      %60 = sbr.rel (0) target = $region69
    $region68: #{encode_image.1} parent=1 // pred_region
      _
    $region69: #{encode_image.1} parent=1 // pred_fallthru
      _
    // Predicated region
    $region70: #{encode_image.1} parent=1 // pred_check
      _
    $region71: #{encode_image.1} parent=1 // pred_check_branch
      %62 = sbr.rel (0) target = $region73
    $region72: #{encode_image.1} parent=1 // pred_region
      _
    $region73: #{encode_image.1} parent=1 // pred_fallthru
      _
    // Predicated region
    $region74: #{encode_image.1} parent=1 // pred_check
      _
    $region75: #{encode_image.1} parent=1 // pred_check_branch
      %64 = sbr.rel (0) target = $region77
    $region76: #{encode_image.1} parent=1 // pred_region
      _
    $region77: #{encode_image.1} parent=1 // pred_fallthru
      _
    // Predicated region
    $region78: #{encode_image.1} parent=1 // pred_check
      _
    $region79: #{encode_image.1} parent=1 // pred_check_branch
      %66 = sbr.rel (0) target = $region81
    $region80: #{encode_image.1} parent=1 // pred_region
      _
    $region81: #{encode_image.1} parent=1 // pred_fallthru
      _
    // Predicated region
    $region82: #{encode_image.1} parent=1 // pred_check
      _
    $region83: #{encode_image.1} parent=1 // pred_check_branch
      %68 = sbr.rel (0) target = $region85
    $region84: #{encode_image.1} parent=1 // pred_region
      _
    $region85: #{encode_image.1} parent=1 // pred_fallthru
      _
    %v69 = vld [vmem:[%s3] sm:$0xff]
    %v70 = vld [vmem:[%s3 + $0x8] sm:$0xff]
    %v71 = vld [vmem:[%s3 + $0x10] sm:$0xff]
    %v72 = vld [vmem:[%s3 + $0x18] sm:$0xff]
    %v73 = vld [vmem:[%s3 + $0x20] sm:$0x3]
    %v74 = vld [vmem:[%s0] sm:$0xff]
    %v75 = vld [vmem:[%s0 + $0x8] sm:$0xff]
    %v76 = vld [vmem:[%s0 + $0x10] sm:$0xff]
    %v77 = vld [vmem:[%s0 + $0x18] sm:$0xff]
    %v78 = vld [vmem:[%s0 + $0x20] sm:$0x3]
    %v79 = vld [vmem:[%s1] sm:$0xff]
    %v80 = vld [vmem:[%s1 + $0x8] sm:$0xff]
    %v81 = vld [vmem:[%s1 + $0x10] sm:$0xff]
    %v82 = vld [vmem:[%s1 + $0x18] sm:$0xff]
    %v83 = vld [vmem:[%s1 + $0x20] sm:$0xff]
    %v84 = vld [vmem:[%s1 + $0x28] sm:$0xff]
    %v85 = vld [vmem:[%s2] sm:$0xff]
    %v86 = vld [vmem:[%s2 + $0x8] sm:$0xff]
    %v87 = vld [vmem:[%s2 + $0x10] sm:$0xff]
    %v88 = vld [vmem:[%s2 + $0x18] sm:$0xff]
    %v89 = vld [vmem:[%s2 + $0x20] sm:$0x3]
    %vm90 = vcmask 392192
    %v92 = vsel %vm90, %v74, 0
    %v95 = vsel %vm90, %v75, 0
    %v98 = vsel %vm90, %v76, 0
    %v101 = vsel %vm90, %v77, 0
    %v104 = vsel %vm90, %v78, 0
    %106 = vmatpush.msra.mxu0 0.0
    %107 = vmatpush.msra.mxu0 0.0
    %108 = vmatpush.msra.mxu0 0.0
    %109 = vmatpush.msra.mxu0 0.0
    %110 = vmatpush.msra.mxu0 0.0
    %111 = vmatpush.msra.mxu0 0.0
    %112 = vmatpush.msra.mxu0 0.0
    %113 = vmatpush.msra.mxu0 0.0
    %114 = vmatpush.msra.mxu0 0.0
    %115 = vmatpush.msra.mxu0 0.0
    %116 = vmatpush.msra.mxu0 %v84
    %117 = vmatpush.msra.mxu0 %v83
    %118 = vmatpush.msra.mxu0 %v82
    %119 = vmatpush.msra.mxu0 %v81
    %120 = vmatpush.msra.mxu0 %v80
    %121 = vmatpush.msra.mxu0 %v79
    %122 = vmatmul.f32.gmra.mxu0 %v92
    %v123 = vpop.f32.mrf.mxu0
    %v124 = vadd.f32 %v85, %v123
    %125 = vmatmul.f32.gmra.mxu0 %v95
    %v126 = vpop.f32.mrf.mxu0
    %v127 = vadd.f32 %v86, %v126
    %128 = vmatmul.f32.gmra.mxu0 %v98
    %v129 = vpop.f32.mrf.mxu0
    %v130 = vadd.f32 %v87, %v129
    %131 = vmatmul.f32.gmra.mxu0 %v101
    %v132 = vpop.f32.mrf.mxu0
    %v133 = vadd.f32 %v88, %v132
    %134 = vmatmul.f32.gmra.mxu0 %v104
    %v135 = vpop.f32.mrf.mxu0
    %v136 = vadd.f32 %v89, %v135
    %137 = vdwg.mxu0
    %v138 = vld [vmem:[%s4] sm:$0x1]
    %v139 = vld [vmem:[%s5] sm:$0x1]
    %vm140 = vcmask 261120
    %v141 = vsel %vm140, %v124, 0.0
    %142 = vadd.xlane.f32.xlu0 %v141
    %v143 = vpop.xlane.xlu0 %142
    %v144 = vsel %vm140, %v127, 0.0
    %145 = vadd.xlane.f32.xlu0 %v144
    %v146 = vpop.xlane.xlu0 %145
    %v147 = vsel %vm140, %v130, 0.0
    %148 = vadd.xlane.f32.xlu0 %v147
    %v149 = vpop.xlane.xlu0 %148
    %v150 = vsel %vm140, %v133, 0.0
    %151 = vadd.xlane.f32.xlu0 %v150
    %v152 = vpop.xlane.xlu0 %151
    %vm153 = vcmask 254976
    %v154 = vsel %vm153, %v136, 0.0
    %155 = vadd.xlane.f32.xlu0 %v154
    %v156 = vpop.xlane.xlu0 %155
    %v157 = vrcp.pop 32.0
    %v158 = vmul.f32 32.0, %v157
    %v159 = vsub.f32 1.0, %v158
    %v160 = vmul.f32 %v157, %v159
    %v161 = vadd.f32 %v157, %v160
    %vm162 = vweird.f32 %v157
    %v163 = vsel %vm162, %v157, %v161
    %v164 = vmul.f32 %v143, %v163
    %v165 = vmul.f32 %v146, %v163
    %v166 = vmul.f32 %v149, %v163
    %v167 = vmul.f32 %v152, %v163
    %v168 = vmul.f32 %v156, %v163
    %v169 = vsub.f32 %v124, %v164
    %v170 = vsub.f32 %v127, %v165
    %v171 = vsub.f32 %v130, %v166
    %v172 = vsub.f32 %v133, %v167
    %v173 = vsub.f32 %v136, %v168
    %v174 = vmul.f32 %v169, %v169
    %v175 = vmul.f32 %v170, %v170
    %v176 = vmul.f32 %v171, %v171
    %v177 = vmul.f32 %v172, %v172
    %v178 = vmul.f32 %v173, %v173
    %v179 = vsel %vm140, %v174, 0.0
    %180 = vadd.xlane.f32.xlu0 %v179
    %v181 = vpop.xlane.xlu0 %180
    %v182 = vsel %vm140, %v175, 0.0
    %183 = vadd.xlane.f32.xlu0 %v182
    %v184 = vpop.xlane.xlu0 %183
    %v185 = vsel %vm140, %v176, 0.0
    %186 = vadd.xlane.f32.xlu0 %v185
    %v187 = vpop.xlane.xlu0 %186
    %v188 = vsel %vm140, %v177, 0.0
    %189 = vadd.xlane.f32.xlu0 %v188
    %v190 = vpop.xlane.xlu0 %189
    %v191 = vsel %vm153, %v178, 0.0
    %192 = vadd.xlane.f32.xlu0 %v191
    %v193 = vpop.xlane.xlu0 %192
    %v194 = vmul.f32 %v181, %v163
    %v195 = vmul.f32 %v184, %v163
    %v196 = vmul.f32 %v187, %v163
    %v197 = vmul.f32 %v190, %v163
    %v198 = vmul.f32 %v193, %v163
    %v199 = vadd.f32 %v194, 1e-05
    %v200 = vadd.f32 %v195, 1e-05
    %v201 = vadd.f32 %v196, 1e-05
    %v202 = vadd.f32 %v197, 1e-05
    %v203 = vadd.f32 %v198, 1e-05
    %v204 = vrsqrt.pop %v199
    %v205 = vmul.f32 %v204, %v199
    %v206 = vmul.f32 %v205, %v204
    %v207 = vmul.f32 0.5, %v206
    %v208 = vsub.f32 1.5, %v207
    %v209 = vmul.f32 %v204, %v208
    %vm210 = vweird.f32 %v199
    %vm211 = vweird.f32 %v204
    %vm212 = vmor %vm210, %vm211
    %v213 = vsel %vm212, %v204, %v209
    %v214 = vrsqrt.pop %v200
    %v215 = vmul.f32 %v214, %v200
    %v216 = vmul.f32 %v215, %v214
    %v217 = vmul.f32 0.5, %v216
    %v218 = vsub.f32 1.5, %v217
    %v219 = vmul.f32 %v214, %v218
    %vm220 = vweird.f32 %v200
    %vm221 = vweird.f32 %v214
    %vm222 = vmor %vm220, %vm221
    %v223 = vsel %vm222, %v214, %v219
    %v224 = vrsqrt.pop %v201
    %v225 = vmul.f32 %v224, %v201
    %v226 = vmul.f32 %v225, %v224
    %v227 = vmul.f32 0.5, %v226
    %v228 = vsub.f32 1.5, %v227
    %v229 = vmul.f32 %v224, %v228
    %vm230 = vweird.f32 %v201
    %vm231 = vweird.f32 %v224
    %vm232 = vmor %vm230, %vm231
    %v233 = vsel %vm232, %v224, %v229
    %v234 = vrsqrt.pop %v202
    %v235 = vmul.f32 %v234, %v202
    %v236 = vmul.f32 %v235, %v234
    %v237 = vmul.f32 0.5, %v236
    %v238 = vsub.f32 1.5, %v237
    %v239 = vmul.f32 %v234, %v238
    %vm240 = vweird.f32 %v202
    %vm241 = vweird.f32 %v234
    %vm242 = vmor %vm240, %vm241
    %v243 = vsel %vm242, %v234, %v239
    %v244 = vrsqrt.pop %v203
    %v245 = vmul.f32 %v244, %v203
    %v246 = vmul.f32 %v245, %v244
    %v247 = vmul.f32 0.5, %v246
    %v248 = vsub.f32 1.5, %v247
    %v249 = vmul.f32 %v244, %v248
    %vm250 = vweird.f32 %v203
    %vm251 = vweird.f32 %v244
    %vm252 = vmor %vm250, %vm251
    %v253 = vsel %vm252, %v244, %v249
    %v254 = vmul.f32 %v169, %v213
    %v255 = vmul.f32 %v170, %v223
    %v256 = vmul.f32 %v171, %v233
    %v257 = vmul.f32 %v172, %v243
    %v258 = vmul.f32 %v173, %v253
    %v260 = vperm.slane %v138, 0
    %v262 = vmul.f32 %v254, %v260
    %v263 = vmul.f32 %v255, %v260
    %v264 = vmul.f32 %v256, %v260
    %v265 = vmul.f32 %v257, %v260
    %v266 = vmul.f32 %v258, %v260
    %v268 = vperm.slane %v139, 0
    %v270 = vadd.f32 %v262, %v268
    %v271 = vadd.f32 %v263, %v268
    %v272 = vadd.f32 %v264, %v268
    %v273 = vadd.f32 %v265, %v268
    %v274 = vadd.f32 %v266, %v268
    %v275 = vld [vmem:[%s6] sm:$0x1]
    %v276 = vld [vmem:[%s7] sm:$0x1]
    %v277 = vld [vmem:[%s8] sm:$0xff]
    %v278 = vld [vmem:[%s8 + $0x8] sm:$0xff]
    %v279 = vld [vmem:[%s8 + $0x10] sm:$0xff]
    %v280 = vld [vmem:[%s8 + $0x18] sm:$0xff]
    %v281 = vld [vmem:[%s9] sm:$0x1]
    %v282 = vld [vmem:[%s10] sm:$0xff]
    %v283 = vld [vmem:[%s10 + $0x8] sm:$0xff]
    %v284 = vld [vmem:[%s10 + $0x10] sm:$0xff]
    %v285 = vld [vmem:[%s10 + $0x18] sm:$0xff]
    %v286 = vld [vmem:[%s11] sm:$0x1]
    %v287 = vld [vmem:[%s12] sm:$0x1]
    %v288 = vld [vmem:[%s13] sm:$0x1]
    %v289 = vld [vmem:[%s14] sm:$0xff]
    %v290 = vld [vmem:[%s14 + $0x8] sm:$0xff]
    %v291 = vld [vmem:[%s14 + $0x10] sm:$0xff]
    %v292 = vld [vmem:[%s14 + $0x18] sm:$0xff]
    %v293 = vld [vmem:[%s15] sm:$0x1]
    %v294 = vld [vmem:[%s16] sm:$0xff]
    %v295 = vld [vmem:[%s16 + $0x8] sm:$0xff]
    %v296 = vld [vmem:[%s16 + $0x10] sm:$0xff]
    %v297 = vld [vmem:[%s16 + $0x18] sm:$0xff]
    %v298 = vld [vmem:[%s16 + $0x20] sm:$0xff]
    %v299 = vld [vmem:[%s16 + $0x28] sm:$0xff]
    %v300 = vld [vmem:[%s16 + $0x30] sm:$0xff]
    %v301 = vld [vmem:[%s16 + $0x38] sm:$0xff]
    %v302 = vld [vmem:[%s16 + $0x40] sm:$0xff]
    %v303 = vld [vmem:[%s16 + $0x48] sm:$0xff]
    %v304 = vld [vmem:[%s16 + $0x50] sm:$0xff]
    %v305 = vld [vmem:[%s16 + $0x58] sm:$0xff]
    %v306 = vld [vmem:[%s16 + $0x60] sm:$0xff]
    %v307 = vld [vmem:[%s16 + $0x68] sm:$0xff]
    %v308 = vld [vmem:[%s16 + $0x70] sm:$0xff]
    %v309 = vld [vmem:[%s16 + $0x78] sm:$0xff]
    %v310 = vld [vmem:[%s17] sm:$0x1]
    %v311 = vsel %vm140, %v270, 0.0
    %312 = vadd.xlane.f32.xlu0 %v311
    %v313 = vpop.xlane.xlu0 %312
    %v314 = vsel %vm140, %v271, 0.0
    %315 = vadd.xlane.f32.xlu0 %v314
    %v316 = vpop.xlane.xlu0 %315
    %v317 = vsel %vm140, %v272, 0.0
    %318 = vadd.xlane.f32.xlu0 %v317
    %v319 = vpop.xlane.xlu0 %318
    %v320 = vsel %vm140, %v273, 0.0
    %321 = vadd.xlane.f32.xlu0 %v320
    %v322 = vpop.xlane.xlu0 %321
    %v323 = vsel %vm153, %v274, 0.0
    %324 = vadd.xlane.f32.xlu0 %v323
    %v325 = vpop.xlane.xlu0 %324
    %v326 = vmul.f32 %v313, %v163
    %v327 = vmul.f32 %v316, %v163
    %v328 = vmul.f32 %v319, %v163
    %v329 = vmul.f32 %v322, %v163
    %v330 = vmul.f32 %v325, %v163
    %v331 = vsub.f32 %v270, %v326
    %v332 = vsub.f32 %v271, %v327
    %v333 = vsub.f32 %v272, %v328
    %v334 = vsub.f32 %v273, %v329
    %v335 = vsub.f32 %v274, %v330
    %v336 = vmul.f32 %v331, %v331
    %v337 = vmul.f32 %v332, %v332
    %v338 = vmul.f32 %v333, %v333
    %v339 = vmul.f32 %v334, %v334
    %v340 = vmul.f32 %v335, %v335
    %v341 = vsel %vm140, %v336, 0.0
    %342 = vadd.xlane.f32.xlu0 %v341
    %v343 = vpop.xlane.xlu0 %342
    %v344 = vsel %vm140, %v337, 0.0
    %345 = vadd.xlane.f32.xlu0 %v344
    %v346 = vpop.xlane.xlu0 %345
    %v347 = vsel %vm140, %v338, 0.0
    %348 = vadd.xlane.f32.xlu0 %v347
    %v349 = vpop.xlane.xlu0 %348
    %v350 = vsel %vm140, %v339, 0.0
    %351 = vadd.xlane.f32.xlu0 %v350
    %v352 = vpop.xlane.xlu0 %351
    %v353 = vsel %vm153, %v340, 0.0
    %354 = vadd.xlane.f32.xlu0 %v353
    %v355 = vpop.xlane.xlu0 %354
    %v356 = vmul.f32 %v343, %v163
    %v357 = vmul.f32 %v346, %v163
    %v358 = vmul.f32 %v349, %v163
    %v359 = vmul.f32 %v352, %v163
    %v360 = vmul.f32 %v355, %v163
    %v361 = vadd.f32 %v356, 1e-05
    %v362 = vadd.f32 %v357, 1e-05
    %v363 = vadd.f32 %v358, 1e-05
    %v364 = vadd.f32 %v359, 1e-05
    %v365 = vadd.f32 %v360, 1e-05
    %v366 = vrsqrt.pop %v361
    %v367 = vmul.f32 %v366, %v361
    %v368 = vmul.f32 %v367, %v366
    %v369 = vmul.f32 0.5, %v368
    %v370 = vsub.f32 1.5, %v369
    %v371 = vmul.f32 %v366, %v370
    %vm372 = vweird.f32 %v361
    %vm373 = vweird.f32 %v366
    %vm374 = vmor %vm372, %vm373
    %v375 = vsel %vm374, %v366, %v371
    %v376 = vrsqrt.pop %v362
    %v377 = vmul.f32 %v376, %v362
    %v378 = vmul.f32 %v377, %v376
    %v379 = vmul.f32 0.5, %v378
    %v380 = vsub.f32 1.5, %v379
    %v381 = vmul.f32 %v376, %v380
    %vm382 = vweird.f32 %v362
    %vm383 = vweird.f32 %v376
    %vm384 = vmor %vm382, %vm383
    %v385 = vsel %vm384, %v376, %v381
    %v386 = vrsqrt.pop %v363
    %v387 = vmul.f32 %v386, %v363
    %v388 = vmul.f32 %v387, %v386
    %v389 = vmul.f32 0.5, %v388
    %v390 = vsub.f32 1.5, %v389
    %v391 = vmul.f32 %v386, %v390
    %vm392 = vweird.f32 %v363
    %vm393 = vweird.f32 %v386
    %vm394 = vmor %vm392, %vm393
    %v395 = vsel %vm394, %v386, %v391
    %v396 = vrsqrt.pop %v364
    %v397 = vmul.f32 %v396, %v364
    %v398 = vmul.f32 %v397, %v396
    %v399 = vmul.f32 0.5, %v398
    %v400 = vsub.f32 1.5, %v399
    %v401 = vmul.f32 %v396, %v400
    %vm402 = vweird.f32 %v364
    %vm403 = vweird.f32 %v396
    %vm404 = vmor %vm402, %vm403
    %v405 = vsel %vm404, %v396, %v401
    %v406 = vrsqrt.pop %v365
    %v407 = vmul.f32 %v406, %v365
    %v408 = vmul.f32 %v407, %v406
    %v409 = vmul.f32 0.5, %v408
    %v410 = vsub.f32 1.5, %v409
    %v411 = vmul.f32 %v406, %v410
    %vm412 = vweird.f32 %v365
    %vm413 = vweird.f32 %v406
    %vm414 = vmor %vm412, %vm413
    %v415 = vsel %vm414, %v406, %v411
    %v416 = vmul.f32 %v331, %v375
    %v417 = vmul.f32 %v332, %v385
    %v418 = vmul.f32 %v333, %v395
    %v419 = vmul.f32 %v334, %v405
    %v420 = vmul.f32 %v335, %v415
    %v422 = vperm.slane %v275, 0
    %v424 = vmul.f32 %v416, %v422
    %v425 = vmul.f32 %v417, %v422
    %v426 = vmul.f32 %v418, %v422
    %v427 = vmul.f32 %v419, %v422
    %v428 = vmul.f32 %v420, %v422
    %v430 = vperm.slane %v276, 0
    %v432 = vadd.f32 %v424, %v430
    %v433 = vadd.f32 %v425, %v430
    %v434 = vadd.f32 %v426, %v430
    %v435 = vadd.f32 %v427, %v430
    %v436 = vadd.f32 %v428, %v430
    %v438 = vperm.slane %v281, 0
    %v441 = vsel %vm140, %v432, 0
    %v444 = vsel %vm140, %v433, 0
    %v447 = vsel %vm140, %v434, 0
    %v450 = vsel %vm140, %v435, 0
    %v453 = vsel %vm140, %v436, 0
    %455 = vmatpush.msra.mxu0 0.0
    %456 = vmatpush.msra.mxu0 0.0
    %457 = vmatpush.msra.mxu0 0.0
    %458 = vmatpush.msra.mxu0 0.0
    %459 = vmatpush.msra.mxu0 0.0
    %460 = vmatpush.msra.mxu0 0.0
    %461 = vmatpush.msra.mxu0 0.0
    %462 = vmatpush.msra.mxu0 0.0
    %463 = vmatpush.msra.mxu0 0.0
    %464 = vmatpush.msra.mxu0 0.0
    %465 = vmatpush.msra.mxu0 0.0
    %466 = vmatpush.msra.mxu0 0.0
    %467 = vmatpush.msra.mxu0 %v280
    %468 = vmatpush.msra.mxu0 %v279
    %469 = vmatpush.msra.mxu0 %v278
    %470 = vmatpush.msra.mxu0 %v277
    %471 = vmatmul.f32.gmra.mxu0 %v441
    %v472 = vpop.f32.mrf.mxu0
    %v473 = vadd.f32 %v438, %v472
    %474 = vmatmul.f32.gmra.mxu0 %v444
    %v475 = vpop.f32.mrf.mxu0
    %v476 = vadd.f32 %v438, %v475
    %477 = vmatmul.f32.gmra.mxu0 %v447
    %v478 = vpop.f32.mrf.mxu0
    %v479 = vadd.f32 %v438, %v478
    %480 = vmatmul.f32.gmra.mxu0 %v450
    %v481 = vpop.f32.mrf.mxu0
    %v482 = vadd.f32 %v438, %v481
    %483 = vmatmul.f32.gmra.mxu0 %v453
    %v484 = vpop.f32.mrf.mxu0
    %v485 = vadd.f32 %v438, %v484
    %486 = vdwg.mxu0
    %v487 = vmul.f32 %v473, 0.35355338
    %v488 = vmul.f32 %v476, 0.35355338
    %v489 = vmul.f32 %v479, 0.35355338
    %v490 = vmul.f32 %v482, 0.35355338
    %v491 = vmul.f32 %v485, 0.35355338
    %497 = vrot.lane.b32.xlu0 %v473, 96
    %v498 = vpop.permute.xlu0 %497
    %499 = vrot.lane.b32.xlu0 %v476, 96
    %v500 = vpop.permute.xlu0 %499
    %501 = vrot.lane.b32.xlu0 %v479, 96
    %v502 = vpop.permute.xlu0 %501
    %503 = vrot.lane.b32.xlu0 %v482, 96
    %v504 = vpop.permute.xlu0 %503
    %505 = vrot.lane.b32.xlu0 %v485, 96
    %v506 = vpop.permute.xlu0 %505
    %vm507 = vcmask 64512
    %v509 = vsel %vm507, %v487, 0
    %v512 = vsel %vm507, %v488, 0
    %v515 = vsel %vm507, %v489, 0
    %v518 = vsel %vm507, %v490, 0
    %v521 = vsel %vm507, %v491, 0
    %v523 = vsel %vm507, %v498, 0
    %v525 = vsel %vm507, %v500, 0
    %v527 = vsel %vm507, %v502, 0
    %v529 = vsel %vm507, %v504, 0
    %v531 = vsel %vm507, %v506, 0
    %533 = vmatpush.xpose.msra.mxu0 0.0
    %534 = vmatpush.xpose.msra.mxu0 0.0
    %535 = vmatpush.xpose.msra.mxu0 0.0
    %536 = vmatpush.xpose.msra.mxu0 0.0
    %537 = vmatpush.xpose.msra.mxu0 0.0
    %538 = vmatpush.xpose.msra.mxu0 0.0
    %539 = vmatpush.xpose.msra.mxu0 0.0
    %540 = vmatpush.xpose.msra.mxu0 0.0
    %541 = vmatpush.xpose.msra.mxu0 0.0
    %542 = vmatpush.xpose.msra.mxu0 0.0
    %543 = vmatpush.xpose.msra.mxu0 0.0
    %544 = vmatpush.xpose.msra.mxu0 %v531
    %545 = vmatpush.xpose.msra.mxu0 %v529
    %546 = vmatpush.xpose.msra.mxu0 %v527
    %547 = vmatpush.xpose.msra.mxu0 %v525
    %548 = vmatpush.xpose.msra.mxu0 %v523
    %549 = vmatmul.f32.gmra.mxu0 %v509
    %v550 = vpop.f32.mrf.mxu0
    %v551 = vadd.f32 %v69, %v550
    %552 = vmatmul.f32.gmra.mxu0 %v512
    %v553 = vpop.f32.mrf.mxu0
    %v554 = vadd.f32 %v70, %v553
    %555 = vmatmul.f32.gmra.mxu0 %v515
    %v556 = vpop.f32.mrf.mxu0
    %v557 = vadd.f32 %v71, %v556
    %558 = vmatmul.f32.gmra.mxu0 %v518
    %v559 = vpop.f32.mrf.mxu0
    %v560 = vadd.f32 %v72, %v559
    %561 = vmatmul.f32.gmra.mxu0 %v521
    %v562 = vpop.f32.mrf.mxu0
    %v563 = vadd.f32 %v73, %v562
    %564 = vdwg.mxu0
    %vm565 = vcmask 277504
    %v566 = vsel %vm565, %v551, -inf
    %567 = vmax.xlane.f32.xlu0 %v566
    %v568 = vpop.xlane.xlu0 %567
    %v569 = vsel %vm565, %v554, -inf
    %570 = vmax.xlane.f32.xlu0 %v569
    %v571 = vpop.xlane.xlu0 %570
    %v572 = vsel %vm565, %v557, -inf
    %573 = vmax.xlane.f32.xlu0 %v572
    %v574 = vpop.xlane.xlu0 %573
    %v575 = vsel %vm565, %v560, -inf
    %576 = vmax.xlane.f32.xlu0 %v575
    %v577 = vpop.xlane.xlu0 %576
    %vm578 = vcmask 271360
    %v579 = vsel %vm578, %v563, -inf
    %580 = vmax.xlane.f32.xlu0 %v579
    %v581 = vpop.xlane.xlu0 %580
    %v582 = vsub.f32 %v551, %v568
    %v583 = vsub.f32 %v554, %v571
    %v584 = vsub.f32 %v557, %v574
    %v585 = vsub.f32 %v560, %v577
    %v586 = vsub.f32 %v563, %v581
    %v587 = vmul.f32 %v582, 1.442695
    %v588 = vpow.pop %v587
    %v589 = vmul.f32 %v583, 1.442695
    %v590 = vpow.pop %v589
    %v591 = vmul.f32 %v584, 1.442695
    %v592 = vpow.pop %v591
    %v593 = vmul.f32 %v585, 1.442695
    %v594 = vpow.pop %v593
    %v595 = vmul.f32 %v586, 1.442695
    %v596 = vpow.pop %v595
    %v597 = vsel %vm565, %v588, 0.0
    %598 = vadd.xlane.f32.xlu0 %v597
    %v599 = vpop.xlane.xlu0 %598
    %v600 = vsel %vm565, %v590, 0.0
    %601 = vadd.xlane.f32.xlu0 %v600
    %v602 = vpop.xlane.xlu0 %601
    %v603 = vsel %vm565, %v592, 0.0
    %604 = vadd.xlane.f32.xlu0 %v603
    %v605 = vpop.xlane.xlu0 %604
    %v606 = vsel %vm565, %v594, 0.0
    %607 = vadd.xlane.f32.xlu0 %v606
    %v608 = vpop.xlane.xlu0 %607
    %v609 = vsel %vm578, %v596, 0.0
    %610 = vadd.xlane.f32.xlu0 %v609
    %v611 = vpop.xlane.xlu0 %610
    %v612 = vrcp.pop %v599
    %v613 = vrcp.pop %v602
    %v614 = vrcp.pop %v605
    %v615 = vrcp.pop %v608
    %v616 = vrcp.pop %v611
    %v617 = vmul.f32 %v588, %v612
    %v618 = vmul.f32 %v590, %v613
    %v619 = vmul.f32 %v592, %v614
    %v620 = vmul.f32 %v594, %v615
    %v621 = vmul.f32 %v596, %v616
    %622 = vrot.lane.b32.xlu0 %v473, 64
    %v623 = vpop.permute.xlu0 %622
    %624 = vrot.lane.b32.xlu0 %v476, 64
    %v625 = vpop.permute.xlu0 %624
    %626 = vrot.lane.b32.xlu0 %v479, 64
    %v627 = vpop.permute.xlu0 %626
    %628 = vrot.lane.b32.xlu0 %v482, 64
    %v629 = vpop.permute.xlu0 %628
    %630 = vrot.lane.b32.xlu0 %v485, 64
    %v631 = vpop.permute.xlu0 %630
    %v637 = vsel %vm565, %v617, 0
    %v640 = vsel %vm565, %v618, 0
    %v643 = vsel %vm565, %v619, 0
    %v646 = vsel %vm565, %v620, 0
    %v649 = vsel %vm565, %v621, 0
    %vm651 = vcmask 1041408
    %v652 = vsel %vm651, %v631, 0
    %654 = vmatpush.msra.mxu0 0.0
    %655 = vmatpush.msra.mxu0 0.0
    %656 = vmatpush.msra.mxu0 0.0
    %657 = vmatpush.msra.mxu0 0.0
    %658 = vmatpush.msra.mxu0 0.0
    %659 = vmatpush.msra.mxu0 0.0
    %660 = vmatpush.msra.mxu0 0.0
    %661 = vmatpush.msra.mxu0 0.0
    %662 = vmatpush.msra.mxu0 0.0
    %663 = vmatpush.msra.mxu0 0.0
    %664 = vmatpush.msra.mxu0 0.0
    %665 = vmatpush.msra.mxu0 %v652
    %666 = vmatpush.msra.mxu0 %v629
    %667 = vmatpush.msra.mxu0 %v627
    %668 = vmatpush.msra.mxu0 %v625
    %669 = vmatpush.msra.mxu0 %v623
    %670 = vmatmul.f32.gmra.mxu0 %v637
    %v671 = vpop.f32.mrf.mxu0
    %v672 = vadd.f32 0.0, %v671
    %673 = vmatmul.f32.gmra.mxu0 %v640
    %v674 = vpop.f32.mrf.mxu0
    %v675 = vadd.f32 0.0, %v674
    %676 = vmatmul.f32.gmra.mxu0 %v643
    %v677 = vpop.f32.mrf.mxu0
    %v678 = vadd.f32 0.0, %v677
    %679 = vmatmul.f32.gmra.mxu0 %v646
    %v680 = vpop.f32.mrf.mxu0
    %v681 = vadd.f32 0.0, %v680
    %682 = vmatmul.f32.gmra.mxu0 %v649
    %v683 = vpop.f32.mrf.mxu0
    %v684 = vadd.f32 0.0, %v683
    %685 = vdwg.mxu0
    %v687 = vsel %vm507, %v672, 0
    %v690 = vsel %vm507, %v675, 0
    %v693 = vsel %vm507, %v678, 0
    %v696 = vsel %vm507, %v681, 0
    %v699 = vsel %vm507, %v684, 0
    %701 = vmatpush.msra.mxu0 0.0
    %702 = vmatpush.msra.mxu0 0.0
    %703 = vmatpush.msra.mxu0 0.0
    %704 = vmatpush.msra.mxu0 0.0
    %705 = vmatpush.msra.mxu0 0.0
    %706 = vmatpush.msra.mxu0 0.0
    %707 = vmatpush.msra.mxu0 0.0
    %708 = vmatpush.msra.mxu0 0.0
    %709 = vmatpush.msra.mxu0 0.0
    %710 = vmatpush.msra.mxu0 0.0
    %711 = vmatpush.msra.mxu0 0.0
    %712 = vmatpush.msra.mxu0 0.0
    %713 = vmatpush.msra.mxu0 0.0
    %714 = vmatpush.msra.mxu0 0.0
    %715 = vmatpush.msra.mxu0 0.0
    %716 = vmatpush.msra.mxu0 %v282
    %717 = vmatmul.f32.gmra.mxu0 %v687
    %v718 = vpop.f32.mrf.mxu0
    %v719 = vadd.f32 0.0, %v718
    %720 = vmatmul.f32.gmra.mxu0 %v690
    %v721 = vpop.f32.mrf.mxu0
    %v722 = vadd.f32 0.0, %v721
    %723 = vmatmul.f32.gmra.mxu0 %v693
    %v724 = vpop.f32.mrf.mxu0
    %v725 = vadd.f32 0.0, %v724
    %726 = vmatmul.f32.gmra.mxu0 %v696
    %v727 = vpop.f32.mrf.mxu0
    %v728 = vadd.f32 0.0, %v727
    %729 = vmatmul.f32.gmra.mxu0 %v699
    %v730 = vpop.f32.mrf.mxu0
    %v731 = vadd.f32 0.0, %v730
    %732 = vdwg.mxu0
    %v734 = vperm.slane %v286, 0
    %v736 = vadd.f32 %v734, %v719
    %v737 = vadd.f32 %v734, %v722
    %v738 = vadd.f32 %v734, %v725
    %v739 = vadd.f32 %v734, %v728
    %v740 = vadd.f32 %v734, %v731
    %741 = vrot.lane.b32.xlu0 %v487, 120
    %v742 = vpop.permute.xlu0 %741
    %743 = vrot.lane.b32.xlu0 %v488, 120
    %v744 = vpop.permute.xlu0 %743
    %745 = vrot.lane.b32.xlu0 %v489, 120
    %v746 = vpop.permute.xlu0 %745
    %747 = vrot.lane.b32.xlu0 %v490, 120
    %v748 = vpop.permute.xlu0 %747
    %749 = vrot.lane.b32.xlu0 %v491, 120
    %v750 = vpop.permute.xlu0 %749
    %751 = vrot.lane.b32.xlu0 %v473, 88
    %v752 = vpop.permute.xlu0 %751
    %753 = vrot.lane.b32.xlu0 %v476, 88
    %v754 = vpop.permute.xlu0 %753
    %755 = vrot.lane.b32.xlu0 %v479, 88
    %v756 = vpop.permute.xlu0 %755
    %757 = vrot.lane.b32.xlu0 %v482, 88
    %v758 = vpop.permute.xlu0 %757
    %759 = vrot.lane.b32.xlu0 %v485, 88
    %v760 = vpop.permute.xlu0 %759
    %v761 = vsel %vm507, %v742, 0
    %v763 = vsel %vm507, %v744, 0
    %v765 = vsel %vm507, %v746, 0
    %v767 = vsel %vm507, %v748, 0
    %v769 = vsel %vm507, %v750, 0
    %v771 = vsel %vm507, %v752, 0
    %v773 = vsel %vm507, %v754, 0
    %v775 = vsel %vm507, %v756, 0
    %v777 = vsel %vm507, %v758, 0
    %v779 = vsel %vm507, %v760, 0
    %781 = vmatpush.xpose.msra.mxu0 0.0
    %782 = vmatpush.xpose.msra.mxu0 0.0
    %783 = vmatpush.xpose.msra.mxu0 0.0
    %784 = vmatpush.xpose.msra.mxu0 0.0
    %785 = vmatpush.xpose.msra.mxu0 0.0
    %786 = vmatpush.xpose.msra.mxu0 0.0
    %787 = vmatpush.xpose.msra.mxu0 0.0
    %788 = vmatpush.xpose.msra.mxu0 0.0
    %789 = vmatpush.xpose.msra.mxu0 0.0
    %790 = vmatpush.xpose.msra.mxu0 0.0
    %791 = vmatpush.xpose.msra.mxu0 0.0
    %792 = vmatpush.xpose.msra.mxu0 %v779
    %793 = vmatpush.xpose.msra.mxu0 %v777
    %794 = vmatpush.xpose.msra.mxu0 %v775
    %795 = vmatpush.xpose.msra.mxu0 %v773
    %796 = vmatpush.xpose.msra.mxu0 %v771
    %797 = vmatmul.f32.gmra.mxu0 %v761
    %v798 = vpop.f32.mrf.mxu0
    %v799 = vadd.f32 %v69, %v798
    %800 = vmatmul.f32.gmra.mxu0 %v763
    %v801 = vpop.f32.mrf.mxu0
    %v802 = vadd.f32 %v70, %v801
    %803 = vmatmul.f32.gmra.mxu0 %v765
    %v804 = vpop.f32.mrf.mxu0
    %v805 = vadd.f32 %v71, %v804
    %806 = vmatmul.f32.gmra.mxu0 %v767
    %v807 = vpop.f32.mrf.mxu0
    %v808 = vadd.f32 %v72, %v807
    %809 = vmatmul.f32.gmra.mxu0 %v769
    %v810 = vpop.f32.mrf.mxu0
    %v811 = vadd.f32 %v73, %v810
    %812 = vdwg.mxu0
    %v813 = vsel %vm565, %v799, -inf
    %814 = vmax.xlane.f32.xlu0 %v813
    %v815 = vpop.xlane.xlu0 %814
    %v816 = vsel %vm565, %v802, -inf
    %817 = vmax.xlane.f32.xlu0 %v816
    %v818 = vpop.xlane.xlu0 %817
    %v819 = vsel %vm565, %v805, -inf
    %820 = vmax.xlane.f32.xlu0 %v819
    %v821 = vpop.xlane.xlu0 %820
    %v822 = vsel %vm565, %v808, -inf
    %823 = vmax.xlane.f32.xlu0 %v822
    %v824 = vpop.xlane.xlu0 %823
    %v825 = vsel %vm578, %v811, -inf
    %826 = vmax.xlane.f32.xlu0 %v825
    %v827 = vpop.xlane.xlu0 %826
    %v828 = vsub.f32 %v799, %v815
    %v829 = vsub.f32 %v802, %v818
    %v830 = vsub.f32 %v805, %v821
    %v831 = vsub.f32 %v808, %v824
    %v832 = vsub.f32 %v811, %v827
    %v833 = vmul.f32 %v828, 1.442695
    %v834 = vpow.pop %v833
    %v835 = vmul.f32 %v829, 1.442695
    %v836 = vpow.pop %v835
    %v837 = vmul.f32 %v830, 1.442695
    %v838 = vpow.pop %v837
    %v839 = vmul.f32 %v831, 1.442695
    %v840 = vpow.pop %v839
    %v841 = vmul.f32 %v832, 1.442695
    %v842 = vpow.pop %v841
    %v843 = vsel %vm565, %v834, 0.0
    %844 = vadd.xlane.f32.xlu0 %v843
    %v845 = vpop.xlane.xlu0 %844
    %v846 = vsel %vm565, %v836, 0.0
    %847 = vadd.xlane.f32.xlu0 %v846
    %v848 = vpop.xlane.xlu0 %847
    %v849 = vsel %vm565, %v838, 0.0
    %850 = vadd.xlane.f32.xlu0 %v849
    %v851 = vpop.xlane.xlu0 %850
    %v852 = vsel %vm565, %v840, 0.0
    %853 = vadd.xlane.f32.xlu0 %v852
    %v854 = vpop.xlane.xlu0 %853
    %v855 = vsel %vm578, %v842, 0.0
    %856 = vadd.xlane.f32.xlu0 %v855
    %v857 = vpop.xlane.xlu0 %856
    %v858 = vrcp.pop %v845
    %v859 = vrcp.pop %v848
    %v860 = vrcp.pop %v851
    %v861 = vrcp.pop %v854
    %v862 = vrcp.pop %v857
    %v863 = vmul.f32 %v834, %v858
    %v864 = vmul.f32 %v836, %v859
    %v865 = vmul.f32 %v838, %v860
    %v866 = vmul.f32 %v840, %v861
    %v867 = vmul.f32 %v842, %v862
    %868 = vrot.lane.b32.xlu0 %v473, 56
    %v869 = vpop.permute.xlu0 %868
    %870 = vrot.lane.b32.xlu0 %v476, 56
    %v871 = vpop.permute.xlu0 %870
    %872 = vrot.lane.b32.xlu0 %v479, 56
    %v873 = vpop.permute.xlu0 %872
    %874 = vrot.lane.b32.xlu0 %v482, 56
    %v875 = vpop.permute.xlu0 %874
    %876 = vrot.lane.b32.xlu0 %v485, 56
    %v877 = vpop.permute.xlu0 %876
    %v883 = vsel %vm565, %v863, 0
    %v886 = vsel %vm565, %v864, 0
    %v889 = vsel %vm565, %v865, 0
    %v892 = vsel %vm565, %v866, 0
    %v895 = vsel %vm565, %v867, 0
    %v897 = vsel %vm651, %v877, 0
    %899 = vmatpush.msra.mxu0 0.0
    %900 = vmatpush.msra.mxu0 0.0
    %901 = vmatpush.msra.mxu0 0.0
    %902 = vmatpush.msra.mxu0 0.0
    %903 = vmatpush.msra.mxu0 0.0
    %904 = vmatpush.msra.mxu0 0.0
    %905 = vmatpush.msra.mxu0 0.0
    %906 = vmatpush.msra.mxu0 0.0
    %907 = vmatpush.msra.mxu0 0.0
    %908 = vmatpush.msra.mxu0 0.0
    %909 = vmatpush.msra.mxu0 0.0
    %910 = vmatpush.msra.mxu0 %v897
    %911 = vmatpush.msra.mxu0 %v875
    %912 = vmatpush.msra.mxu0 %v873
    %913 = vmatpush.msra.mxu0 %v871
    %914 = vmatpush.msra.mxu0 %v869
    %915 = vmatmul.f32.gmra.mxu0 %v883
    %v916 = vpop.f32.mrf.mxu0
    %v917 = vadd.f32 0.0, %v916
    %918 = vmatmul.f32.gmra.mxu0 %v886
    %v919 = vpop.f32.mrf.mxu0
    %v920 = vadd.f32 0.0, %v919
    %921 = vmatmul.f32.gmra.mxu0 %v889
    %v922 = vpop.f32.mrf.mxu0
    %v923 = vadd.f32 0.0, %v922
    %924 = vmatmul.f32.gmra.mxu0 %v892
    %v925 = vpop.f32.mrf.mxu0
    %v926 = vadd.f32 0.0, %v925
    %927 = vmatmul.f32.gmra.mxu0 %v895
    %v928 = vpop.f32.mrf.mxu0
    %v929 = vadd.f32 0.0, %v928
    %930 = vdwg.mxu0
    %v932 = vsel %vm507, %v917, 0
    %v935 = vsel %vm507, %v920, 0
    %v938 = vsel %vm507, %v923, 0
    %v941 = vsel %vm507, %v926, 0
    %v944 = vsel %vm507, %v929, 0
    %946 = vmatpush.msra.mxu0 0.0
    %947 = vmatpush.msra.mxu0 0.0
    %948 = vmatpush.msra.mxu0 0.0
    %949 = vmatpush.msra.mxu0 0.0
    %950 = vmatpush.msra.mxu0 0.0
    %951 = vmatpush.msra.mxu0 0.0
    %952 = vmatpush.msra.mxu0 0.0
    %953 = vmatpush.msra.mxu0 0.0
    %954 = vmatpush.msra.mxu0 0.0
    %955 = vmatpush.msra.mxu0 0.0
    %956 = vmatpush.msra.mxu0 0.0
    %957 = vmatpush.msra.mxu0 0.0
    %958 = vmatpush.msra.mxu0 0.0
    %959 = vmatpush.msra.mxu0 0.0
    %960 = vmatpush.msra.mxu0 0.0
    %961 = vmatpush.msra.mxu0 %v283
    %962 = vmatmul.f32.gmra.mxu0 %v932
    %v963 = vpop.f32.mrf.mxu0
    %v964 = vadd.f32 0.0, %v963
    %965 = vmatmul.f32.gmra.mxu0 %v935
    %v966 = vpop.f32.mrf.mxu0
    %v967 = vadd.f32 0.0, %v966
    %968 = vmatmul.f32.gmra.mxu0 %v938
    %v969 = vpop.f32.mrf.mxu0
    %v970 = vadd.f32 0.0, %v969
    %971 = vmatmul.f32.gmra.mxu0 %v941
    %v972 = vpop.f32.mrf.mxu0
    %v973 = vadd.f32 0.0, %v972
    %974 = vmatmul.f32.gmra.mxu0 %v944
    %v975 = vpop.f32.mrf.mxu0
    %v976 = vadd.f32 0.0, %v975
    %977 = vdwg.mxu0
    %v978 = vadd.f32 %v736, %v964
    %v979 = vadd.f32 %v737, %v967
    %v980 = vadd.f32 %v738, %v970
    %v981 = vadd.f32 %v739, %v973
    %v982 = vadd.f32 %v740, %v976
    %983 = vrot.lane.b32.xlu0 %v487, 112
    %v984 = vpop.permute.xlu0 %983
    %985 = vrot.lane.b32.xlu0 %v488, 112
    %v986 = vpop.permute.xlu0 %985
    %987 = vrot.lane.b32.xlu0 %v489, 112
    %v988 = vpop.permute.xlu0 %987
    %989 = vrot.lane.b32.xlu0 %v490, 112
    %v990 = vpop.permute.xlu0 %989
    %991 = vrot.lane.b32.xlu0 %v491, 112
    %v992 = vpop.permute.xlu0 %991
    %993 = vrot.lane.b32.xlu0 %v473, 80
    %v994 = vpop.permute.xlu0 %993
    %995 = vrot.lane.b32.xlu0 %v476, 80
    %v996 = vpop.permute.xlu0 %995
    %997 = vrot.lane.b32.xlu0 %v479, 80
    %v998 = vpop.permute.xlu0 %997
    %999 = vrot.lane.b32.xlu0 %v482, 80
    %v1000 = vpop.permute.xlu0 %999
    %1001 = vrot.lane.b32.xlu0 %v485, 80
    %v1002 = vpop.permute.xlu0 %1001
    %v1003 = vsel %vm507, %v984, 0
    %v1005 = vsel %vm507, %v986, 0
    %v1007 = vsel %vm507, %v988, 0
    %v1009 = vsel %vm507, %v990, 0
    %v1011 = vsel %vm507, %v992, 0
    %v1013 = vsel %vm507, %v994, 0
    %v1015 = vsel %vm507, %v996, 0
    %v1017 = vsel %vm507, %v998, 0
    %v1019 = vsel %vm507, %v1000, 0
    %v1021 = vsel %vm507, %v1002, 0
    %1023 = vmatpush.xpose.msra.mxu0 0.0
    %1024 = vmatpush.xpose.msra.mxu0 0.0
    %1025 = vmatpush.xpose.msra.mxu0 0.0
    %1026 = vmatpush.xpose.msra.mxu0 0.0
    %1027 = vmatpush.xpose.msra.mxu0 0.0
    %1028 = vmatpush.xpose.msra.mxu0 0.0
    %1029 = vmatpush.xpose.msra.mxu0 0.0
    %1030 = vmatpush.xpose.msra.mxu0 0.0
    %1031 = vmatpush.xpose.msra.mxu0 0.0
    %1032 = vmatpush.xpose.msra.mxu0 0.0
    %1033 = vmatpush.xpose.msra.mxu0 0.0
    %1034 = vmatpush.xpose.msra.mxu0 %v1021
    %1035 = vmatpush.xpose.msra.mxu0 %v1019
    %1036 = vmatpush.xpose.msra.mxu0 %v1017
    %1037 = vmatpush.xpose.msra.mxu0 %v1015
    %1038 = vmatpush.xpose.msra.mxu0 %v1013
    %1039 = vmatmul.f32.gmra.mxu0 %v1003
    %v1040 = vpop.f32.mrf.mxu0
    %v1041 = vadd.f32 %v69, %v1040
    %1042 = vmatmul.f32.gmra.mxu0 %v1005
    %v1043 = vpop.f32.mrf.mxu0
    %v1044 = vadd.f32 %v70, %v1043
    %1045 = vmatmul.f32.gmra.mxu0 %v1007
    %v1046 = vpop.f32.mrf.mxu0
    %v1047 = vadd.f32 %v71, %v1046
    %1048 = vmatmul.f32.gmra.mxu0 %v1009
    %v1049 = vpop.f32.mrf.mxu0
    %v1050 = vadd.f32 %v72, %v1049
    %1051 = vmatmul.f32.gmra.mxu0 %v1011
    %v1052 = vpop.f32.mrf.mxu0
    %v1053 = vadd.f32 %v73, %v1052
    %1054 = vdwg.mxu0
    %v1055 = vsel %vm565, %v1041, -inf
    %1056 = vmax.xlane.f32.xlu0 %v1055
    %v1057 = vpop.xlane.xlu0 %1056
    %v1058 = vsel %vm565, %v1044, -inf
    %1059 = vmax.xlane.f32.xlu0 %v1058
    %v1060 = vpop.xlane.xlu0 %1059
    %v1061 = vsel %vm565, %v1047, -inf
    %1062 = vmax.xlane.f32.xlu0 %v1061
    %v1063 = vpop.xlane.xlu0 %1062
    %v1064 = vsel %vm565, %v1050, -inf
    %1065 = vmax.xlane.f32.xlu0 %v1064
    %v1066 = vpop.xlane.xlu0 %1065
    %v1067 = vsel %vm578, %v1053, -inf
    %1068 = vmax.xlane.f32.xlu0 %v1067
    %v1069 = vpop.xlane.xlu0 %1068
    %v1070 = vsub.f32 %v1041, %v1057
    %v1071 = vsub.f32 %v1044, %v1060
    %v1072 = vsub.f32 %v1047, %v1063
    %v1073 = vsub.f32 %v1050, %v1066
    %v1074 = vsub.f32 %v1053, %v1069
    %v1075 = vmul.f32 %v1070, 1.442695
    %v1076 = vpow.pop %v1075
    %v1077 = vmul.f32 %v1071, 1.442695
    %v1078 = vpow.pop %v1077
    %v1079 = vmul.f32 %v1072, 1.442695
    %v1080 = vpow.pop %v1079
    %v1081 = vmul.f32 %v1073, 1.442695
    %v1082 = vpow.pop %v1081
    %v1083 = vmul.f32 %v1074, 1.442695
    %v1084 = vpow.pop %v1083
    %v1085 = vsel %vm565, %v1076, 0.0
    %1086 = vadd.xlane.f32.xlu0 %v1085
    %v1087 = vpop.xlane.xlu0 %1086
    %v1088 = vsel %vm565, %v1078, 0.0
    %1089 = vadd.xlane.f32.xlu0 %v1088
    %v1090 = vpop.xlane.xlu0 %1089
    %v1091 = vsel %vm565, %v1080, 0.0
    %1092 = vadd.xlane.f32.xlu0 %v1091
    %v1093 = vpop.xlane.xlu0 %1092
    %v1094 = vsel %vm565, %v1082, 0.0
    %1095 = vadd.xlane.f32.xlu0 %v1094
    %v1096 = vpop.xlane.xlu0 %1095
    %v1097 = vsel %vm578, %v1084, 0.0
    %1098 = vadd.xlane.f32.xlu0 %v1097
    %v1099 = vpop.xlane.xlu0 %1098
    %v1100 = vrcp.pop %v1087
    %v1101 = vrcp.pop %v1090
    %v1102 = vrcp.pop %v1093
    %v1103 = vrcp.pop %v1096
    %v1104 = vrcp.pop %v1099
    %v1105 = vmul.f32 %v1076, %v1100
    %v1106 = vmul.f32 %v1078, %v1101
    %v1107 = vmul.f32 %v1080, %v1102
    %v1108 = vmul.f32 %v1082, %v1103
    %v1109 = vmul.f32 %v1084, %v1104
    %1110 = vrot.lane.b32.xlu0 %v473, 48
    %v1111 = vpop.permute.xlu0 %1110
    %1112 = vrot.lane.b32.xlu0 %v476, 48
    %v1113 = vpop.permute.xlu0 %1112
    %1114 = vrot.lane.b32.xlu0 %v479, 48
    %v1115 = vpop.permute.xlu0 %1114
    %1116 = vrot.lane.b32.xlu0 %v482, 48
    %v1117 = vpop.permute.xlu0 %1116
    %1118 = vrot.lane.b32.xlu0 %v485, 48
    %v1119 = vpop.permute.xlu0 %1118
    %v1125 = vsel %vm565, %v1105, 0
    %v1128 = vsel %vm565, %v1106, 0
    %v1131 = vsel %vm565, %v1107, 0
    %v1134 = vsel %vm565, %v1108, 0
    %v1137 = vsel %vm565, %v1109, 0
    %v1139 = vsel %vm651, %v1119, 0
    %1141 = vmatpush.msra.mxu0 0.0
    %1142 = vmatpush.msra.mxu0 0.0
    %1143 = vmatpush.msra.mxu0 0.0
    %1144 = vmatpush.msra.mxu0 0.0
    %1145 = vmatpush.msra.mxu0 0.0
    %1146 = vmatpush.msra.mxu0 0.0
    %1147 = vmatpush.msra.mxu0 0.0
    %1148 = vmatpush.msra.mxu0 0.0
    %1149 = vmatpush.msra.mxu0 0.0
    %1150 = vmatpush.msra.mxu0 0.0
    %1151 = vmatpush.msra.mxu0 0.0
    %1152 = vmatpush.msra.mxu0 %v1139
    %1153 = vmatpush.msra.mxu0 %v1117
    %1154 = vmatpush.msra.mxu0 %v1115
    %1155 = vmatpush.msra.mxu0 %v1113
    %1156 = vmatpush.msra.mxu0 %v1111
    %1157 = vmatmul.f32.gmra.mxu0 %v1125
    %v1158 = vpop.f32.mrf.mxu0
    %v1159 = vadd.f32 0.0, %v1158
    %1160 = vmatmul.f32.gmra.mxu0 %v1128
    %v1161 = vpop.f32.mrf.mxu0
    %v1162 = vadd.f32 0.0, %v1161
    %1163 = vmatmul.f32.gmra.mxu0 %v1131
    %v1164 = vpop.f32.mrf.mxu0
    %v1165 = vadd.f32 0.0, %v1164
    %1166 = vmatmul.f32.gmra.mxu0 %v1134
    %v1167 = vpop.f32.mrf.mxu0
    %v1168 = vadd.f32 0.0, %v1167
    %1169 = vmatmul.f32.gmra.mxu0 %v1137
    %v1170 = vpop.f32.mrf.mxu0
    %v1171 = vadd.f32 0.0, %v1170
    %1172 = vdwg.mxu0
    %v1174 = vsel %vm507, %v1159, 0
    %v1177 = vsel %vm507, %v1162, 0
    %v1180 = vsel %vm507, %v1165, 0
    %v1183 = vsel %vm507, %v1168, 0
    %v1186 = vsel %vm507, %v1171, 0
    %1188 = vmatpush.msra.mxu0 0.0
    %1189 = vmatpush.msra.mxu0 0.0
    %1190 = vmatpush.msra.mxu0 0.0
    %1191 = vmatpush.msra.mxu0 0.0
    %1192 = vmatpush.msra.mxu0 0.0
    %1193 = vmatpush.msra.mxu0 0.0
    %1194 = vmatpush.msra.mxu0 0.0
    %1195 = vmatpush.msra.mxu0 0.0
    %1196 = vmatpush.msra.mxu0 0.0
    %1197 = vmatpush.msra.mxu0 0.0
    %1198 = vmatpush.msra.mxu0 0.0
    %1199 = vmatpush.msra.mxu0 0.0
    %1200 = vmatpush.msra.mxu0 0.0
    %1201 = vmatpush.msra.mxu0 0.0
    %1202 = vmatpush.msra.mxu0 0.0
    %1203 = vmatpush.msra.mxu0 %v284
    %1204 = vmatmul.f32.gmra.mxu0 %v1174
    %v1205 = vpop.f32.mrf.mxu0
    %v1206 = vadd.f32 0.0, %v1205
    %1207 = vmatmul.f32.gmra.mxu0 %v1177
    %v1208 = vpop.f32.mrf.mxu0
    %v1209 = vadd.f32 0.0, %v1208
    %1210 = vmatmul.f32.gmra.mxu0 %v1180
    %v1211 = vpop.f32.mrf.mxu0
    %v1212 = vadd.f32 0.0, %v1211
    %1213 = vmatmul.f32.gmra.mxu0 %v1183
    %v1214 = vpop.f32.mrf.mxu0
    %v1215 = vadd.f32 0.0, %v1214
    %1216 = vmatmul.f32.gmra.mxu0 %v1186
    %v1217 = vpop.f32.mrf.mxu0
    %v1218 = vadd.f32 0.0, %v1217
    %1219 = vdwg.mxu0
    %v1220 = vadd.f32 %v978, %v1206
    %v1221 = vadd.f32 %v979, %v1209
    %v1222 = vadd.f32 %v980, %v1212
    %v1223 = vadd.f32 %v981, %v1215
    %v1224 = vadd.f32 %v982, %v1218
    %1225 = vrot.lane.b32.xlu0 %v487, 104
    %v1226 = vpop.permute.xlu0 %1225
    %1227 = vrot.lane.b32.xlu0 %v488, 104
    %v1228 = vpop.permute.xlu0 %1227
    %1229 = vrot.lane.b32.xlu0 %v489, 104
    %v1230 = vpop.permute.xlu0 %1229
    %1231 = vrot.lane.b32.xlu0 %v490, 104
    %v1232 = vpop.permute.xlu0 %1231
    %1233 = vrot.lane.b32.xlu0 %v491, 104
    %v1234 = vpop.permute.xlu0 %1233
    %1235 = vrot.lane.b32.xlu0 %v473, 72
    %v1236 = vpop.permute.xlu0 %1235
    %1237 = vrot.lane.b32.xlu0 %v476, 72
    %v1238 = vpop.permute.xlu0 %1237
    %1239 = vrot.lane.b32.xlu0 %v479, 72
    %v1240 = vpop.permute.xlu0 %1239
    %1241 = vrot.lane.b32.xlu0 %v482, 72
    %v1242 = vpop.permute.xlu0 %1241
    %1243 = vrot.lane.b32.xlu0 %v485, 72
    %v1244 = vpop.permute.xlu0 %1243
    %v1245 = vsel %vm507, %v1226, 0
    %v1247 = vsel %vm507, %v1228, 0
    %v1249 = vsel %vm507, %v1230, 0
    %v1251 = vsel %vm507, %v1232, 0
    %v1253 = vsel %vm507, %v1234, 0
    %v1255 = vsel %vm507, %v1236, 0
    %v1257 = vsel %vm507, %v1238, 0
    %v1259 = vsel %vm507, %v1240, 0
    %v1261 = vsel %vm507, %v1242, 0
    %v1263 = vsel %vm507, %v1244, 0
    %1265 = vmatpush.xpose.msra.mxu0 0.0
    %1266 = vmatpush.xpose.msra.mxu0 0.0
    %1267 = vmatpush.xpose.msra.mxu0 0.0
    %1268 = vmatpush.xpose.msra.mxu0 0.0
    %1269 = vmatpush.xpose.msra.mxu0 0.0
    %1270 = vmatpush.xpose.msra.mxu0 0.0
    %1271 = vmatpush.xpose.msra.mxu0 0.0
    %1272 = vmatpush.xpose.msra.mxu0 0.0
    %1273 = vmatpush.xpose.msra.mxu0 0.0
    %1274 = vmatpush.xpose.msra.mxu0 0.0
    %1275 = vmatpush.xpose.msra.mxu0 0.0
    %1276 = vmatpush.xpose.msra.mxu0 %v1263
    %1277 = vmatpush.xpose.msra.mxu0 %v1261
    %1278 = vmatpush.xpose.msra.mxu0 %v1259
    %1279 = vmatpush.xpose.msra.mxu0 %v1257
    %1280 = vmatpush.xpose.msra.mxu0 %v1255
    %1281 = vmatmul.f32.gmra.mxu0 %v1245
    %v1282 = vpop.f32.mrf.mxu0
    %v1283 = vadd.f32 %v69, %v1282
    %1284 = vmatmul.f32.gmra.mxu0 %v1247
    %v1285 = vpop.f32.mrf.mxu0
    %v1286 = vadd.f32 %v70, %v1285
    %1287 = vmatmul.f32.gmra.mxu0 %v1249
    %v1288 = vpop.f32.mrf.mxu0
    %v1289 = vadd.f32 %v71, %v1288
    %1290 = vmatmul.f32.gmra.mxu0 %v1251
    %v1291 = vpop.f32.mrf.mxu0
    %v1292 = vadd.f32 %v72, %v1291
    %1293 = vmatmul.f32.gmra.mxu0 %v1253
    %v1294 = vpop.f32.mrf.mxu0
    %v1295 = vadd.f32 %v73, %v1294
    %1296 = vdwg.mxu0
    %v1297 = vsel %vm565, %v1283, -inf
    %1298 = vmax.xlane.f32.xlu0 %v1297
    %v1299 = vpop.xlane.xlu0 %1298
    %v1300 = vsel %vm565, %v1286, -inf
    %1301 = vmax.xlane.f32.xlu0 %v1300
    %v1302 = vpop.xlane.xlu0 %1301
    %v1303 = vsel %vm565, %v1289, -inf
    %1304 = vmax.xlane.f32.xlu0 %v1303
    %v1305 = vpop.xlane.xlu0 %1304
    %v1306 = vsel %vm565, %v1292, -inf
    %1307 = vmax.xlane.f32.xlu0 %v1306
    %v1308 = vpop.xlane.xlu0 %1307
    %v1309 = vsel %vm578, %v1295, -inf
    %1310 = vmax.xlane.f32.xlu0 %v1309
    %v1311 = vpop.xlane.xlu0 %1310
    %v1312 = vsub.f32 %v1283, %v1299
    %v1313 = vsub.f32 %v1286, %v1302
    %v1314 = vsub.f32 %v1289, %v1305
    %v1315 = vsub.f32 %v1292, %v1308
    %v1316 = vsub.f32 %v1295, %v1311
    %v1317 = vmul.f32 %v1312, 1.442695
    %v1318 = vpow.pop %v1317
    %v1319 = vmul.f32 %v1313, 1.442695
    %v1320 = vpow.pop %v1319
    %v1321 = vmul.f32 %v1314, 1.442695
    %v1322 = vpow.pop %v1321
    %v1323 = vmul.f32 %v1315, 1.442695
    %v1324 = vpow.pop %v1323
    %v1325 = vmul.f32 %v1316, 1.442695
    %v1326 = vpow.pop %v1325
    %v1327 = vsel %vm565, %v1318, 0.0
    %1328 = vadd.xlane.f32.xlu0 %v1327
    %v1329 = vpop.xlane.xlu0 %1328
    %v1330 = vsel %vm565, %v1320, 0.0
    %1331 = vadd.xlane.f32.xlu0 %v1330
    %v1332 = vpop.xlane.xlu0 %1331
    %v1333 = vsel %vm565, %v1322, 0.0
    %1334 = vadd.xlane.f32.xlu0 %v1333
    %v1335 = vpop.xlane.xlu0 %1334
    %v1336 = vsel %vm565, %v1324, 0.0
    %1337 = vadd.xlane.f32.xlu0 %v1336
    %v1338 = vpop.xlane.xlu0 %1337
    %v1339 = vsel %vm578, %v1326, 0.0
    %1340 = vadd.xlane.f32.xlu0 %v1339
    %v1341 = vpop.xlane.xlu0 %1340
    %v1342 = vrcp.pop %v1329
    %v1343 = vrcp.pop %v1332
    %v1344 = vrcp.pop %v1335
    %v1345 = vrcp.pop %v1338
    %v1346 = vrcp.pop %v1341
    %v1347 = vmul.f32 %v1318, %v1342
    %v1348 = vmul.f32 %v1320, %v1343
    %v1349 = vmul.f32 %v1322, %v1344
    %v1350 = vmul.f32 %v1324, %v1345
    %v1351 = vmul.f32 %v1326, %v1346
    %1352 = vrot.lane.b32.xlu0 %v473, 40
    %v1353 = vpop.permute.xlu0 %1352
    %1354 = vrot.lane.b32.xlu0 %v476, 40
    %v1355 = vpop.permute.xlu0 %1354
    %1356 = vrot.lane.b32.xlu0 %v479, 40
    %v1357 = vpop.permute.xlu0 %1356
    %1358 = vrot.lane.b32.xlu0 %v482, 40
    %v1359 = vpop.permute.xlu0 %1358
    %1360 = vrot.lane.b32.xlu0 %v485, 40
    %v1361 = vpop.permute.xlu0 %1360
    %v1367 = vsel %vm565, %v1347, 0
    %v1370 = vsel %vm565, %v1348, 0
    %v1373 = vsel %vm565, %v1349, 0
    %v1376 = vsel %vm565, %v1350, 0
    %v1379 = vsel %vm565, %v1351, 0
    %v1381 = vsel %vm651, %v1361, 0
    %1383 = vmatpush.msra.mxu0 0.0
    %1384 = vmatpush.msra.mxu0 0.0
    %1385 = vmatpush.msra.mxu0 0.0
    %1386 = vmatpush.msra.mxu0 0.0
    %1387 = vmatpush.msra.mxu0 0.0
    %1388 = vmatpush.msra.mxu0 0.0
    %1389 = vmatpush.msra.mxu0 0.0
    %1390 = vmatpush.msra.mxu0 0.0
    %1391 = vmatpush.msra.mxu0 0.0
    %1392 = vmatpush.msra.mxu0 0.0
    %1393 = vmatpush.msra.mxu0 0.0
    %1394 = vmatpush.msra.mxu0 %v1381
    %1395 = vmatpush.msra.mxu0 %v1359
    %1396 = vmatpush.msra.mxu0 %v1357
    %1397 = vmatpush.msra.mxu0 %v1355
    %1398 = vmatpush.msra.mxu0 %v1353
    %1399 = vmatmul.f32.gmra.mxu0 %v1367
    %v1400 = vpop.f32.mrf.mxu0
    %v1401 = vadd.f32 0.0, %v1400
    %1402 = vmatmul.f32.gmra.mxu0 %v1370
    %v1403 = vpop.f32.mrf.mxu0
    %v1404 = vadd.f32 0.0, %v1403
    %1405 = vmatmul.f32.gmra.mxu0 %v1373
    %v1406 = vpop.f32.mrf.mxu0
    %v1407 = vadd.f32 0.0, %v1406
    %1408 = vmatmul.f32.gmra.mxu0 %v1376
    %v1409 = vpop.f32.mrf.mxu0
    %v1410 = vadd.f32 0.0, %v1409
    %1411 = vmatmul.f32.gmra.mxu0 %v1379
    %v1412 = vpop.f32.mrf.mxu0
    %v1413 = vadd.f32 0.0, %v1412
    %1414 = vdwg.mxu0
    %v1416 = vsel %vm507, %v1401, 0
    %v1419 = vsel %vm507, %v1404, 0
    %v1422 = vsel %vm507, %v1407, 0
    %v1425 = vsel %vm507, %v1410, 0
    %v1428 = vsel %vm507, %v1413, 0
    %1430 = vmatpush.msra.mxu0 0.0
    %1431 = vmatpush.msra.mxu0 0.0
    %1432 = vmatpush.msra.mxu0 0.0
    %1433 = vmatpush.msra.mxu0 0.0
    %1434 = vmatpush.msra.mxu0 0.0
    %1435 = vmatpush.msra.mxu0 0.0
    %1436 = vmatpush.msra.mxu0 0.0
    %1437 = vmatpush.msra.mxu0 0.0
    %1438 = vmatpush.msra.mxu0 0.0
    %1439 = vmatpush.msra.mxu0 0.0
    %1440 = vmatpush.msra.mxu0 0.0
    %1441 = vmatpush.msra.mxu0 0.0
    %1442 = vmatpush.msra.mxu0 0.0
    %1443 = vmatpush.msra.mxu0 0.0
    %1444 = vmatpush.msra.mxu0 0.0
    %1445 = vmatpush.msra.mxu0 %v285
    %1446 = vmatmul.f32.gmra.mxu0 %v1416
    %v1447 = vpop.f32.mrf.mxu0
    %v1448 = vadd.f32 0.0, %v1447
    %1449 = vmatmul.f32.gmra.mxu0 %v1419
    %v1450 = vpop.f32.mrf.mxu0
    %v1451 = vadd.f32 0.0, %v1450
    %1452 = vmatmul.f32.gmra.mxu0 %v1422
    %v1453 = vpop.f32.mrf.mxu0
    %v1454 = vadd.f32 0.0, %v1453
    %1455 = vmatmul.f32.gmra.mxu0 %v1425
    %v1456 = vpop.f32.mrf.mxu0
    %v1457 = vadd.f32 0.0, %v1456
    %1458 = vmatmul.f32.gmra.mxu0 %v1428
    %v1459 = vpop.f32.mrf.mxu0
    %v1460 = vadd.f32 0.0, %v1459
    %1461 = vdwg.mxu0
    %v1462 = vadd.f32 %v1220, %v1448
    %v1463 = vadd.f32 %v1221, %v1451
    %v1464 = vadd.f32 %v1222, %v1454
    %v1465 = vadd.f32 %v1223, %v1457
    %v1466 = vadd.f32 %v1224, %v1460
    %v1467 = vadd.f32 %v270, %v1462
    %v1468 = vadd.f32 %v271, %v1463
    %v1469 = vadd.f32 %v272, %v1464
    %v1470 = vadd.f32 %v273, %v1465
    %v1471 = vadd.f32 %v274, %v1466
    %v1472 = vsel %vm140, %v1467, 0.0
    %1473 = vadd.xlane.f32.xlu0 %v1472
    %v1474 = vpop.xlane.xlu0 %1473
    %v1475 = vsel %vm140, %v1468, 0.0
    %1476 = vadd.xlane.f32.xlu0 %v1475
    %v1477 = vpop.xlane.xlu0 %1476
    %v1478 = vsel %vm140, %v1469, 0.0
    %1479 = vadd.xlane.f32.xlu0 %v1478
    %v1480 = vpop.xlane.xlu0 %1479
    %v1481 = vsel %vm140, %v1470, 0.0
    %1482 = vadd.xlane.f32.xlu0 %v1481
    %v1483 = vpop.xlane.xlu0 %1482
    %v1484 = vsel %vm153, %v1471, 0.0
    %1485 = vadd.xlane.f32.xlu0 %v1484
    %v1486 = vpop.xlane.xlu0 %1485
    %v1487 = vmul.f32 %v1474, %v163
    %v1488 = vmul.f32 %v1477, %v163
    %v1489 = vmul.f32 %v1480, %v163
    %v1490 = vmul.f32 %v1483, %v163
    %v1491 = vmul.f32 %v1486, %v163
    %v1492 = vsub.f32 %v1467, %v1487
    %v1493 = vsub.f32 %v1468, %v1488
    %v1494 = vsub.f32 %v1469, %v1489
    %v1495 = vsub.f32 %v1470, %v1490
    %v1496 = vsub.f32 %v1471, %v1491
    %v1497 = vmul.f32 %v1492, %v1492
    %v1498 = vmul.f32 %v1493, %v1493
    %v1499 = vmul.f32 %v1494, %v1494
    %v1500 = vmul.f32 %v1495, %v1495
    %v1501 = vmul.f32 %v1496, %v1496
    %v1502 = vsel %vm140, %v1497, 0.0
    %1503 = vadd.xlane.f32.xlu0 %v1502
    %v1504 = vpop.xlane.xlu0 %1503
    %v1505 = vsel %vm140, %v1498, 0.0
    %1506 = vadd.xlane.f32.xlu0 %v1505
    %v1507 = vpop.xlane.xlu0 %1506
    %v1508 = vsel %vm140, %v1499, 0.0
    %1509 = vadd.xlane.f32.xlu0 %v1508
    %v1510 = vpop.xlane.xlu0 %1509
    %v1511 = vsel %vm140, %v1500, 0.0
    %1512 = vadd.xlane.f32.xlu0 %v1511
    %v1513 = vpop.xlane.xlu0 %1512
    %v1514 = vsel %vm153, %v1501, 0.0
    %1515 = vadd.xlane.f32.xlu0 %v1514
    %v1516 = vpop.xlane.xlu0 %1515
    %v1517 = vmul.f32 %v1504, %v163
    %v1518 = vmul.f32 %v1507, %v163
    %v1519 = vmul.f32 %v1510, %v163
    %v1520 = vmul.f32 %v1513, %v163
    %v1521 = vmul.f32 %v1516, %v163
    %v1522 = vadd.f32 %v1517, 1e-05
    %v1523 = vadd.f32 %v1518, 1e-05
    %v1524 = vadd.f32 %v1519, 1e-05
    %v1525 = vadd.f32 %v1520, 1e-05
    %v1526 = vadd.f32 %v1521, 1e-05
    %v1527 = vrsqrt.pop %v1522
    %v1528 = vmul.f32 %v1527, %v1522
    %v1529 = vmul.f32 %v1528, %v1527
    %v1530 = vmul.f32 0.5, %v1529
    %v1531 = vsub.f32 1.5, %v1530
    %v1532 = vmul.f32 %v1527, %v1531
    %vm1533 = vweird.f32 %v1522
    %vm1534 = vweird.f32 %v1527
    %vm1535 = vmor %vm1533, %vm1534
    %v1536 = vsel %vm1535, %v1527, %v1532
    %v1537 = vrsqrt.pop %v1523
    %v1538 = vmul.f32 %v1537, %v1523
    %v1539 = vmul.f32 %v1538, %v1537
    %v1540 = vmul.f32 0.5, %v1539
    %v1541 = vsub.f32 1.5, %v1540
    %v1542 = vmul.f32 %v1537, %v1541
    %vm1543 = vweird.f32 %v1523
    %vm1544 = vweird.f32 %v1537
    %vm1545 = vmor %vm1543, %vm1544
    %v1546 = vsel %vm1545, %v1537, %v1542
    %v1547 = vrsqrt.pop %v1524
    %v1548 = vmul.f32 %v1547, %v1524
    %v1549 = vmul.f32 %v1548, %v1547
    %v1550 = vmul.f32 0.5, %v1549
    %v1551 = vsub.f32 1.5, %v1550
    %v1552 = vmul.f32 %v1547, %v1551
    %vm1553 = vweird.f32 %v1524
    %vm1554 = vweird.f32 %v1547
    %vm1555 = vmor %vm1553, %vm1554
    %v1556 = vsel %vm1555, %v1547, %v1552
    %v1557 = vrsqrt.pop %v1525
    %v1558 = vmul.f32 %v1557, %v1525
    %v1559 = vmul.f32 %v1558, %v1557
    %v1560 = vmul.f32 0.5, %v1559
    %v1561 = vsub.f32 1.5, %v1560
    %v1562 = vmul.f32 %v1557, %v1561
    %vm1563 = vweird.f32 %v1525
    %vm1564 = vweird.f32 %v1557
    %vm1565 = vmor %vm1563, %vm1564
    %v1566 = vsel %vm1565, %v1557, %v1562
    %v1567 = vrsqrt.pop %v1526
    %v1568 = vmul.f32 %v1567, %v1526
    %v1569 = vmul.f32 %v1568, %v1567
    %v1570 = vmul.f32 0.5, %v1569
    %v1571 = vsub.f32 1.5, %v1570
    %v1572 = vmul.f32 %v1567, %v1571
    %vm1573 = vweird.f32 %v1526
    %vm1574 = vweird.f32 %v1567
    %vm1575 = vmor %vm1573, %vm1574
    %v1576 = vsel %vm1575, %v1567, %v1572
    %v1577 = vmul.f32 %v1492, %v1536
    %v1578 = vmul.f32 %v1493, %v1546
    %v1579 = vmul.f32 %v1494, %v1556
    %v1580 = vmul.f32 %v1495, %v1566
    %v1581 = vmul.f32 %v1496, %v1576
    %v1583 = vperm.slane %v287, 0
    %v1585 = vmul.f32 %v1577, %v1583
    %v1586 = vmul.f32 %v1578, %v1583
    %v1587 = vmul.f32 %v1579, %v1583
    %v1588 = vmul.f32 %v1580, %v1583
    %v1589 = vmul.f32 %v1581, %v1583
    %v1591 = vperm.slane %v288, 0
    %v1593 = vadd.f32 %v1585, %v1591
    %v1594 = vadd.f32 %v1586, %v1591
    %v1595 = vadd.f32 %v1587, %v1591
    %v1596 = vadd.f32 %v1588, %v1591
    %v1597 = vadd.f32 %v1589, %v1591
    %v1599 = vperm.slane %v293, 0
    %v1602 = vsel %vm140, %v1593, 0
    %v1605 = vsel %vm140, %v1594, 0
    %v1608 = vsel %vm140, %v1595, 0
    %v1611 = vsel %vm140, %v1596, 0
    %v1614 = vsel %vm140, %v1597, 0
    %1616 = vmatpush.msra.mxu0 0.0
    %1617 = vmatpush.msra.mxu0 0.0
    %1618 = vmatpush.msra.mxu0 0.0
    %1619 = vmatpush.msra.mxu0 0.0
    %1620 = vmatpush.msra.mxu0 0.0
    %1621 = vmatpush.msra.mxu0 0.0
    %1622 = vmatpush.msra.mxu0 0.0
    %1623 = vmatpush.msra.mxu0 0.0
    %1624 = vmatpush.msra.mxu0 0.0
    %1625 = vmatpush.msra.mxu0 0.0
    %1626 = vmatpush.msra.mxu0 0.0
    %1627 = vmatpush.msra.mxu0 0.0
    %1628 = vmatpush.msra.mxu0 %v292
    %1629 = vmatpush.msra.mxu0 %v291
    %1630 = vmatpush.msra.mxu0 %v290
    %1631 = vmatpush.msra.mxu0 %v289
    %1632 = vmatmul.f32.gmra.mxu0 %v1602
    %v1633 = vpop.f32.mrf.mxu0
    %v1634 = vadd.f32 %v1599, %v1633
    %1635 = vmatmul.f32.gmra.mxu0 %v1605
    %v1636 = vpop.f32.mrf.mxu0
    %v1637 = vadd.f32 %v1599, %v1636
    %1638 = vmatmul.f32.gmra.mxu0 %v1608
    %v1639 = vpop.f32.mrf.mxu0
    %v1640 = vadd.f32 %v1599, %v1639
    %1641 = vmatmul.f32.gmra.mxu0 %v1611
    %v1642 = vpop.f32.mrf.mxu0
    %v1643 = vadd.f32 %v1599, %v1642
    %1644 = vmatmul.f32.gmra.mxu0 %v1614
    %v1645 = vpop.f32.mrf.mxu0
    %v1646 = vadd.f32 %v1599, %v1645
    %1647 = vdwg.mxu0
    %v1648 = vmul.f32 %v1634, 1.702
    %v1649 = vmul.f32 %v1637, 1.702
    %v1650 = vmul.f32 %v1640, 1.702
    %v1651 = vmul.f32 %v1643, 1.702
    %v1652 = vmul.f32 %v1646, 1.702
    %v1653 = vxor.u32 %v1648, 2147483648
    %v1654 = vxor.u32 %v1649, 2147483648
    %v1655 = vxor.u32 %v1650, 2147483648
    %v1656 = vxor.u32 %v1651, 2147483648
    %v1657 = vxor.u32 %v1652, 2147483648
    %v1658 = vmul.f32 %v1653, 1.442695
    %v1659 = vpow.pop %v1658
    %v1660 = vmul.f32 %v1654, 1.442695
    %v1661 = vpow.pop %v1660
    %v1662 = vmul.f32 %v1655, 1.442695
    %v1663 = vpow.pop %v1662
    %v1664 = vmul.f32 %v1656, 1.442695
    %v1665 = vpow.pop %v1664
    %v1666 = vmul.f32 %v1657, 1.442695
    %v1667 = vpow.pop %v1666
    %v1668 = vadd.f32 %v1659, 1.0
    %v1669 = vadd.f32 %v1661, 1.0
    %v1670 = vadd.f32 %v1663, 1.0
    %v1671 = vadd.f32 %v1665, 1.0
    %v1672 = vadd.f32 %v1667, 1.0
    %v1673 = vrcp.pop %v1668
    %v1674 = vmul.f32 %v1668, %v1673
    %v1675 = vsub.f32 1.0, %v1674
    %v1676 = vmul.f32 %v1673, %v1675
    %v1677 = vadd.f32 %v1673, %v1676
    %vm1678 = vweird.f32 %v1668
    %vm1679 = vweird.f32 %v1673
    %vm1680 = vmor %vm1678, %vm1679
    %v1681 = vsel %vm1680, %v1673, %v1677
    %v1682 = vand.u32 2147483647, %v1668
    %vm1683 = vcmp.eq.f32.partialorder %v1682, 8.507059e+37
    %v1684 = vand.u32 %v1668, 2147483648
    %v1685 = vor.u32 1.1754944e-38, %v1684
    %v1686 = vsel %vm1683, %v1685, %v1681
    %v1687 = vmul.f32 1.0, %v1686
    %v1688 = vrcp.pop %v1669
    %v1689 = vmul.f32 %v1669, %v1688
    %v1690 = vsub.f32 1.0, %v1689
    %v1691 = vmul.f32 %v1688, %v1690
    %v1692 = vadd.f32 %v1688, %v1691
    %vm1693 = vweird.f32 %v1669
    %vm1694 = vweird.f32 %v1688
    %vm1695 = vmor %vm1693, %vm1694
    %v1696 = vsel %vm1695, %v1688, %v1692
    %v1697 = vand.u32 2147483647, %v1669
    %vm1698 = vcmp.eq.f32.partialorder %v1697, 8.507059e+37
    %v1699 = vand.u32 %v1669, 2147483648
    %v1700 = vor.u32 1.1754944e-38, %v1699
    %v1701 = vsel %vm1698, %v1700, %v1696
    %v1702 = vmul.f32 1.0, %v1701
    %v1703 = vrcp.pop %v1670
    %v1704 = vmul.f32 %v1670, %v1703
    %v1705 = vsub.f32 1.0, %v1704
    %v1706 = vmul.f32 %v1703, %v1705
    %v1707 = vadd.f32 %v1703, %v1706
    %vm1708 = vweird.f32 %v1670
    %vm1709 = vweird.f32 %v1703
    %vm1710 = vmor %vm1708, %vm1709
    %v1711 = vsel %vm1710, %v1703, %v1707
    %v1712 = vand.u32 2147483647, %v1670
    %vm1713 = vcmp.eq.f32.partialorder %v1712, 8.507059e+37
    %v1714 = vand.u32 %v1670, 2147483648
    %v1715 = vor.u32 1.1754944e-38, %v1714
    %v1716 = vsel %vm1713, %v1715, %v1711
    %v1717 = vmul.f32 1.0, %v1716
    %v1718 = vrcp.pop %v1671
    %v1719 = vmul.f32 %v1671, %v1718
    %v1720 = vsub.f32 1.0, %v1719
    %v1721 = vmul.f32 %v1718, %v1720
    %v1722 = vadd.f32 %v1718, %v1721
    %vm1723 = vweird.f32 %v1671
    %vm1724 = vweird.f32 %v1718
    %vm1725 = vmor %vm1723, %vm1724
    %v1726 = vsel %vm1725, %v1718, %v1722
    %v1727 = vand.u32 2147483647, %v1671
    %vm1728 = vcmp.eq.f32.partialorder %v1727, 8.507059e+37
    %v1729 = vand.u32 %v1671, 2147483648
    %v1730 = vor.u32 1.1754944e-38, %v1729
    %v1731 = vsel %vm1728, %v1730, %v1726
    %v1732 = vmul.f32 1.0, %v1731
    %v1733 = vrcp.pop %v1672
    %v1734 = vmul.f32 %v1672, %v1733
    %v1735 = vsub.f32 1.0, %v1734
    %v1736 = vmul.f32 %v1733, %v1735
    %v1737 = vadd.f32 %v1733, %v1736
    %vm1738 = vweird.f32 %v1672
    %vm1739 = vweird.f32 %v1733
    %vm1740 = vmor %vm1738, %vm1739
    %v1741 = vsel %vm1740, %v1733, %v1737
    %v1742 = vand.u32 2147483647, %v1672
    %vm1743 = vcmp.eq.f32.partialorder %v1742, 8.507059e+37
    %v1744 = vand.u32 %v1672, 2147483648
    %v1745 = vor.u32 1.1754944e-38, %v1744
    %v1746 = vsel %vm1743, %v1745, %v1741
    %v1747 = vmul.f32 1.0, %v1746
    %v1748 = vmul.f32 %v1634, %v1687
    %v1749 = vmul.f32 %v1637, %v1702
    %v1750 = vmul.f32 %v1640, %v1717
    %v1751 = vmul.f32 %v1643, %v1732
    %v1752 = vmul.f32 %v1646, %v1747
    %1753 = vmatpush.msra.mxu0 %v309
    %1754 = vmatpush.msra.mxu0 %v308
    %1755 = vmatpush.msra.mxu0 %v307
    %1756 = vmatpush.msra.mxu0 %v306
    %1757 = vmatpush.msra.mxu0 %v305
    %1758 = vmatpush.msra.mxu0 %v304
    %1759 = vmatpush.msra.mxu0 %v303
    %1760 = vmatpush.msra.mxu0 %v302
    %1761 = vmatpush.msra.mxu0 %v301
    %1762 = vmatpush.msra.mxu0 %v300
    %1763 = vmatpush.msra.mxu0 %v299
    %1764 = vmatpush.msra.mxu0 %v298
    %1765 = vmatpush.msra.mxu0 %v297
    %1766 = vmatpush.msra.mxu0 %v296
    %1767 = vmatpush.msra.mxu0 %v295
    %1768 = vmatpush.msra.mxu0 %v294
    %1769 = vmatmul.f32.gmra.mxu0 %v1748
    %v1770 = vpop.f32.mrf.mxu0
    %v1771 = vadd.f32 0.0, %v1770
    %1772 = vmatmul.f32.gmra.mxu0 %v1749
    %v1773 = vpop.f32.mrf.mxu0
    %v1774 = vadd.f32 0.0, %v1773
    %1775 = vmatmul.f32.gmra.mxu0 %v1750
    %v1776 = vpop.f32.mrf.mxu0
    %v1777 = vadd.f32 0.0, %v1776
    %1778 = vmatmul.f32.gmra.mxu0 %v1751
    %v1779 = vpop.f32.mrf.mxu0
    %v1780 = vadd.f32 0.0, %v1779
    %1781 = vmatmul.f32.gmra.mxu0 %v1752
    %v1782 = vpop.f32.mrf.mxu0
    %v1783 = vadd.f32 0.0, %v1782
    %1784 = vdwg.mxu0
    %v1785 = vadd.f32 %v1467, %v1771
    %v1786 = vadd.f32 %v1468, %v1774
    %v1787 = vadd.f32 %v1469, %v1777
    %v1788 = vadd.f32 %v1470, %v1780
    %v1789 = vadd.f32 %v1471, %v1783
    %v1791 = vperm.slane %v310, 0
    %v1793 = vadd.f32 %v1785, %v1791
    %v1794 = vadd.f32 %v1786, %v1791
    %v1795 = vadd.f32 %v1787, %v1791
    %v1796 = vadd.f32 %v1788, %v1791
    %v1797 = vadd.f32 %v1789, %v1791
    %s1798 = scalar_lea.vmem %s6, 1
    %v1799 = vld [vmem:[%s1798] sm:$0x1]
    %s1800 = scalar_lea.vmem %s7, 1
    %v1801 = vld [vmem:[%s1800] sm:$0x1]
    %s1802 = scalar_lea.vmem %s8, 32
    %v1803 = vld [vmem:[%s1802] sm:$0xff]
    %v1804 = vld [vmem:[%s1802 + $0x8] sm:$0xff]
    %v1805 = vld [vmem:[%s1802 + $0x10] sm:$0xff]
    %v1806 = vld [vmem:[%s1802 + $0x18] sm:$0xff]
    %s1807 = scalar_lea.vmem %s9, 1
    %v1808 = vld [vmem:[%s1807] sm:$0x1]
    %s1809 = scalar_lea.vmem %s10, 32
    %v1810 = vld [vmem:[%s1809] sm:$0xff]
    %v1811 = vld [vmem:[%s1809 + $0x8] sm:$0xff]
    %v1812 = vld [vmem:[%s1809 + $0x10] sm:$0xff]
    %v1813 = vld [vmem:[%s1809 + $0x18] sm:$0xff]
    %s1814 = scalar_lea.vmem %s11, 1
    %v1815 = vld [vmem:[%s1814] sm:$0x1]
    %s1816 = scalar_lea.vmem %s12, 1
    %v1817 = vld [vmem:[%s1816] sm:$0x1]
    %s1818 = scalar_lea.vmem %s13, 1
    %v1819 = vld [vmem:[%s1818] sm:$0x1]
    %s1820 = scalar_lea.vmem %s14, 32
    %v1821 = vld [vmem:[%s1820] sm:$0xff]
    %v1822 = vld [vmem:[%s1820 + $0x8] sm:$0xff]
    %v1823 = vld [vmem:[%s1820 + $0x10] sm:$0xff]
    %v1824 = vld [vmem:[%s1820 + $0x18] sm:$0xff]
    %s1825 = scalar_lea.vmem %s15, 1
    %v1826 = vld [vmem:[%s1825] sm:$0x1]
    %s1827 = scalar_lea.vmem %s16, 128
    %v1828 = vld [vmem:[%s1827] sm:$0xff]
    %v1829 = vld [vmem:[%s1827 + $0x8] sm:$0xff]
    %v1830 = vld [vmem:[%s1827 + $0x10] sm:$0xff]
    %v1831 = vld [vmem:[%s1827 + $0x18] sm:$0xff]
    %v1832 = vld [vmem:[%s1827 + $0x20] sm:$0xff]
    %v1833 = vld [vmem:[%s1827 + $0x28] sm:$0xff]
    %v1834 = vld [vmem:[%s1827 + $0x30] sm:$0xff]
    %v1835 = vld [vmem:[%s1827 + $0x38] sm:$0xff]
    %v1836 = vld [vmem:[%s1827 + $0x40] sm:$0xff]
    %v1837 = vld [vmem:[%s1827 + $0x48] sm:$0xff]
    %v1838 = vld [vmem:[%s1827 + $0x50] sm:$0xff]
    %v1839 = vld [vmem:[%s1827 + $0x58] sm:$0xff]
    %v1840 = vld [vmem:[%s1827 + $0x60] sm:$0xff]
    %v1841 = vld [vmem:[%s1827 + $0x68] sm:$0xff]
    %v1842 = vld [vmem:[%s1827 + $0x70] sm:$0xff]
    %v1843 = vld [vmem:[%s1827 + $0x78] sm:$0xff]
    %s1844 = scalar_lea.vmem %s17, 1
    %v1845 = vld [vmem:[%s1844] sm:$0x1]
    %v1846 = vsel %vm140, %v1793, 0.0
    %1847 = vadd.xlane.f32.xlu0 %v1846
    %v1848 = vpop.xlane.xlu0 %1847
    %v1849 = vsel %vm140, %v1794, 0.0
    %1850 = vadd.xlane.f32.xlu0 %v1849
    %v1851 = vpop.xlane.xlu0 %1850
    %v1852 = vsel %vm140, %v1795, 0.0
    %1853 = vadd.xlane.f32.xlu0 %v1852
    %v1854 = vpop.xlane.xlu0 %1853
    %v1855 = vsel %vm140, %v1796, 0.0
    %1856 = vadd.xlane.f32.xlu0 %v1855
    %v1857 = vpop.xlane.xlu0 %1856
    %v1858 = vsel %vm153, %v1797, 0.0
    %1859 = vadd.xlane.f32.xlu0 %v1858
    %v1860 = vpop.xlane.xlu0 %1859
    %v1861 = vmul.f32 %v1848, %v163
    %v1862 = vmul.f32 %v1851, %v163
    %v1863 = vmul.f32 %v1854, %v163
    %v1864 = vmul.f32 %v1857, %v163
    %v1865 = vmul.f32 %v1860, %v163
    %v1866 = vsub.f32 %v1793, %v1861
    %v1867 = vsub.f32 %v1794, %v1862
    %v1868 = vsub.f32 %v1795, %v1863
    %v1869 = vsub.f32 %v1796, %v1864
    %v1870 = vsub.f32 %v1797, %v1865
    %v1871 = vmul.f32 %v1866, %v1866
    %v1872 = vmul.f32 %v1867, %v1867
    %v1873 = vmul.f32 %v1868, %v1868
    %v1874 = vmul.f32 %v1869, %v1869
    %v1875 = vmul.f32 %v1870, %v1870
    %v1876 = vsel %vm140, %v1871, 0.0
    %1877 = vadd.xlane.f32.xlu0 %v1876
    %v1878 = vpop.xlane.xlu0 %1877
    %v1879 = vsel %vm140, %v1872, 0.0
    %1880 = vadd.xlane.f32.xlu0 %v1879
    %v1881 = vpop.xlane.xlu0 %1880
    %v1882 = vsel %vm140, %v1873, 0.0
    %1883 = vadd.xlane.f32.xlu0 %v1882
    %v1884 = vpop.xlane.xlu0 %1883
    %v1885 = vsel %vm140, %v1874, 0.0
    %1886 = vadd.xlane.f32.xlu0 %v1885
    %v1887 = vpop.xlane.xlu0 %1886
    %v1888 = vsel %vm153, %v1875, 0.0
    %1889 = vadd.xlane.f32.xlu0 %v1888
    %v1890 = vpop.xlane.xlu0 %1889
    %v1891 = vmul.f32 %v1878, %v163
    %v1892 = vmul.f32 %v1881, %v163
    %v1893 = vmul.f32 %v1884, %v163
    %v1894 = vmul.f32 %v1887, %v163
    %v1895 = vmul.f32 %v1890, %v163
    %v1896 = vadd.f32 %v1891, 1e-05
    %v1897 = vadd.f32 %v1892, 1e-05
    %v1898 = vadd.f32 %v1893, 1e-05
    %v1899 = vadd.f32 %v1894, 1e-05
    %v1900 = vadd.f32 %v1895, 1e-05
    %v1901 = vrsqrt.pop %v1896
    %v1902 = vmul.f32 %v1901, %v1896
    %v1903 = vmul.f32 %v1902, %v1901
    %v1904 = vmul.f32 0.5, %v1903
    %v1905 = vsub.f32 1.5, %v1904
    %v1906 = vmul.f32 %v1901, %v1905
    %vm1907 = vweird.f32 %v1896
    %vm1908 = vweird.f32 %v1901
    %vm1909 = vmor %vm1907, %vm1908
    %v1910 = vsel %vm1909, %v1901, %v1906
    %v1911 = vrsqrt.pop %v1897
    %v1912 = vmul.f32 %v1911, %v1897
    %v1913 = vmul.f32 %v1912, %v1911
    %v1914 = vmul.f32 0.5, %v1913
    %v1915 = vsub.f32 1.5, %v1914
    %v1916 = vmul.f32 %v1911, %v1915
    %vm1917 = vweird.f32 %v1897
    %vm1918 = vweird.f32 %v1911
    %vm1919 = vmor %vm1917, %vm1918
    %v1920 = vsel %vm1919, %v1911, %v1916
    %v1921 = vrsqrt.pop %v1898
    %v1922 = vmul.f32 %v1921, %v1898
    %v1923 = vmul.f32 %v1922, %v1921
    %v1924 = vmul.f32 0.5, %v1923
    %v1925 = vsub.f32 1.5, %v1924
    %v1926 = vmul.f32 %v1921, %v1925
    %vm1927 = vweird.f32 %v1898
    %vm1928 = vweird.f32 %v1921
    %vm1929 = vmor %vm1927, %vm1928
    %v1930 = vsel %vm1929, %v1921, %v1926
    %v1931 = vrsqrt.pop %v1899
    %v1932 = vmul.f32 %v1931, %v1899
    %v1933 = vmul.f32 %v1932, %v1931
    %v1934 = vmul.f32 0.5, %v1933
    %v1935 = vsub.f32 1.5, %v1934
    %v1936 = vmul.f32 %v1931, %v1935
    %vm1937 = vweird.f32 %v1899
    %vm1938 = vweird.f32 %v1931
    %vm1939 = vmor %vm1937, %vm1938
    %v1940 = vsel %vm1939, %v1931, %v1936
    %v1941 = vrsqrt.pop %v1900
    %v1942 = vmul.f32 %v1941, %v1900
    %v1943 = vmul.f32 %v1942, %v1941
    %v1944 = vmul.f32 0.5, %v1943
    %v1945 = vsub.f32 1.5, %v1944
    %v1946 = vmul.f32 %v1941, %v1945
    %vm1947 = vweird.f32 %v1900
    %vm1948 = vweird.f32 %v1941
    %vm1949 = vmor %vm1947, %vm1948
    %v1950 = vsel %vm1949, %v1941, %v1946
    %v1951 = vmul.f32 %v1866, %v1910
    %v1952 = vmul.f32 %v1867, %v1920
    %v1953 = vmul.f32 %v1868, %v1930
    %v1954 = vmul.f32 %v1869, %v1940
    %v1955 = vmul.f32 %v1870, %v1950
    %v1957 = vperm.slane %v1799, 0
    %v1959 = vmul.f32 %v1951, %v1957
    %v1960 = vmul.f32 %v1952, %v1957
    %v1961 = vmul.f32 %v1953, %v1957
    %v1962 = vmul.f32 %v1954, %v1957
    %v1963 = vmul.f32 %v1955, %v1957
    %v1965 = vperm.slane %v1801, 0
    %v1967 = vadd.f32 %v1959, %v1965
    %v1968 = vadd.f32 %v1960, %v1965
    %v1969 = vadd.f32 %v1961, %v1965
    %v1970 = vadd.f32 %v1962, %v1965
    %v1971 = vadd.f32 %v1963, %v1965
    %v1973 = vperm.slane %v1808, 0
    %v1976 = vsel %vm140, %v1967, 0
    %v1979 = vsel %vm140, %v1968, 0
    %v1982 = vsel %vm140, %v1969, 0
    %v1985 = vsel %vm140, %v1970, 0
    %v1988 = vsel %vm140, %v1971, 0
    %1990 = vmatpush.msra.mxu0 0.0
    %1991 = vmatpush.msra.mxu0 0.0
    %1992 = vmatpush.msra.mxu0 0.0
    %1993 = vmatpush.msra.mxu0 0.0
    %1994 = vmatpush.msra.mxu0 0.0
    %1995 = vmatpush.msra.mxu0 0.0
    %1996 = vmatpush.msra.mxu0 0.0
    %1997 = vmatpush.msra.mxu0 0.0
    %1998 = vmatpush.msra.mxu0 0.0
    %1999 = vmatpush.msra.mxu0 0.0
    %2000 = vmatpush.msra.mxu0 0.0
    %2001 = vmatpush.msra.mxu0 0.0
    %2002 = vmatpush.msra.mxu0 %v1806
    %2003 = vmatpush.msra.mxu0 %v1805
    %2004 = vmatpush.msra.mxu0 %v1804
    %2005 = vmatpush.msra.mxu0 %v1803
    %2006 = vmatmul.f32.gmra.mxu0 %v1976
    %v2007 = vpop.f32.mrf.mxu0
    %v2008 = vadd.f32 %v1973, %v2007
    %2009 = vmatmul.f32.gmra.mxu0 %v1979
    %v2010 = vpop.f32.mrf.mxu0
    %v2011 = vadd.f32 %v1973, %v2010
    %2012 = vmatmul.f32.gmra.mxu0 %v1982
    %v2013 = vpop.f32.mrf.mxu0
    %v2014 = vadd.f32 %v1973, %v2013
    %2015 = vmatmul.f32.gmra.mxu0 %v1985
    %v2016 = vpop.f32.mrf.mxu0
    %v2017 = vadd.f32 %v1973, %v2016
    %2018 = vmatmul.f32.gmra.mxu0 %v1988
    %v2019 = vpop.f32.mrf.mxu0
    %v2020 = vadd.f32 %v1973, %v2019
    %2021 = vdwg.mxu0
    %v2022 = vmul.f32 %v2008, 0.35355338
    %v2023 = vmul.f32 %v2011, 0.35355338
    %v2024 = vmul.f32 %v2014, 0.35355338
    %v2025 = vmul.f32 %v2017, 0.35355338
    %v2026 = vmul.f32 %v2020, 0.35355338
    %2032 = vrot.lane.b32.xlu0 %v2008, 96
    %v2033 = vpop.permute.xlu0 %2032
    %2034 = vrot.lane.b32.xlu0 %v2011, 96
    %v2035 = vpop.permute.xlu0 %2034
    %2036 = vrot.lane.b32.xlu0 %v2014, 96
    %v2037 = vpop.permute.xlu0 %2036
    %2038 = vrot.lane.b32.xlu0 %v2017, 96
    %v2039 = vpop.permute.xlu0 %2038
    %2040 = vrot.lane.b32.xlu0 %v2020, 96
    %v2041 = vpop.permute.xlu0 %2040
    %v2043 = vsel %vm507, %v2022, 0
    %v2046 = vsel %vm507, %v2023, 0
    %v2049 = vsel %vm507, %v2024, 0
    %v2052 = vsel %vm507, %v2025, 0
    %v2055 = vsel %vm507, %v2026, 0
    %v2057 = vsel %vm507, %v2033, 0
    %v2059 = vsel %vm507, %v2035, 0
    %v2061 = vsel %vm507, %v2037, 0
    %v2063 = vsel %vm507, %v2039, 0
    %v2065 = vsel %vm507, %v2041, 0
    %2067 = vmatpush.xpose.msra.mxu0 0.0
    %2068 = vmatpush.xpose.msra.mxu0 0.0
    %2069 = vmatpush.xpose.msra.mxu0 0.0
    %2070 = vmatpush.xpose.msra.mxu0 0.0
    %2071 = vmatpush.xpose.msra.mxu0 0.0
    %2072 = vmatpush.xpose.msra.mxu0 0.0
    %2073 = vmatpush.xpose.msra.mxu0 0.0
    %2074 = vmatpush.xpose.msra.mxu0 0.0
    %2075 = vmatpush.xpose.msra.mxu0 0.0
    %2076 = vmatpush.xpose.msra.mxu0 0.0
    %2077 = vmatpush.xpose.msra.mxu0 0.0
    %2078 = vmatpush.xpose.msra.mxu0 %v2065
    %2079 = vmatpush.xpose.msra.mxu0 %v2063
    %2080 = vmatpush.xpose.msra.mxu0 %v2061
    %2081 = vmatpush.xpose.msra.mxu0 %v2059
    %2082 = vmatpush.xpose.msra.mxu0 %v2057
    %2083 = vmatmul.f32.gmra.mxu0 %v2043
    %v2084 = vpop.f32.mrf.mxu0
    %v2085 = vadd.f32 %v69, %v2084
    %2086 = vmatmul.f32.gmra.mxu0 %v2046
    %v2087 = vpop.f32.mrf.mxu0
    %v2088 = vadd.f32 %v70, %v2087
    %2089 = vmatmul.f32.gmra.mxu0 %v2049
    %v2090 = vpop.f32.mrf.mxu0
    %v2091 = vadd.f32 %v71, %v2090
    %2092 = vmatmul.f32.gmra.mxu0 %v2052
    %v2093 = vpop.f32.mrf.mxu0
    %v2094 = vadd.f32 %v72, %v2093
    %2095 = vmatmul.f32.gmra.mxu0 %v2055
    %v2096 = vpop.f32.mrf.mxu0
    %v2097 = vadd.f32 %v73, %v2096
    %2098 = vdwg.mxu0
    %v2099 = vsel %vm565, %v2085, -inf
    %2100 = vmax.xlane.f32.xlu0 %v2099
    %v2101 = vpop.xlane.xlu0 %2100
    %v2102 = vsel %vm565, %v2088, -inf
    %2103 = vmax.xlane.f32.xlu0 %v2102
    %v2104 = vpop.xlane.xlu0 %2103
    %v2105 = vsel %vm565, %v2091, -inf
    %2106 = vmax.xlane.f32.xlu0 %v2105
    %v2107 = vpop.xlane.xlu0 %2106
    %v2108 = vsel %vm565, %v2094, -inf
    %2109 = vmax.xlane.f32.xlu0 %v2108
    %v2110 = vpop.xlane.xlu0 %2109
    %v2111 = vsel %vm578, %v2097, -inf
    %2112 = vmax.xlane.f32.xlu0 %v2111
    %v2113 = vpop.xlane.xlu0 %2112
    %v2114 = vsub.f32 %v2085, %v2101
    %v2115 = vsub.f32 %v2088, %v2104
    %v2116 = vsub.f32 %v2091, %v2107
    %v2117 = vsub.f32 %v2094, %v2110
    %v2118 = vsub.f32 %v2097, %v2113
    %v2119 = vmul.f32 %v2114, 1.442695
    %v2120 = vpow.pop %v2119
    %v2121 = vmul.f32 %v2115, 1.442695
    %v2122 = vpow.pop %v2121
    %v2123 = vmul.f32 %v2116, 1.442695
    %v2124 = vpow.pop %v2123
    %v2125 = vmul.f32 %v2117, 1.442695
    %v2126 = vpow.pop %v2125
    %v2127 = vmul.f32 %v2118, 1.442695
    %v2128 = vpow.pop %v2127
    %v2129 = vsel %vm565, %v2120, 0.0
    %2130 = vadd.xlane.f32.xlu0 %v2129
    %v2131 = vpop.xlane.xlu0 %2130
    %v2132 = vsel %vm565, %v2122, 0.0
    %2133 = vadd.xlane.f32.xlu0 %v2132
    %v2134 = vpop.xlane.xlu0 %2133
    %v2135 = vsel %vm565, %v2124, 0.0
    %2136 = vadd.xlane.f32.xlu0 %v2135
    %v2137 = vpop.xlane.xlu0 %2136
    %v2138 = vsel %vm565, %v2126, 0.0
    %2139 = vadd.xlane.f32.xlu0 %v2138
    %v2140 = vpop.xlane.xlu0 %2139
    %v2141 = vsel %vm578, %v2128, 0.0
    %2142 = vadd.xlane.f32.xlu0 %v2141
    %v2143 = vpop.xlane.xlu0 %2142
    %v2144 = vrcp.pop %v2131
    %v2145 = vrcp.pop %v2134
    %v2146 = vrcp.pop %v2137
    %v2147 = vrcp.pop %v2140
    %v2148 = vrcp.pop %v2143
    %v2149 = vmul.f32 %v2120, %v2144
    %v2150 = vmul.f32 %v2122, %v2145
    %v2151 = vmul.f32 %v2124, %v2146
    %v2152 = vmul.f32 %v2126, %v2147
    %v2153 = vmul.f32 %v2128, %v2148
    %2154 = vrot.lane.b32.xlu0 %v2008, 64
    %v2155 = vpop.permute.xlu0 %2154
    %2156 = vrot.lane.b32.xlu0 %v2011, 64
    %v2157 = vpop.permute.xlu0 %2156
    %2158 = vrot.lane.b32.xlu0 %v2014, 64
    %v2159 = vpop.permute.xlu0 %2158
    %2160 = vrot.lane.b32.xlu0 %v2017, 64
    %v2161 = vpop.permute.xlu0 %2160
    %2162 = vrot.lane.b32.xlu0 %v2020, 64
    %v2163 = vpop.permute.xlu0 %2162
    %v2169 = vsel %vm565, %v2149, 0
    %v2172 = vsel %vm565, %v2150, 0
    %v2175 = vsel %vm565, %v2151, 0
    %v2178 = vsel %vm565, %v2152, 0
    %v2181 = vsel %vm565, %v2153, 0
    %v2183 = vsel %vm651, %v2163, 0
    %2185 = vmatpush.msra.mxu0 0.0
    %2186 = vmatpush.msra.mxu0 0.0
    %2187 = vmatpush.msra.mxu0 0.0
    %2188 = vmatpush.msra.mxu0 0.0
    %2189 = vmatpush.msra.mxu0 0.0
    %2190 = vmatpush.msra.mxu0 0.0
    %2191 = vmatpush.msra.mxu0 0.0
    %2192 = vmatpush.msra.mxu0 0.0
    %2193 = vmatpush.msra.mxu0 0.0
    %2194 = vmatpush.msra.mxu0 0.0
    %2195 = vmatpush.msra.mxu0 0.0
    %2196 = vmatpush.msra.mxu0 %v2183
    %2197 = vmatpush.msra.mxu0 %v2161
    %2198 = vmatpush.msra.mxu0 %v2159
    %2199 = vmatpush.msra.mxu0 %v2157
    %2200 = vmatpush.msra.mxu0 %v2155
    %2201 = vmatmul.f32.gmra.mxu0 %v2169
    %v2202 = vpop.f32.mrf.mxu0
    %v2203 = vadd.f32 0.0, %v2202
    %2204 = vmatmul.f32.gmra.mxu0 %v2172
    %v2205 = vpop.f32.mrf.mxu0
    %v2206 = vadd.f32 0.0, %v2205
    %2207 = vmatmul.f32.gmra.mxu0 %v2175
    %v2208 = vpop.f32.mrf.mxu0
    %v2209 = vadd.f32 0.0, %v2208
    %2210 = vmatmul.f32.gmra.mxu0 %v2178
    %v2211 = vpop.f32.mrf.mxu0
    %v2212 = vadd.f32 0.0, %v2211
    %2213 = vmatmul.f32.gmra.mxu0 %v2181
    %v2214 = vpop.f32.mrf.mxu0
    %v2215 = vadd.f32 0.0, %v2214
    %2216 = vdwg.mxu0
    %v2218 = vsel %vm507, %v2203, 0
    %v2221 = vsel %vm507, %v2206, 0
    %v2224 = vsel %vm507, %v2209, 0
    %v2227 = vsel %vm507, %v2212, 0
    %v2230 = vsel %vm507, %v2215, 0
    %2232 = vmatpush.msra.mxu0 0.0
    %2233 = vmatpush.msra.mxu0 0.0
    %2234 = vmatpush.msra.mxu0 0.0
    %2235 = vmatpush.msra.mxu0 0.0
    %2236 = vmatpush.msra.mxu0 0.0
    %2237 = vmatpush.msra.mxu0 0.0
    %2238 = vmatpush.msra.mxu0 0.0
    %2239 = vmatpush.msra.mxu0 0.0
    %2240 = vmatpush.msra.mxu0 0.0
    %2241 = vmatpush.msra.mxu0 0.0
    %2242 = vmatpush.msra.mxu0 0.0
    %2243 = vmatpush.msra.mxu0 0.0
    %2244 = vmatpush.msra.mxu0 0.0
    %2245 = vmatpush.msra.mxu0 0.0
    %2246 = vmatpush.msra.mxu0 0.0
    %2247 = vmatpush.msra.mxu0 %v1810
    %2248 = vmatmul.f32.gmra.mxu0 %v2218
    %v2249 = vpop.f32.mrf.mxu0
    %v2250 = vadd.f32 0.0, %v2249
    %2251 = vmatmul.f32.gmra.mxu0 %v2221
    %v2252 = vpop.f32.mrf.mxu0
    %v2253 = vadd.f32 0.0, %v2252
    %2254 = vmatmul.f32.gmra.mxu0 %v2224
    %v2255 = vpop.f32.mrf.mxu0
    %v2256 = vadd.f32 0.0, %v2255
    %2257 = vmatmul.f32.gmra.mxu0 %v2227
    %v2258 = vpop.f32.mrf.mxu0
    %v2259 = vadd.f32 0.0, %v2258
    %2260 = vmatmul.f32.gmra.mxu0 %v2230
    %v2261 = vpop.f32.mrf.mxu0
    %v2262 = vadd.f32 0.0, %v2261
    %2263 = vdwg.mxu0
    %v2265 = vperm.slane %v1815, 0
    %v2267 = vadd.f32 %v2265, %v2250
    %v2268 = vadd.f32 %v2265, %v2253
    %v2269 = vadd.f32 %v2265, %v2256
    %v2270 = vadd.f32 %v2265, %v2259
    %v2271 = vadd.f32 %v2265, %v2262
    %2272 = vrot.lane.b32.xlu0 %v2022, 120
    %v2273 = vpop.permute.xlu0 %2272
    %2274 = vrot.lane.b32.xlu0 %v2023, 120
    %v2275 = vpop.permute.xlu0 %2274
    %2276 = vrot.lane.b32.xlu0 %v2024, 120
    %v2277 = vpop.permute.xlu0 %2276
    %2278 = vrot.lane.b32.xlu0 %v2025, 120
    %v2279 = vpop.permute.xlu0 %2278
    %2280 = vrot.lane.b32.xlu0 %v2026, 120
    %v2281 = vpop.permute.xlu0 %2280
    %2282 = vrot.lane.b32.xlu0 %v2008, 88
    %v2283 = vpop.permute.xlu0 %2282
    %2284 = vrot.lane.b32.xlu0 %v2011, 88
    %v2285 = vpop.permute.xlu0 %2284
    %2286 = vrot.lane.b32.xlu0 %v2014, 88
    %v2287 = vpop.permute.xlu0 %2286
    %2288 = vrot.lane.b32.xlu0 %v2017, 88
    %v2289 = vpop.permute.xlu0 %2288
    %2290 = vrot.lane.b32.xlu0 %v2020, 88
    %v2291 = vpop.permute.xlu0 %2290
    %v2292 = vsel %vm507, %v2273, 0
    %v2294 = vsel %vm507, %v2275, 0
    %v2296 = vsel %vm507, %v2277, 0
    %v2298 = vsel %vm507, %v2279, 0
    %v2300 = vsel %vm507, %v2281, 0
    %v2302 = vsel %vm507, %v2283, 0
    %v2304 = vsel %vm507, %v2285, 0
    %v2306 = vsel %vm507, %v2287, 0
    %v2308 = vsel %vm507, %v2289, 0
    %v2310 = vsel %vm507, %v2291, 0
    %2312 = vmatpush.xpose.msra.mxu0 0.0
    %2313 = vmatpush.xpose.msra.mxu0 0.0
    %2314 = vmatpush.xpose.msra.mxu0 0.0
    %2315 = vmatpush.xpose.msra.mxu0 0.0
    %2316 = vmatpush.xpose.msra.mxu0 0.0
    %2317 = vmatpush.xpose.msra.mxu0 0.0
    %2318 = vmatpush.xpose.msra.mxu0 0.0
    %2319 = vmatpush.xpose.msra.mxu0 0.0
    %2320 = vmatpush.xpose.msra.mxu0 0.0
    %2321 = vmatpush.xpose.msra.mxu0 0.0
    %2322 = vmatpush.xpose.msra.mxu0 0.0
    %2323 = vmatpush.xpose.msra.mxu0 %v2310
    %2324 = vmatpush.xpose.msra.mxu0 %v2308
    %2325 = vmatpush.xpose.msra.mxu0 %v2306
    %2326 = vmatpush.xpose.msra.mxu0 %v2304
    %2327 = vmatpush.xpose.msra.mxu0 %v2302
    %2328 = vmatmul.f32.gmra.mxu0 %v2292
    %v2329 = vpop.f32.mrf.mxu0
    %v2330 = vadd.f32 %v69, %v2329
    %2331 = vmatmul.f32.gmra.mxu0 %v2294
    %v2332 = vpop.f32.mrf.mxu0
    %v2333 = vadd.f32 %v70, %v2332
    %2334 = vmatmul.f32.gmra.mxu0 %v2296
    %v2335 = vpop.f32.mrf.mxu0
    %v2336 = vadd.f32 %v71, %v2335
    %2337 = vmatmul.f32.gmra.mxu0 %v2298
    %v2338 = vpop.f32.mrf.mxu0
    %v2339 = vadd.f32 %v72, %v2338
    %2340 = vmatmul.f32.gmra.mxu0 %v2300
    %v2341 = vpop.f32.mrf.mxu0
    %v2342 = vadd.f32 %v73, %v2341
    %2343 = vdwg.mxu0
    %v2344 = vsel %vm565, %v2330, -inf
    %2345 = vmax.xlane.f32.xlu0 %v2344
    %v2346 = vpop.xlane.xlu0 %2345
    %v2347 = vsel %vm565, %v2333, -inf
    %2348 = vmax.xlane.f32.xlu0 %v2347
    %v2349 = vpop.xlane.xlu0 %2348
    %v2350 = vsel %vm565, %v2336, -inf
    %2351 = vmax.xlane.f32.xlu0 %v2350
    %v2352 = vpop.xlane.xlu0 %2351
    %v2353 = vsel %vm565, %v2339, -inf
    %2354 = vmax.xlane.f32.xlu0 %v2353
    %v2355 = vpop.xlane.xlu0 %2354
    %v2356 = vsel %vm578, %v2342, -inf
    %2357 = vmax.xlane.f32.xlu0 %v2356
    %v2358 = vpop.xlane.xlu0 %2357
    %v2359 = vsub.f32 %v2330, %v2346
    %v2360 = vsub.f32 %v2333, %v2349
    %v2361 = vsub.f32 %v2336, %v2352
    %v2362 = vsub.f32 %v2339, %v2355
    %v2363 = vsub.f32 %v2342, %v2358
    %v2364 = vmul.f32 %v2359, 1.442695
    %v2365 = vpow.pop %v2364
    %v2366 = vmul.f32 %v2360, 1.442695
    %v2367 = vpow.pop %v2366
    %v2368 = vmul.f32 %v2361, 1.442695
    %v2369 = vpow.pop %v2368
    %v2370 = vmul.f32 %v2362, 1.442695
    %v2371 = vpow.pop %v2370
    %v2372 = vmul.f32 %v2363, 1.442695
    %v2373 = vpow.pop %v2372
    %v2374 = vsel %vm565, %v2365, 0.0
    %2375 = vadd.xlane.f32.xlu0 %v2374
    %v2376 = vpop.xlane.xlu0 %2375
    %v2377 = vsel %vm565, %v2367, 0.0
    %2378 = vadd.xlane.f32.xlu0 %v2377
    %v2379 = vpop.xlane.xlu0 %2378
    %v2380 = vsel %vm565, %v2369, 0.0
    %2381 = vadd.xlane.f32.xlu0 %v2380
    %v2382 = vpop.xlane.xlu0 %2381
    %v2383 = vsel %vm565, %v2371, 0.0
    %2384 = vadd.xlane.f32.xlu0 %v2383
    %v2385 = vpop.xlane.xlu0 %2384
    %v2386 = vsel %vm578, %v2373, 0.0
    %2387 = vadd.xlane.f32.xlu0 %v2386
    %v2388 = vpop.xlane.xlu0 %2387
    %v2389 = vrcp.pop %v2376
    %v2390 = vrcp.pop %v2379
    %v2391 = vrcp.pop %v2382
    %v2392 = vrcp.pop %v2385
    %v2393 = vrcp.pop %v2388
    %v2394 = vmul.f32 %v2365, %v2389
    %v2395 = vmul.f32 %v2367, %v2390
    %v2396 = vmul.f32 %v2369, %v2391
    %v2397 = vmul.f32 %v2371, %v2392
    %v2398 = vmul.f32 %v2373, %v2393
    %2399 = vrot.lane.b32.xlu0 %v2008, 56
    %v2400 = vpop.permute.xlu0 %2399
    %2401 = vrot.lane.b32.xlu0 %v2011, 56
    %v2402 = vpop.permute.xlu0 %2401
    %2403 = vrot.lane.b32.xlu0 %v2014, 56
    %v2404 = vpop.permute.xlu0 %2403
    %2405 = vrot.lane.b32.xlu0 %v2017, 56
    %v2406 = vpop.permute.xlu0 %2405
    %2407 = vrot.lane.b32.xlu0 %v2020, 56
    %v2408 = vpop.permute.xlu0 %2407
    %v2414 = vsel %vm565, %v2394, 0
    %v2417 = vsel %vm565, %v2395, 0
    %v2420 = vsel %vm565, %v2396, 0
    %v2423 = vsel %vm565, %v2397, 0
    %v2426 = vsel %vm565, %v2398, 0
    %v2428 = vsel %vm651, %v2408, 0
    %2430 = vmatpush.msra.mxu0 0.0
    %2431 = vmatpush.msra.mxu0 0.0
    %2432 = vmatpush.msra.mxu0 0.0
    %2433 = vmatpush.msra.mxu0 0.0
    %2434 = vmatpush.msra.mxu0 0.0
    %2435 = vmatpush.msra.mxu0 0.0
    %2436 = vmatpush.msra.mxu0 0.0
    %2437 = vmatpush.msra.mxu0 0.0
    %2438 = vmatpush.msra.mxu0 0.0
    %2439 = vmatpush.msra.mxu0 0.0
    %2440 = vmatpush.msra.mxu0 0.0
    %2441 = vmatpush.msra.mxu0 %v2428
    %2442 = vmatpush.msra.mxu0 %v2406
    %2443 = vmatpush.msra.mxu0 %v2404
    %2444 = vmatpush.msra.mxu0 %v2402
    %2445 = vmatpush.msra.mxu0 %v2400
    %2446 = vmatmul.f32.gmra.mxu0 %v2414
    %v2447 = vpop.f32.mrf.mxu0
    %v2448 = vadd.f32 0.0, %v2447
    %2449 = vmatmul.f32.gmra.mxu0 %v2417
    %v2450 = vpop.f32.mrf.mxu0
    %v2451 = vadd.f32 0.0, %v2450
    %2452 = vmatmul.f32.gmra.mxu0 %v2420
    %v2453 = vpop.f32.mrf.mxu0
    %v2454 = vadd.f32 0.0, %v2453
    %2455 = vmatmul.f32.gmra.mxu0 %v2423
    %v2456 = vpop.f32.mrf.mxu0
    %v2457 = vadd.f32 0.0, %v2456
    %2458 = vmatmul.f32.gmra.mxu0 %v2426
    %v2459 = vpop.f32.mrf.mxu0
    %v2460 = vadd.f32 0.0, %v2459
    %2461 = vdwg.mxu0
    %v2463 = vsel %vm507, %v2448, 0
    %v2466 = vsel %vm507, %v2451, 0
    %v2469 = vsel %vm507, %v2454, 0
    %v2472 = vsel %vm507, %v2457, 0
    %v2475 = vsel %vm507, %v2460, 0
    %2477 = vmatpush.msra.mxu0 0.0
    %2478 = vmatpush.msra.mxu0 0.0
    %2479 = vmatpush.msra.mxu0 0.0
    %2480 = vmatpush.msra.mxu0 0.0
    %2481 = vmatpush.msra.mxu0 0.0
    %2482 = vmatpush.msra.mxu0 0.0
    %2483 = vmatpush.msra.mxu0 0.0
    %2484 = vmatpush.msra.mxu0 0.0
    %2485 = vmatpush.msra.mxu0 0.0
    %2486 = vmatpush.msra.mxu0 0.0
    %2487 = vmatpush.msra.mxu0 0.0
    %2488 = vmatpush.msra.mxu0 0.0
    %2489 = vmatpush.msra.mxu0 0.0
    %2490 = vmatpush.msra.mxu0 0.0
    %2491 = vmatpush.msra.mxu0 0.0
    %2492 = vmatpush.msra.mxu0 %v1811
    %2493 = vmatmul.f32.gmra.mxu0 %v2463
    %v2494 = vpop.f32.mrf.mxu0
    %v2495 = vadd.f32 0.0, %v2494
    %2496 = vmatmul.f32.gmra.mxu0 %v2466
    %v2497 = vpop.f32.mrf.mxu0
    %v2498 = vadd.f32 0.0, %v2497
    %2499 = vmatmul.f32.gmra.mxu0 %v2469
    %v2500 = vpop.f32.mrf.mxu0
    %v2501 = vadd.f32 0.0, %v2500
    %2502 = vmatmul.f32.gmra.mxu0 %v2472
    %v2503 = vpop.f32.mrf.mxu0
    %v2504 = vadd.f32 0.0, %v2503
    %2505 = vmatmul.f32.gmra.mxu0 %v2475
    %v2506 = vpop.f32.mrf.mxu0
    %v2507 = vadd.f32 0.0, %v2506
    %2508 = vdwg.mxu0
    %v2509 = vadd.f32 %v2267, %v2495
    %v2510 = vadd.f32 %v2268, %v2498
    %v2511 = vadd.f32 %v2269, %v2501
    %v2512 = vadd.f32 %v2270, %v2504
    %v2513 = vadd.f32 %v2271, %v2507
    %2514 = vrot.lane.b32.xlu0 %v2022, 112
    %v2515 = vpop.permute.xlu0 %2514
    %2516 = vrot.lane.b32.xlu0 %v2023, 112
    %v2517 = vpop.permute.xlu0 %2516
    %2518 = vrot.lane.b32.xlu0 %v2024, 112
    %v2519 = vpop.permute.xlu0 %2518
    %2520 = vrot.lane.b32.xlu0 %v2025, 112
    %v2521 = vpop.permute.xlu0 %2520
    %2522 = vrot.lane.b32.xlu0 %v2026, 112
    %v2523 = vpop.permute.xlu0 %2522
    %2524 = vrot.lane.b32.xlu0 %v2008, 80
    %v2525 = vpop.permute.xlu0 %2524
    %2526 = vrot.lane.b32.xlu0 %v2011, 80
    %v2527 = vpop.permute.xlu0 %2526
    %2528 = vrot.lane.b32.xlu0 %v2014, 80
    %v2529 = vpop.permute.xlu0 %2528
    %2530 = vrot.lane.b32.xlu0 %v2017, 80
    %v2531 = vpop.permute.xlu0 %2530
    %2532 = vrot.lane.b32.xlu0 %v2020, 80
    %v2533 = vpop.permute.xlu0 %2532
    %v2534 = vsel %vm507, %v2515, 0
    %v2536 = vsel %vm507, %v2517, 0
    %v2538 = vsel %vm507, %v2519, 0
    %v2540 = vsel %vm507, %v2521, 0
    %v2542 = vsel %vm507, %v2523, 0
    %v2544 = vsel %vm507, %v2525, 0
    %v2546 = vsel %vm507, %v2527, 0
    %v2548 = vsel %vm507, %v2529, 0
    %v2550 = vsel %vm507, %v2531, 0
    %v2552 = vsel %vm507, %v2533, 0
    %2554 = vmatpush.xpose.msra.mxu0 0.0
    %2555 = vmatpush.xpose.msra.mxu0 0.0
    %2556 = vmatpush.xpose.msra.mxu0 0.0
    %2557 = vmatpush.xpose.msra.mxu0 0.0
    %2558 = vmatpush.xpose.msra.mxu0 0.0
    %2559 = vmatpush.xpose.msra.mxu0 0.0
    %2560 = vmatpush.xpose.msra.mxu0 0.0
    %2561 = vmatpush.xpose.msra.mxu0 0.0
    %2562 = vmatpush.xpose.msra.mxu0 0.0
    %2563 = vmatpush.xpose.msra.mxu0 0.0
    %2564 = vmatpush.xpose.msra.mxu0 0.0
    %2565 = vmatpush.xpose.msra.mxu0 %v2552
    %2566 = vmatpush.xpose.msra.mxu0 %v2550
    %2567 = vmatpush.xpose.msra.mxu0 %v2548
    %2568 = vmatpush.xpose.msra.mxu0 %v2546
    %2569 = vmatpush.xpose.msra.mxu0 %v2544
    %2570 = vmatmul.f32.gmra.mxu0 %v2534
    %v2571 = vpop.f32.mrf.mxu0
    %v2572 = vadd.f32 %v69, %v2571
    %2573 = vmatmul.f32.gmra.mxu0 %v2536
    %v2574 = vpop.f32.mrf.mxu0
    %v2575 = vadd.f32 %v70, %v2574
    %2576 = vmatmul.f32.gmra.mxu0 %v2538
    %v2577 = vpop.f32.mrf.mxu0
    %v2578 = vadd.f32 %v71, %v2577
    %2579 = vmatmul.f32.gmra.mxu0 %v2540
    %v2580 = vpop.f32.mrf.mxu0
    %v2581 = vadd.f32 %v72, %v2580
    %2582 = vmatmul.f32.gmra.mxu0 %v2542
    %v2583 = vpop.f32.mrf.mxu0
    %v2584 = vadd.f32 %v73, %v2583
    %2585 = vdwg.mxu0
    %v2586 = vsel %vm565, %v2572, -inf
    %2587 = vmax.xlane.f32.xlu0 %v2586
    %v2588 = vpop.xlane.xlu0 %2587
    %v2589 = vsel %vm565, %v2575, -inf
    %2590 = vmax.xlane.f32.xlu0 %v2589
    %v2591 = vpop.xlane.xlu0 %2590
    %v2592 = vsel %vm565, %v2578, -inf
    %2593 = vmax.xlane.f32.xlu0 %v2592
    %v2594 = vpop.xlane.xlu0 %2593
    %v2595 = vsel %vm565, %v2581, -inf
    %2596 = vmax.xlane.f32.xlu0 %v2595
    %v2597 = vpop.xlane.xlu0 %2596
    %v2598 = vsel %vm578, %v2584, -inf
    %2599 = vmax.xlane.f32.xlu0 %v2598
    %v2600 = vpop.xlane.xlu0 %2599
    %v2601 = vsub.f32 %v2572, %v2588
    %v2602 = vsub.f32 %v2575, %v2591
    %v2603 = vsub.f32 %v2578, %v2594
    %v2604 = vsub.f32 %v2581, %v2597
    %v2605 = vsub.f32 %v2584, %v2600
    %v2606 = vmul.f32 %v2601, 1.442695
    %v2607 = vpow.pop %v2606
    %v2608 = vmul.f32 %v2602, 1.442695
    %v2609 = vpow.pop %v2608
    %v2610 = vmul.f32 %v2603, 1.442695
    %v2611 = vpow.pop %v2610
    %v2612 = vmul.f32 %v2604, 1.442695
    %v2613 = vpow.pop %v2612
    %v2614 = vmul.f32 %v2605, 1.442695
    %v2615 = vpow.pop %v2614
    %v2616 = vsel %vm565, %v2607, 0.0
    %2617 = vadd.xlane.f32.xlu0 %v2616
    %v2618 = vpop.xlane.xlu0 %2617
    %v2619 = vsel %vm565, %v2609, 0.0
    %2620 = vadd.xlane.f32.xlu0 %v2619
    %v2621 = vpop.xlane.xlu0 %2620
    %v2622 = vsel %vm565, %v2611, 0.0
    %2623 = vadd.xlane.f32.xlu0 %v2622
    %v2624 = vpop.xlane.xlu0 %2623
    %v2625 = vsel %vm565, %v2613, 0.0
    %2626 = vadd.xlane.f32.xlu0 %v2625
    %v2627 = vpop.xlane.xlu0 %2626
    %v2628 = vsel %vm578, %v2615, 0.0
    %2629 = vadd.xlane.f32.xlu0 %v2628
    %v2630 = vpop.xlane.xlu0 %2629
    %v2631 = vrcp.pop %v2618
    %v2632 = vrcp.pop %v2621
    %v2633 = vrcp.pop %v2624
    %v2634 = vrcp.pop %v2627
    %v2635 = vrcp.pop %v2630
    %v2636 = vmul.f32 %v2607, %v2631
    %v2637 = vmul.f32 %v2609, %v2632
    %v2638 = vmul.f32 %v2611, %v2633
    %v2639 = vmul.f32 %v2613, %v2634
    %v2640 = vmul.f32 %v2615, %v2635
    %2641 = vrot.lane.b32.xlu0 %v2008, 48
    %v2642 = vpop.permute.xlu0 %2641
    %2643 = vrot.lane.b32.xlu0 %v2011, 48
    %v2644 = vpop.permute.xlu0 %2643
    %2645 = vrot.lane.b32.xlu0 %v2014, 48
    %v2646 = vpop.permute.xlu0 %2645
    %2647 = vrot.lane.b32.xlu0 %v2017, 48
    %v2648 = vpop.permute.xlu0 %2647
    %2649 = vrot.lane.b32.xlu0 %v2020, 48
    %v2650 = vpop.permute.xlu0 %2649
    %v2656 = vsel %vm565, %v2636, 0
    %v2659 = vsel %vm565, %v2637, 0
    %v2662 = vsel %vm565, %v2638, 0
    %v2665 = vsel %vm565, %v2639, 0
    %v2668 = vsel %vm565, %v2640, 0
    %v2670 = vsel %vm651, %v2650, 0
    %2672 = vmatpush.msra.mxu0 0.0
    %2673 = vmatpush.msra.mxu0 0.0
    %2674 = vmatpush.msra.mxu0 0.0
    %2675 = vmatpush.msra.mxu0 0.0
    %2676 = vmatpush.msra.mxu0 0.0
    %2677 = vmatpush.msra.mxu0 0.0
    %2678 = vmatpush.msra.mxu0 0.0
    %2679 = vmatpush.msra.mxu0 0.0
    %2680 = vmatpush.msra.mxu0 0.0
    %2681 = vmatpush.msra.mxu0 0.0
    %2682 = vmatpush.msra.mxu0 0.0
    %2683 = vmatpush.msra.mxu0 %v2670
    %2684 = vmatpush.msra.mxu0 %v2648
    %2685 = vmatpush.msra.mxu0 %v2646
    %2686 = vmatpush.msra.mxu0 %v2644
    %2687 = vmatpush.msra.mxu0 %v2642
    %2688 = vmatmul.f32.gmra.mxu0 %v2656
    %v2689 = vpop.f32.mrf.mxu0
    %v2690 = vadd.f32 0.0, %v2689
    %2691 = vmatmul.f32.gmra.mxu0 %v2659
    %v2692 = vpop.f32.mrf.mxu0
    %v2693 = vadd.f32 0.0, %v2692
    %2694 = vmatmul.f32.gmra.mxu0 %v2662
    %v2695 = vpop.f32.mrf.mxu0
    %v2696 = vadd.f32 0.0, %v2695
    %2697 = vmatmul.f32.gmra.mxu0 %v2665
    %v2698 = vpop.f32.mrf.mxu0
    %v2699 = vadd.f32 0.0, %v2698
    %2700 = vmatmul.f32.gmra.mxu0 %v2668
    %v2701 = vpop.f32.mrf.mxu0
    %v2702 = vadd.f32 0.0, %v2701
    %2703 = vdwg.mxu0
    %v2705 = vsel %vm507, %v2690, 0
    %v2708 = vsel %vm507, %v2693, 0
    %v2711 = vsel %vm507, %v2696, 0
    %v2714 = vsel %vm507, %v2699, 0
    %v2717 = vsel %vm507, %v2702, 0
    %2719 = vmatpush.msra.mxu0 0.0
    %2720 = vmatpush.msra.mxu0 0.0
    %2721 = vmatpush.msra.mxu0 0.0
    %2722 = vmatpush.msra.mxu0 0.0
    %2723 = vmatpush.msra.mxu0 0.0
    %2724 = vmatpush.msra.mxu0 0.0
    %2725 = vmatpush.msra.mxu0 0.0
    %2726 = vmatpush.msra.mxu0 0.0
    %2727 = vmatpush.msra.mxu0 0.0
    %2728 = vmatpush.msra.mxu0 0.0
    %2729 = vmatpush.msra.mxu0 0.0
    %2730 = vmatpush.msra.mxu0 0.0
    %2731 = vmatpush.msra.mxu0 0.0
    %2732 = vmatpush.msra.mxu0 0.0
    %2733 = vmatpush.msra.mxu0 0.0
    %2734 = vmatpush.msra.mxu0 %v1812
    %2735 = vmatmul.f32.gmra.mxu0 %v2705
    %v2736 = vpop.f32.mrf.mxu0
    %v2737 = vadd.f32 0.0, %v2736
    %2738 = vmatmul.f32.gmra.mxu0 %v2708
    %v2739 = vpop.f32.mrf.mxu0
    %v2740 = vadd.f32 0.0, %v2739
    %2741 = vmatmul.f32.gmra.mxu0 %v2711
    %v2742 = vpop.f32.mrf.mxu0
    %v2743 = vadd.f32 0.0, %v2742
    %2744 = vmatmul.f32.gmra.mxu0 %v2714
    %v2745 = vpop.f32.mrf.mxu0
    %v2746 = vadd.f32 0.0, %v2745
    %2747 = vmatmul.f32.gmra.mxu0 %v2717
    %v2748 = vpop.f32.mrf.mxu0
    %v2749 = vadd.f32 0.0, %v2748
    %2750 = vdwg.mxu0
    %v2751 = vadd.f32 %v2509, %v2737
    %v2752 = vadd.f32 %v2510, %v2740
    %v2753 = vadd.f32 %v2511, %v2743
    %v2754 = vadd.f32 %v2512, %v2746
    %v2755 = vadd.f32 %v2513, %v2749
    %2756 = vrot.lane.b32.xlu0 %v2022, 104
    %v2757 = vpop.permute.xlu0 %2756
    %2758 = vrot.lane.b32.xlu0 %v2023, 104
    %v2759 = vpop.permute.xlu0 %2758
    %2760 = vrot.lane.b32.xlu0 %v2024, 104
    %v2761 = vpop.permute.xlu0 %2760
    %2762 = vrot.lane.b32.xlu0 %v2025, 104
    %v2763 = vpop.permute.xlu0 %2762
    %2764 = vrot.lane.b32.xlu0 %v2026, 104
    %v2765 = vpop.permute.xlu0 %2764
    %2766 = vrot.lane.b32.xlu0 %v2008, 72
    %v2767 = vpop.permute.xlu0 %2766
    %2768 = vrot.lane.b32.xlu0 %v2011, 72
    %v2769 = vpop.permute.xlu0 %2768
    %2770 = vrot.lane.b32.xlu0 %v2014, 72
    %v2771 = vpop.permute.xlu0 %2770
    %2772 = vrot.lane.b32.xlu0 %v2017, 72
    %v2773 = vpop.permute.xlu0 %2772
    %2774 = vrot.lane.b32.xlu0 %v2020, 72
    %v2775 = vpop.permute.xlu0 %2774
    %v2776 = vsel %vm507, %v2757, 0
    %v2778 = vsel %vm507, %v2759, 0
    %v2780 = vsel %vm507, %v2761, 0
    %v2782 = vsel %vm507, %v2763, 0
    %v2784 = vsel %vm507, %v2765, 0
    %v2786 = vsel %vm507, %v2767, 0
    %v2788 = vsel %vm507, %v2769, 0
    %v2790 = vsel %vm507, %v2771, 0
    %v2792 = vsel %vm507, %v2773, 0
    %v2794 = vsel %vm507, %v2775, 0
    %2796 = vmatpush.xpose.msra.mxu0 0.0
    %2797 = vmatpush.xpose.msra.mxu0 0.0
    %2798 = vmatpush.xpose.msra.mxu0 0.0
    %2799 = vmatpush.xpose.msra.mxu0 0.0
    %2800 = vmatpush.xpose.msra.mxu0 0.0
    %2801 = vmatpush.xpose.msra.mxu0 0.0
    %2802 = vmatpush.xpose.msra.mxu0 0.0
    %2803 = vmatpush.xpose.msra.mxu0 0.0
    %2804 = vmatpush.xpose.msra.mxu0 0.0
    %2805 = vmatpush.xpose.msra.mxu0 0.0
    %2806 = vmatpush.xpose.msra.mxu0 0.0
    %2807 = vmatpush.xpose.msra.mxu0 %v2794
    %2808 = vmatpush.xpose.msra.mxu0 %v2792
    %2809 = vmatpush.xpose.msra.mxu0 %v2790
    %2810 = vmatpush.xpose.msra.mxu0 %v2788
    %2811 = vmatpush.xpose.msra.mxu0 %v2786
    %2812 = vmatmul.f32.gmra.mxu0 %v2776
    %v2813 = vpop.f32.mrf.mxu0
    %v2814 = vadd.f32 %v69, %v2813
    %2815 = vmatmul.f32.gmra.mxu0 %v2778
    %v2816 = vpop.f32.mrf.mxu0
    %v2817 = vadd.f32 %v70, %v2816
    %2818 = vmatmul.f32.gmra.mxu0 %v2780
    %v2819 = vpop.f32.mrf.mxu0
    %v2820 = vadd.f32 %v71, %v2819
    %2821 = vmatmul.f32.gmra.mxu0 %v2782
    %v2822 = vpop.f32.mrf.mxu0
    %v2823 = vadd.f32 %v72, %v2822
    %2824 = vmatmul.f32.gmra.mxu0 %v2784
    %v2825 = vpop.f32.mrf.mxu0
    %v2826 = vadd.f32 %v73, %v2825
    %2827 = vdwg.mxu0
    %v2828 = vsel %vm565, %v2814, -inf
    %2829 = vmax.xlane.f32.xlu0 %v2828
    %v2830 = vpop.xlane.xlu0 %2829
    %v2831 = vsel %vm565, %v2817, -inf
    %2832 = vmax.xlane.f32.xlu0 %v2831
    %v2833 = vpop.xlane.xlu0 %2832
    %v2834 = vsel %vm565, %v2820, -inf
    %2835 = vmax.xlane.f32.xlu0 %v2834
    %v2836 = vpop.xlane.xlu0 %2835
    %v2837 = vsel %vm565, %v2823, -inf
    %2838 = vmax.xlane.f32.xlu0 %v2837
    %v2839 = vpop.xlane.xlu0 %2838
    %v2840 = vsel %vm578, %v2826, -inf
    %2841 = vmax.xlane.f32.xlu0 %v2840
    %v2842 = vpop.xlane.xlu0 %2841
    %v2843 = vsub.f32 %v2814, %v2830
    %v2844 = vsub.f32 %v2817, %v2833
    %v2845 = vsub.f32 %v2820, %v2836
    %v2846 = vsub.f32 %v2823, %v2839
    %v2847 = vsub.f32 %v2826, %v2842
    %v2848 = vmul.f32 %v2843, 1.442695
    %v2849 = vpow.pop %v2848
    %v2850 = vmul.f32 %v2844, 1.442695
    %v2851 = vpow.pop %v2850
    %v2852 = vmul.f32 %v2845, 1.442695
    %v2853 = vpow.pop %v2852
    %v2854 = vmul.f32 %v2846, 1.442695
    %v2855 = vpow.pop %v2854
    %v2856 = vmul.f32 %v2847, 1.442695
    %v2857 = vpow.pop %v2856
    %v2858 = vsel %vm565, %v2849, 0.0
    %2859 = vadd.xlane.f32.xlu0 %v2858
    %v2860 = vpop.xlane.xlu0 %2859
    %v2861 = vsel %vm565, %v2851, 0.0
    %2862 = vadd.xlane.f32.xlu0 %v2861
    %v2863 = vpop.xlane.xlu0 %2862
    %v2864 = vsel %vm565, %v2853, 0.0
    %2865 = vadd.xlane.f32.xlu0 %v2864
    %v2866 = vpop.xlane.xlu0 %2865
    %v2867 = vsel %vm565, %v2855, 0.0
    %2868 = vadd.xlane.f32.xlu0 %v2867
    %v2869 = vpop.xlane.xlu0 %2868
    %v2870 = vsel %vm578, %v2857, 0.0
    %2871 = vadd.xlane.f32.xlu0 %v2870
    %v2872 = vpop.xlane.xlu0 %2871
    %v2873 = vrcp.pop %v2860
    %v2874 = vrcp.pop %v2863
    %v2875 = vrcp.pop %v2866
    %v2876 = vrcp.pop %v2869
    %v2877 = vrcp.pop %v2872
    %v2878 = vmul.f32 %v2849, %v2873
    %v2879 = vmul.f32 %v2851, %v2874
    %v2880 = vmul.f32 %v2853, %v2875
    %v2881 = vmul.f32 %v2855, %v2876
    %v2882 = vmul.f32 %v2857, %v2877
    %2883 = vrot.lane.b32.xlu0 %v2008, 40
    %v2884 = vpop.permute.xlu0 %2883
    %2885 = vrot.lane.b32.xlu0 %v2011, 40
    %v2886 = vpop.permute.xlu0 %2885
    %2887 = vrot.lane.b32.xlu0 %v2014, 40
    %v2888 = vpop.permute.xlu0 %2887
    %2889 = vrot.lane.b32.xlu0 %v2017, 40
    %v2890 = vpop.permute.xlu0 %2889
    %2891 = vrot.lane.b32.xlu0 %v2020, 40
    %v2892 = vpop.permute.xlu0 %2891
    %v2898 = vsel %vm565, %v2878, 0
    %v2901 = vsel %vm565, %v2879, 0
    %v2904 = vsel %vm565, %v2880, 0
    %v2907 = vsel %vm565, %v2881, 0
    %v2910 = vsel %vm565, %v2882, 0
    %v2912 = vsel %vm651, %v2892, 0
    %2914 = vmatpush.msra.mxu0 0.0
    %2915 = vmatpush.msra.mxu0 0.0
    %2916 = vmatpush.msra.mxu0 0.0
    %2917 = vmatpush.msra.mxu0 0.0
    %2918 = vmatpush.msra.mxu0 0.0
    %2919 = vmatpush.msra.mxu0 0.0
    %2920 = vmatpush.msra.mxu0 0.0
    %2921 = vmatpush.msra.mxu0 0.0
    %2922 = vmatpush.msra.mxu0 0.0
    %2923 = vmatpush.msra.mxu0 0.0
    %2924 = vmatpush.msra.mxu0 0.0
    %2925 = vmatpush.msra.mxu0 %v2912
    %2926 = vmatpush.msra.mxu0 %v2890
    %2927 = vmatpush.msra.mxu0 %v2888
    %2928 = vmatpush.msra.mxu0 %v2886
    %2929 = vmatpush.msra.mxu0 %v2884
    %2930 = vmatmul.f32.gmra.mxu0 %v2898
    %v2931 = vpop.f32.mrf.mxu0
    %v2932 = vadd.f32 0.0, %v2931
    %2933 = vmatmul.f32.gmra.mxu0 %v2901
    %v2934 = vpop.f32.mrf.mxu0
    %v2935 = vadd.f32 0.0, %v2934
    %2936 = vmatmul.f32.gmra.mxu0 %v2904
    %v2937 = vpop.f32.mrf.mxu0
    %v2938 = vadd.f32 0.0, %v2937
    %2939 = vmatmul.f32.gmra.mxu0 %v2907
    %v2940 = vpop.f32.mrf.mxu0
    %v2941 = vadd.f32 0.0, %v2940
    %2942 = vmatmul.f32.gmra.mxu0 %v2910
    %v2943 = vpop.f32.mrf.mxu0
    %v2944 = vadd.f32 0.0, %v2943
    %2945 = vdwg.mxu0
    %v2947 = vsel %vm507, %v2932, 0
    %v2950 = vsel %vm507, %v2935, 0
    %v2953 = vsel %vm507, %v2938, 0
    %v2956 = vsel %vm507, %v2941, 0
    %v2959 = vsel %vm507, %v2944, 0
    %2961 = vmatpush.msra.mxu0 0.0
    %2962 = vmatpush.msra.mxu0 0.0
    %2963 = vmatpush.msra.mxu0 0.0
    %2964 = vmatpush.msra.mxu0 0.0
    %2965 = vmatpush.msra.mxu0 0.0
    %2966 = vmatpush.msra.mxu0 0.0
    %2967 = vmatpush.msra.mxu0 0.0
    %2968 = vmatpush.msra.mxu0 0.0
    %2969 = vmatpush.msra.mxu0 0.0
    %2970 = vmatpush.msra.mxu0 0.0
    %2971 = vmatpush.msra.mxu0 0.0
    %2972 = vmatpush.msra.mxu0 0.0
    %2973 = vmatpush.msra.mxu0 0.0
    %2974 = vmatpush.msra.mxu0 0.0
    %2975 = vmatpush.msra.mxu0 0.0
    %2976 = vmatpush.msra.mxu0 %v1813
    %2977 = vmatmul.f32.gmra.mxu0 %v2947
    %v2978 = vpop.f32.mrf.mxu0
    %v2979 = vadd.f32 0.0, %v2978
    %2980 = vmatmul.f32.gmra.mxu0 %v2950
    %v2981 = vpop.f32.mrf.mxu0
    %v2982 = vadd.f32 0.0, %v2981
    %2983 = vmatmul.f32.gmra.mxu0 %v2953
    %v2984 = vpop.f32.mrf.mxu0
    %v2985 = vadd.f32 0.0, %v2984
    %2986 = vmatmul.f32.gmra.mxu0 %v2956
    %v2987 = vpop.f32.mrf.mxu0
    %v2988 = vadd.f32 0.0, %v2987
    %2989 = vmatmul.f32.gmra.mxu0 %v2959
    %v2990 = vpop.f32.mrf.mxu0
    %v2991 = vadd.f32 0.0, %v2990
    %2992 = vdwg.mxu0
    %v2993 = vadd.f32 %v2751, %v2979
    %v2994 = vadd.f32 %v2752, %v2982
    %v2995 = vadd.f32 %v2753, %v2985
    %v2996 = vadd.f32 %v2754, %v2988
    %v2997 = vadd.f32 %v2755, %v2991
    %v2998 = vadd.f32 %v1793, %v2993
    %v2999 = vadd.f32 %v1794, %v2994
    %v3000 = vadd.f32 %v1795, %v2995
    %v3001 = vadd.f32 %v1796, %v2996
    %v3002 = vadd.f32 %v1797, %v2997
    %v3003 = vsel %vm140, %v2998, 0.0
    %3004 = vadd.xlane.f32.xlu0 %v3003
    %v3005 = vpop.xlane.xlu0 %3004
    %v3006 = vsel %vm140, %v2999, 0.0
    %3007 = vadd.xlane.f32.xlu0 %v3006
    %v3008 = vpop.xlane.xlu0 %3007
    %v3009 = vsel %vm140, %v3000, 0.0
    %3010 = vadd.xlane.f32.xlu0 %v3009
    %v3011 = vpop.xlane.xlu0 %3010
    %v3012 = vsel %vm140, %v3001, 0.0
    %3013 = vadd.xlane.f32.xlu0 %v3012
    %v3014 = vpop.xlane.xlu0 %3013
    %v3015 = vsel %vm153, %v3002, 0.0
    %3016 = vadd.xlane.f32.xlu0 %v3015
    %v3017 = vpop.xlane.xlu0 %3016
    %v3018 = vmul.f32 %v3005, %v163
    %v3019 = vmul.f32 %v3008, %v163
    %v3020 = vmul.f32 %v3011, %v163
    %v3021 = vmul.f32 %v3014, %v163
    %v3022 = vmul.f32 %v3017, %v163
    %v3023 = vsub.f32 %v2998, %v3018
    %v3024 = vsub.f32 %v2999, %v3019
    %v3025 = vsub.f32 %v3000, %v3020
    %v3026 = vsub.f32 %v3001, %v3021
    %v3027 = vsub.f32 %v3002, %v3022
    %v3028 = vmul.f32 %v3023, %v3023
    %v3029 = vmul.f32 %v3024, %v3024
    %v3030 = vmul.f32 %v3025, %v3025
    %v3031 = vmul.f32 %v3026, %v3026
    %v3032 = vmul.f32 %v3027, %v3027
    %v3033 = vsel %vm140, %v3028, 0.0
    %3034 = vadd.xlane.f32.xlu0 %v3033
    %v3035 = vpop.xlane.xlu0 %3034
    %v3036 = vsel %vm140, %v3029, 0.0
    %3037 = vadd.xlane.f32.xlu0 %v3036
    %v3038 = vpop.xlane.xlu0 %3037
    %v3039 = vsel %vm140, %v3030, 0.0
    %3040 = vadd.xlane.f32.xlu0 %v3039
    %v3041 = vpop.xlane.xlu0 %3040
    %v3042 = vsel %vm140, %v3031, 0.0
    %3043 = vadd.xlane.f32.xlu0 %v3042
    %v3044 = vpop.xlane.xlu0 %3043
    %v3045 = vsel %vm153, %v3032, 0.0
    %3046 = vadd.xlane.f32.xlu0 %v3045
    %v3047 = vpop.xlane.xlu0 %3046
    %v3048 = vmul.f32 %v3035, %v163
    %v3049 = vmul.f32 %v3038, %v163
    %v3050 = vmul.f32 %v3041, %v163
    %v3051 = vmul.f32 %v3044, %v163
    %v3052 = vmul.f32 %v3047, %v163
    %v3053 = vadd.f32 %v3048, 1e-05
    %v3054 = vadd.f32 %v3049, 1e-05
    %v3055 = vadd.f32 %v3050, 1e-05
    %v3056 = vadd.f32 %v3051, 1e-05
    %v3057 = vadd.f32 %v3052, 1e-05
    %v3058 = vrsqrt.pop %v3053
    %v3059 = vmul.f32 %v3058, %v3053
    %v3060 = vmul.f32 %v3059, %v3058
    %v3061 = vmul.f32 0.5, %v3060
    %v3062 = vsub.f32 1.5, %v3061
    %v3063 = vmul.f32 %v3058, %v3062
    %vm3064 = vweird.f32 %v3053
    %vm3065 = vweird.f32 %v3058
    %vm3066 = vmor %vm3064, %vm3065
    %v3067 = vsel %vm3066, %v3058, %v3063
    %v3068 = vrsqrt.pop %v3054
    %v3069 = vmul.f32 %v3068, %v3054
    %v3070 = vmul.f32 %v3069, %v3068
    %v3071 = vmul.f32 0.5, %v3070
    %v3072 = vsub.f32 1.5, %v3071
    %v3073 = vmul.f32 %v3068, %v3072
    %vm3074 = vweird.f32 %v3054
    %vm3075 = vweird.f32 %v3068
    %vm3076 = vmor %vm3074, %vm3075
    %v3077 = vsel %vm3076, %v3068, %v3073
    %v3078 = vrsqrt.pop %v3055
    %v3079 = vmul.f32 %v3078, %v3055
    %v3080 = vmul.f32 %v3079, %v3078
    %v3081 = vmul.f32 0.5, %v3080
    %v3082 = vsub.f32 1.5, %v3081
    %v3083 = vmul.f32 %v3078, %v3082
    %vm3084 = vweird.f32 %v3055
    %vm3085 = vweird.f32 %v3078
    %vm3086 = vmor %vm3084, %vm3085
    %v3087 = vsel %vm3086, %v3078, %v3083
    %v3088 = vrsqrt.pop %v3056
    %v3089 = vmul.f32 %v3088, %v3056
    %v3090 = vmul.f32 %v3089, %v3088
    %v3091 = vmul.f32 0.5, %v3090
    %v3092 = vsub.f32 1.5, %v3091
    %v3093 = vmul.f32 %v3088, %v3092
    %vm3094 = vweird.f32 %v3056
    %vm3095 = vweird.f32 %v3088
    %vm3096 = vmor %vm3094, %vm3095
    %v3097 = vsel %vm3096, %v3088, %v3093
    %v3098 = vrsqrt.pop %v3057
    %v3099 = vmul.f32 %v3098, %v3057
    %v3100 = vmul.f32 %v3099, %v3098
    %v3101 = vmul.f32 0.5, %v3100
    %v3102 = vsub.f32 1.5, %v3101
    %v3103 = vmul.f32 %v3098, %v3102
    %vm3104 = vweird.f32 %v3057
    %vm3105 = vweird.f32 %v3098
    %vm3106 = vmor %vm3104, %vm3105
    %v3107 = vsel %vm3106, %v3098, %v3103
    %v3108 = vmul.f32 %v3023, %v3067
    %v3109 = vmul.f32 %v3024, %v3077
    %v3110 = vmul.f32 %v3025, %v3087
    %v3111 = vmul.f32 %v3026, %v3097
    %v3112 = vmul.f32 %v3027, %v3107
    %v3114 = vperm.slane %v1817, 0
    %v3116 = vmul.f32 %v3108, %v3114
    %v3117 = vmul.f32 %v3109, %v3114
    %v3118 = vmul.f32 %v3110, %v3114
    %v3119 = vmul.f32 %v3111, %v3114
    %v3120 = vmul.f32 %v3112, %v3114
    %v3122 = vperm.slane %v1819, 0
    %v3124 = vadd.f32 %v3116, %v3122
    %v3125 = vadd.f32 %v3117, %v3122
    %v3126 = vadd.f32 %v3118, %v3122
    %v3127 = vadd.f32 %v3119, %v3122
    %v3128 = vadd.f32 %v3120, %v3122
    %v3130 = vperm.slane %v1826, 0
    %v3133 = vsel %vm140, %v3124, 0
    %v3136 = vsel %vm140, %v3125, 0
    %v3139 = vsel %vm140, %v3126, 0
    %v3142 = vsel %vm140, %v3127, 0
    %v3145 = vsel %vm140, %v3128, 0
    %3147 = vmatpush.msra.mxu0 0.0
    %3148 = vmatpush.msra.mxu0 0.0
    %3149 = vmatpush.msra.mxu0 0.0
    %3150 = vmatpush.msra.mxu0 0.0
    %3151 = vmatpush.msra.mxu0 0.0
    %3152 = vmatpush.msra.mxu0 0.0
    %3153 = vmatpush.msra.mxu0 0.0
    %3154 = vmatpush.msra.mxu0 0.0
    %3155 = vmatpush.msra.mxu0 0.0
    %3156 = vmatpush.msra.mxu0 0.0
    %3157 = vmatpush.msra.mxu0 0.0
    %3158 = vmatpush.msra.mxu0 0.0
    %3159 = vmatpush.msra.mxu0 %v1824
    %3160 = vmatpush.msra.mxu0 %v1823
    %3161 = vmatpush.msra.mxu0 %v1822
    %3162 = vmatpush.msra.mxu0 %v1821
    %3163 = vmatmul.f32.gmra.mxu0 %v3133
    %v3164 = vpop.f32.mrf.mxu0
    %v3165 = vadd.f32 %v3130, %v3164
    %3166 = vmatmul.f32.gmra.mxu0 %v3136
    %v3167 = vpop.f32.mrf.mxu0
    %v3168 = vadd.f32 %v3130, %v3167
    %3169 = vmatmul.f32.gmra.mxu0 %v3139
    %v3170 = vpop.f32.mrf.mxu0
    %v3171 = vadd.f32 %v3130, %v3170
    %3172 = vmatmul.f32.gmra.mxu0 %v3142
    %v3173 = vpop.f32.mrf.mxu0
    %v3174 = vadd.f32 %v3130, %v3173
    %3175 = vmatmul.f32.gmra.mxu0 %v3145
    %v3176 = vpop.f32.mrf.mxu0
    %v3177 = vadd.f32 %v3130, %v3176
    %3178 = vdwg.mxu0
    %v3179 = vmul.f32 %v3165, 1.702
    %v3180 = vmul.f32 %v3168, 1.702
    %v3181 = vmul.f32 %v3171, 1.702
    %v3182 = vmul.f32 %v3174, 1.702
    %v3183 = vmul.f32 %v3177, 1.702
    %v3184 = vxor.u32 %v3179, 2147483648
    %v3185 = vxor.u32 %v3180, 2147483648
    %v3186 = vxor.u32 %v3181, 2147483648
    %v3187 = vxor.u32 %v3182, 2147483648
    %v3188 = vxor.u32 %v3183, 2147483648
    %v3189 = vmul.f32 %v3184, 1.442695
    %v3190 = vpow.pop %v3189
    %v3191 = vmul.f32 %v3185, 1.442695
    %v3192 = vpow.pop %v3191
    %v3193 = vmul.f32 %v3186, 1.442695
    %v3194 = vpow.pop %v3193
    %v3195 = vmul.f32 %v3187, 1.442695
    %v3196 = vpow.pop %v3195
    %v3197 = vmul.f32 %v3188, 1.442695
    %v3198 = vpow.pop %v3197
    %v3199 = vadd.f32 %v3190, 1.0
    %v3200 = vadd.f32 %v3192, 1.0
    %v3201 = vadd.f32 %v3194, 1.0
    %v3202 = vadd.f32 %v3196, 1.0
    %v3203 = vadd.f32 %v3198, 1.0
    %v3204 = vrcp.pop %v3199
    %v3205 = vmul.f32 %v3199, %v3204
    %v3206 = vsub.f32 1.0, %v3205
    %v3207 = vmul.f32 %v3204, %v3206
    %v3208 = vadd.f32 %v3204, %v3207
    %vm3209 = vweird.f32 %v3199
    %vm3210 = vweird.f32 %v3204
    %vm3211 = vmor %vm3209, %vm3210
    %v3212 = vsel %vm3211, %v3204, %v3208
    %v3213 = vand.u32 2147483647, %v3199
    %vm3214 = vcmp.eq.f32.partialorder %v3213, 8.507059e+37
    %v3215 = vand.u32 %v3199, 2147483648
    %v3216 = vor.u32 1.1754944e-38, %v3215
    %v3217 = vsel %vm3214, %v3216, %v3212
    %v3218 = vmul.f32 1.0, %v3217
    %v3219 = vrcp.pop %v3200
    %v3220 = vmul.f32 %v3200, %v3219
    %v3221 = vsub.f32 1.0, %v3220
    %v3222 = vmul.f32 %v3219, %v3221
    %v3223 = vadd.f32 %v3219, %v3222
    %vm3224 = vweird.f32 %v3200
    %vm3225 = vweird.f32 %v3219
    %vm3226 = vmor %vm3224, %vm3225
    %v3227 = vsel %vm3226, %v3219, %v3223
    %v3228 = vand.u32 2147483647, %v3200
    %vm3229 = vcmp.eq.f32.partialorder %v3228, 8.507059e+37
    %v3230 = vand.u32 %v3200, 2147483648
    %v3231 = vor.u32 1.1754944e-38, %v3230
    %v3232 = vsel %vm3229, %v3231, %v3227
    %v3233 = vmul.f32 1.0, %v3232
    %v3234 = vrcp.pop %v3201
    %v3235 = vmul.f32 %v3201, %v3234
    %v3236 = vsub.f32 1.0, %v3235
    %v3237 = vmul.f32 %v3234, %v3236
    %v3238 = vadd.f32 %v3234, %v3237
    %vm3239 = vweird.f32 %v3201
    %vm3240 = vweird.f32 %v3234
    %vm3241 = vmor %vm3239, %vm3240
    %v3242 = vsel %vm3241, %v3234, %v3238
    %v3243 = vand.u32 2147483647, %v3201
    %vm3244 = vcmp.eq.f32.partialorder %v3243, 8.507059e+37
    %v3245 = vand.u32 %v3201, 2147483648
    %v3246 = vor.u32 1.1754944e-38, %v3245
    %v3247 = vsel %vm3244, %v3246, %v3242
    %v3248 = vmul.f32 1.0, %v3247
    %v3249 = vrcp.pop %v3202
    %v3250 = vmul.f32 %v3202, %v3249
    %v3251 = vsub.f32 1.0, %v3250
    %v3252 = vmul.f32 %v3249, %v3251
    %v3253 = vadd.f32 %v3249, %v3252
    %vm3254 = vweird.f32 %v3202
    %vm3255 = vweird.f32 %v3249
    %vm3256 = vmor %vm3254, %vm3255
    %v3257 = vsel %vm3256, %v3249, %v3253
    %v3258 = vand.u32 2147483647, %v3202
    %vm3259 = vcmp.eq.f32.partialorder %v3258, 8.507059e+37
    %v3260 = vand.u32 %v3202, 2147483648
    %v3261 = vor.u32 1.1754944e-38, %v3260
    %v3262 = vsel %vm3259, %v3261, %v3257
    %v3263 = vmul.f32 1.0, %v3262
    %v3264 = vrcp.pop %v3203
    %v3265 = vmul.f32 %v3203, %v3264
    %v3266 = vsub.f32 1.0, %v3265
    %v3267 = vmul.f32 %v3264, %v3266
    %v3268 = vadd.f32 %v3264, %v3267
    %vm3269 = vweird.f32 %v3203
    %vm3270 = vweird.f32 %v3264
    %vm3271 = vmor %vm3269, %vm3270
    %v3272 = vsel %vm3271, %v3264, %v3268
    %v3273 = vand.u32 2147483647, %v3203
    %vm3274 = vcmp.eq.f32.partialorder %v3273, 8.507059e+37
    %v3275 = vand.u32 %v3203, 2147483648
    %v3276 = vor.u32 1.1754944e-38, %v3275
    %v3277 = vsel %vm3274, %v3276, %v3272
    %v3278 = vmul.f32 1.0, %v3277
    %v3279 = vmul.f32 %v3165, %v3218
    %v3280 = vmul.f32 %v3168, %v3233
    %v3281 = vmul.f32 %v3171, %v3248
    %v3282 = vmul.f32 %v3174, %v3263
    %v3283 = vmul.f32 %v3177, %v3278
    %3284 = vmatpush.msra.mxu0 %v1843
    %3285 = vmatpush.msra.mxu0 %v1842
    %3286 = vmatpush.msra.mxu0 %v1841
    %3287 = vmatpush.msra.mxu0 %v1840
    %3288 = vmatpush.msra.mxu0 %v1839
    %3289 = vmatpush.msra.mxu0 %v1838
    %3290 = vmatpush.msra.mxu0 %v1837
    %3291 = vmatpush.msra.mxu0 %v1836
    %3292 = vmatpush.msra.mxu0 %v1835
    %3293 = vmatpush.msra.mxu0 %v1834
    %3294 = vmatpush.msra.mxu0 %v1833
    %3295 = vmatpush.msra.mxu0 %v1832
    %3296 = vmatpush.msra.mxu0 %v1831
    %3297 = vmatpush.msra.mxu0 %v1830
    %3298 = vmatpush.msra.mxu0 %v1829
    %3299 = vmatpush.msra.mxu0 %v1828
    %3300 = vmatmul.f32.gmra.mxu0 %v3279
    %v3301 = vpop.f32.mrf.mxu0
    %v3302 = vadd.f32 0.0, %v3301
    %3303 = vmatmul.f32.gmra.mxu0 %v3280
    %v3304 = vpop.f32.mrf.mxu0
    %3305 = vmatmul.f32.gmra.mxu0 %v3281
    %v3306 = vpop.f32.mrf.mxu0
    %v3307 = vadd.f32 0.0, %v3306
    %3308 = vmatmul.f32.gmra.mxu0 %v3282
    %v3309 = vpop.f32.mrf.mxu0
    %3310 = vmatmul.f32.gmra.mxu0 %v3283
    %v3311 = vpop.f32.mrf.mxu0
    %3312 = vdwg.mxu0
    %v3313 = vadd.f32 %v2998, %v3302
    %v3314 = vadd.f32 %v3000, %v3307
    %v3316 = vperm.slane %v1845, 0
    %v3318 = vadd.f32 %v3313, %v3316
    %v3319 = vadd.f32 %v3314, %v3316
    %v3320 = vld [vmem:[%s18] sm:$0x1]
    %v3321 = vld [vmem:[%s19] sm:$0x1]
    %v3322 = vld [vmem:[%s20] sm:$0xff]
    %v3323 = vld [vmem:[%s20 + $0x8] sm:$0xff]
    %v3324 = vld [vmem:[%s20 + $0x10] sm:$0xff]
    %v3325 = vld [vmem:[%s20 + $0x18] sm:$0xff]
    %vm3326 = vcmask 253952
    %v3327 = vsel %vm3326, %v3318, 0.0
    %3328 = vadd.xlane.f32.xlu0 %v3327
    %v3329 = vpop.xlane.xlu0 %3328
    %v3330 = vmul.f32 %v3329, %v163
    %v3331 = vsub.f32 %v3318, %v3330
    %v3332 = vmul.f32 %v3331, %v3331
    %v3333 = vsel %vm3326, %v3332, 0.0
    %3334 = vadd.xlane.f32.xlu0 %v3333
    %v3335 = vpop.xlane.xlu0 %3334
    %v3336 = vmul.f32 %v3335, %v163
    %v3337 = vadd.f32 %v3336, 1e-05
    %v3338 = vrsqrt.pop %v3337
    %v3339 = vmul.f32 %v3338, %v3337
    %v3340 = vmul.f32 %v3339, %v3338
    %v3341 = vmul.f32 0.5, %v3340
    %v3342 = vsub.f32 1.5, %v3341
    %v3343 = vmul.f32 %v3338, %v3342
    %vm3344 = vweird.f32 %v3337
    %vm3345 = vweird.f32 %v3338
    %vm3346 = vmor %vm3344, %vm3345
    %v3347 = vsel %vm3346, %v3338, %v3343
    %v3348 = vmul.f32 %v3331, %v3347
    %v3349 = vmul.f32 %v3348, %v3320
    %v3350 = vadd.f32 %v3349, %v3321
    %v3352 = vsel %vm140, %v3350, 0
    %3354 = vmatpush.msra.mxu0 0.0
    %3355 = vmatpush.msra.mxu0 0.0
    %3356 = vmatpush.msra.mxu0 0.0
    %3357 = vmatpush.msra.mxu0 0.0
    %3358 = vmatpush.msra.mxu0 0.0
    %3359 = vmatpush.msra.mxu0 0.0
    %3360 = vmatpush.msra.mxu0 0.0
    %3361 = vmatpush.msra.mxu0 0.0
    %3362 = vmatpush.msra.mxu0 0.0
    %3363 = vmatpush.msra.mxu0 0.0
    %3364 = vmatpush.msra.mxu0 0.0
    %3365 = vmatpush.msra.mxu0 0.0
    %3366 = vmatpush.msra.mxu0 %v3325
    %3367 = vmatpush.msra.mxu0 %v3324
    %3368 = vmatpush.msra.mxu0 %v3323
    %3369 = vmatpush.msra.mxu0 %v3322
    %3370 = vmatmul.f32.gmra.mxu0 %v3352
    %v3371 = vpop.f32.mrf.mxu0
    %v3372 = vadd.f32 0.0, %v3371
    %3373 = vdwg.mxu0
    %vm3374 = vcmask 122880
    %3375 = vst.msk [vmem:[#allocation2] sm:$0x1] %vm3374, %v3372
    %vm3376 = vcmask 254977
    %v3377 = vsel %vm3376, %v3319, 0.0
    %3378 = vadd.xlane.f32.xlu0 %v3377
    %v3379 = vpop.xlane.xlu0 %3378
    %v3380 = vmul.f32 %v3379, %v163
    %v3381 = vsub.f32 %v3319, %v3380
    %v3382 = vmul.f32 %v3381, %v3381
    %v3383 = vsel %vm3376, %v3382, 0.0
    %3384 = vadd.xlane.f32.xlu0 %v3383
    %v3385 = vpop.xlane.xlu0 %3384
    %v3386 = vmul.f32 %v3385, %v163
    %v3387 = vadd.f32 %v3386, 1e-05
    %v3388 = vrsqrt.pop %v3387
    %v3389 = vmul.f32 %v3388, %v3387
    %v3390 = vmul.f32 %v3389, %v3388
    %v3391 = vmul.f32 0.5, %v3390
    %v3392 = vsub.f32 1.5, %v3391
    %v3393 = vmul.f32 %v3388, %v3392
    %vm3394 = vweird.f32 %v3387
    %vm3395 = vweird.f32 %v3388
    %vm3396 = vmor %vm3394, %vm3395
    %v3397 = vsel %vm3396, %v3388, %v3393
    %v3398 = vmul.f32 %v3381, %v3397
    %v3400 = vperm.slane %v3320, 0
    %v3402 = vmul.f32 %v3398, %v3400
    %v3404 = vperm.slane %v3321, 0
    %v3406 = vadd.f32 %v3402, %v3404
    %v3408 = vrot.slane %v3406, 1
    %v3409 = vsel %vm140, %v3408, 0
    %3411 = vmatpush.msra.mxu0 0.0
    %3412 = vmatpush.msra.mxu0 0.0
    %3413 = vmatpush.msra.mxu0 0.0
    %3414 = vmatpush.msra.mxu0 0.0
    %3415 = vmatpush.msra.mxu0 0.0
    %3416 = vmatpush.msra.mxu0 0.0
    %3417 = vmatpush.msra.mxu0 0.0
    %3418 = vmatpush.msra.mxu0 0.0
    %3419 = vmatpush.msra.mxu0 0.0
    %3420 = vmatpush.msra.mxu0 0.0
    %3421 = vmatpush.msra.mxu0 0.0
    %3422 = vmatpush.msra.mxu0 0.0
    %3423 = vmatpush.msra.mxu0 %v3325
    %3424 = vmatpush.msra.mxu0 %v3324
    %3425 = vmatpush.msra.mxu0 %v3323
    %3426 = vmatpush.msra.mxu0 %v3322
    %3427 = vmatmul.f32.gmra.mxu0 %v3409
    %v3428 = vpop.f32.mrf.mxu0
    %v3429 = vadd.f32 0.0, %v3428
    %3430 = vdwg.mxu0
    %3431 = vst.msk [vmem:[#allocation2 + $0x1] sm:$0x1] %vm3374, %v3429
    // Predicated region
    $region86: #{encode_image.1} parent=1 // pred_check
      _
    $region87: #{encode_image.1} parent=1 // pred_check_branch
      %3433 = sbr.rel (0) target = $region89
    $region88: #{encode_image.1} parent=1 // pred_region
      %3435 = vsyncadd [#allocation3], 0
      %s3437 = sshll.u32 [#allocation2], 4
      %s3438 = int_to_ptr.vmem [resolvable:$true] %s3437
      %s3439 = sshll.u32 %s21, 4
      %s3440 = int_to_ptr.hbm [resolvable:$true] %s3439
      %3442 = dma.vmem_to_hbm [thread:$0]  %s3438, 32, %s3440, [#allocation3]
    $region89: #{encode_image.1} parent=1 // pred_fallthru
      _
    // Predicated region
    $region90: #{encode_image.1} parent=1 // pred_check
      _
    $region91: #{encode_image.1} parent=1 // pred_check_branch
      %3444 = sbr.rel (0) target = $region93
    $region92: #{encode_image.1} parent=1 // pred_region
      %3446 = dma.done [#allocation3], 32
    $region93: #{encode_image.1} parent=1 // pred_fallthru
      _
    %3447 = vsyncpa [#allocation3], 1

</llo_original>
